<compile_context>
chip_gen: v6e
topology: v6e:2x2x1
jax: 0.10.0
libtpu: 0.0.40
codegen_flags: <defaults>
</compile_context>

<pallas_src>
import numpy as np
import jax
import jax.numpy as jnp
from jax import lax
from jax.experimental import pallas as pl
from jax.experimental.pallas import tpu as pltpu

# ----------------------------- model config ---------------------------------
B, CIN, H, W = 2, 4, 16, 16          # small synthetic input (NCHW)
P = H * W                            # spatial positions per image (256)
TP = 128                             # P-chunk for the fused feature/pool loop
C = 1024                             # densenet-121 feature width
D = 32                               # `dim` (bottleneck of fc1/fc2)
NUM_CLASS = 8
# NOTE: the default neurons_class=256 is shape-incompatible with agg (1024);
# the classifier is instantiated with neurons_class = 1024 so forward() is valid.


# ----------------------------------------------------------------------------
# Single-step fused kernel:
#   per image b, per 128-wide P chunk:
#       xf = x[b, :, chunk]^T @ conv_w      (features stand-in, bf16 MXU, f32 acc)
#       pool += (1/P ones) @ relu(xf)       (relu on VPU, pool as MXU ones-matmul)
#   xp  = pooled features for all images     (B, C)
#   VIM: resd = xp - mu; fc1; fc2; re_x = fc2 + mu
#   logits = xp @ cls_w.T + cls_b            (B, NUM_CLASS)
# r and lw are weight-only and are NOT computed here (hoisted to init).
# ----------------------------------------------------------------------------
def _fused_net_kernel(x_ref, convw_ref, mu_ref, w1_ref, b1_ref, w2_ref, b2_ref,
                      wc_ref, bc_ref, logits_ref, agg_ref, rex_ref):
    convw = convw_ref[...]                                         # (CIN, C) bf16
    inv_p = jnp.full((1, TP), 1.0 / P, dtype=jnp.bfloat16)         # 1/256 exact in bf16

    # ---- features stand-in fused with relu + global average pool ----
    # TODO(synk): the real DenseNet-121 dense-block/transition stack is an
    # external module passed to __init__ and is not reproduced here; a single
    # bias-free 1x1 conv to 1024 channels (eval-mode BatchNorm with weight=1 /
    # bias=0 is identity) stands in for `self.features`.
    pooled = []
    for b in range(B):                        # static unroll, B = 2
        acc = jnp.zeros((1, C), jnp.float32)
        for t in range(P // TP):              # static unroll, 2 chunks of 128
            # lane-dense (CIN, TP) LHS; contract CIN (dim 0) against conv_w dim 0
            xc = x_ref[b, :, t * TP:(t + 1) * TP].astype(jnp.bfloat16)
            xf = lax.dot_general(xc, convw, (((0,), (0,)), ((), ())),
                                 preferred_element_type=jnp.float32)   # (TP, C)
            xr = jnp.maximum(xf, 0.0).astype(jnp.bfloat16)
            # pool as a ones-matmul so it rides the MXU, not the XLU
            acc = acc + jnp.dot(inv_p, xr, preferred_element_type=jnp.float32)
        pooled.append(acc)
    xp = jnp.concatenate(pooled, axis=0)                           # (B, C) f32
    agg_ref[...] = xp                                              # agg = x

    # ---- cal_SigmalMatrix_VIM (input-dependent part only) ----
    mu = mu_ref[...]                                               # (1, C)
    resd = (xp - mu).astype(jnp.bfloat16)                          # (B, C)
    fc1 = lax.dot_general(resd, w1_ref[...], (((1,), (1,)), ((), ())),
                          preferred_element_type=jnp.float32) + b1_ref[...]   # (B, D)
    fc2 = lax.dot_general(fc1.astype(jnp.bfloat16), w2_ref[...],
                          (((1,), (1,)), ((), ())),
                          preferred_element_type=jnp.float32) + b2_ref[...]   # (B, C)
    rex_ref[...] = fc2 + mu                                        # new_x

    # ---- classifier on agg = x (unpadded (8, C) weight; tiny masked vst) ----
    logits_ref[...] = lax.dot_general(
        xp.astype(jnp.bfloat16), wc_ref[...], (((1,), (1,)), ((), ())),
        preferred_element_type=jnp.float32) + bc_ref[...]          # (B, NUM_CLASS)


_VMEM_SPEC = pl.BlockSpec(memory_space=pltpu.MemorySpace.VMEM)


def fused_net(x_bcp, convw, mu, w1, b1, w2, b2, wc, bc):
    flops = 2 * B * (P * CIN * C + P * C + C * D + D * C + C * NUM_CLASS)
    bytes_accessed = int(
        sum(a.size * a.dtype.itemsize
            for a in (x_bcp, convw, mu, w1, b1, w2, b2, wc, bc))
        + (B * NUM_CLASS + 2 * B * C) * 4)
    return pl.pallas_call(
        _fused_net_kernel,
        out_shape=(
            jax.ShapeDtypeStruct((B, NUM_CLASS), jnp.float32),     # logits
            jax.ShapeDtypeStruct((B, C), jnp.float32),             # agg (pooled feats)
            jax.ShapeDtypeStruct((B, C), jnp.float32),             # re_x
        ),
        in_specs=[_VMEM_SPEC] * 9,
        out_specs=(_VMEM_SPEC, _VMEM_SPEC, _VMEM_SPEC),
        cost_estimate=pl.CostEstimate(flops=flops, transcendentals=0,
                                      bytes_accessed=bytes_accessed),
    )(x_bcp, convw, mu, w1, b1, w2, b2, wc, bc)


# ----------------------------- parameters ------------------------------------
key = jax.random.PRNGKey(0)
k_img, k_conv, k_w1, k_w2, k_wc = jax.random.split(key, 5)

# conv weight: N(0, sqrt(2 / (k*k*out_channels))) per the module's init loop
conv_w = (jax.random.normal(k_conv, (CIN, C), jnp.float32)
          * np.float32(np.sqrt(2.0 / (1 * 1 * C))))
mu_emb = jnp.zeros((1, C), jnp.float32)                                  # mu_embeddings
fc1_w = jax.random.normal(k_w1, (D, C), jnp.float32) * np.float32(1.0 / np.sqrt(C))
fc1_b = jnp.zeros((1, D), jnp.float32)                                   # bias zeroed (frozen)
fc2_w = jax.random.normal(k_w2, (C, D), jnp.float32) * np.float32(1.0 / np.sqrt(D))
fc2_b = jnp.zeros((1, C), jnp.float32)                                   # bias zeroed (frozen)
cls_w = jax.random.normal(k_wc, (NUM_CLASS, C), jnp.float32) * np.float32(1.0 / np.sqrt(C))
cls_b = jnp.zeros((1, NUM_CLASS), jnp.float32)                           # bias zeroed

# ---- one-time init-side preprocessing (weight-only, never per-call) ----
conv_w_bf16 = conv_w.astype(jnp.bfloat16)
fc1_w_bf16 = fc1_w.astype(jnp.bfloat16)
fc2_w_bf16 = fc2_w.astype(jnp.bfloat16)
cls_w_bf16 = cls_w.astype(jnp.bfloat16)            # no 128-row zero pad anymore
# r / lw depend only on weights -> computed once here, not inside the kernel.
R_CONST = fc1_w @ fc2_w                    # (D, D)
LW_CONST = fc1_w - fc2_w.T                 # (D, C)


# ------------------------------ forward --------------------------------------
@jax.jit
def _net_forward_core(img_nchw):
    # NCHW -> (B, CIN, H*W) is a FREE reshape: no transpose kernel, no extra
    # HBM round trip of the input.
    x = img_nchw.reshape(B, CIN, P)
    return fused_net(x, conv_w_bf16, mu_emb, fc1_w_bf16, fc1_b,
                     fc2_w_bf16, fc2_b, cls_w_bf16, cls_b)


def net_forward(img_nchw):
    logits, agg, re_x = _net_forward_core(img_nchw)
    return logits, agg, re_x, R_CONST, LW_CONST


def reference(img_nchw):
    x = img_nchw.reshape(B, CIN, P)
    xf = jnp.einsum('bcp,cf->bpf', x, conv_w)                # (B, P, C)
    p = jnp.mean(jnp.maximum(xf, 0.0), axis=1)               # (B, C)
    resd = p - mu_emb
    f1 = resd @ fc1_w.T + fc1_b
    f2 = f1 @ fc2_w.T + fc2_b
    re_x = f2 + mu_emb
    r = fc1_w @ fc2_w
    lw = fc1_w - fc2_w.T
    logits = p @ cls_w.T + cls_b
    return logits, p, re_x, r, lw


if __name__ == "__main__":
    img = jax.random.normal(k_img, (B, CIN, H, W), jnp.float32)   # NCHW input

    outs = net_forward(img)
    outs = jax.block_until_ready(outs)

    refs = reference(img)
    # bf16 operands (f32 accumulation) on the VIM path -> loosened tolerance.
    for o, rr in zip(outs, refs):
        np.testing.assert_allclose(np.asarray(o), np.asarray(rr),
                                   rtol=2e-2, atol=2e-2)

    print("KERNEL_OK")
</pallas_src>

<mosaic_0001>
module attributes {stable_mosaic.version = 11 : i64} {
  func.func @_fused_net_kernel(%arg0: memref<2x4x256xf32, #tpu.memory_space<vmem>>, %arg1: memref<4x1024xbf16, #tpu.memory_space<vmem>>, %arg2: memref<1x1024xf32, #tpu.memory_space<vmem>>, %arg3: memref<32x1024xbf16, #tpu.memory_space<vmem>>, %arg4: memref<1x32xf32, #tpu.memory_space<vmem>>, %arg5: memref<1024x32xbf16, #tpu.memory_space<vmem>>, %arg6: memref<1x1024xf32, #tpu.memory_space<vmem>>, %arg7: memref<8x1024xbf16, #tpu.memory_space<vmem>>, %arg8: memref<1x8xf32, #tpu.memory_space<vmem>>, %arg9: memref<2x8xf32, #tpu.memory_space<vmem>>, %arg10: memref<2x1024xf32, #tpu.memory_space<vmem>>, %arg11: memref<2x1024xf32, #tpu.memory_space<vmem>>) attributes {dimension_semantics = [], scalar_prefetch = 0 : i64, scratch_operands = 0 : i64, tpu.core_type = #tpu.core_type<tc>} {
    %c0 = arith.constant 0 : index
    %c0_0 = arith.constant 0 : index
    %0 = vector.load %arg1[%c0, %c0_0] : memref<4x1024xbf16, #tpu.memory_space<vmem>>, vector<4x1024xbf16>
    %cst = arith.constant 3.906250e-03 : bf16
    %1 = vector.broadcast %cst : bf16 to vector<1x128xbf16>
    %cst_1 = arith.constant 0.000000e+00 : f32
    %2 = vector.broadcast %cst_1 : f32 to vector<1x1024xf32>
    %c0_2 = arith.constant 0 : index
    %c0_3 = arith.constant 0 : index
    %c0_4 = arith.constant 0 : index
    %3 = vector.load %arg0[%c0_2, %c0_3, %c0_4] : memref<2x4x256xf32, #tpu.memory_space<vmem>>, vector<1x4x128xf32>
    %4 = vector.shape_cast %3 : vector<1x4x128xf32> to vector<4x128xf32>
    %5 = arith.truncf %4 : vector<4x128xf32> to vector<4x128xbf16>
    %cst_5 = arith.constant dense<0.000000e+00> : vector<128x1024xf32>
    %6 = tpu.matmul %5, %0, %cst_5 {dimension_numbers = #tpu.dot_dimension_numbers<[0], [0], [1], [1], [0, 1, 1, 1], [], []>} : vector<4x128xbf16>, vector<4x1024xbf16>, vector<128x1024xf32> -> vector<128x1024xf32>
    %cst_6 = arith.constant 0.000000e+00 : f32
    %7 = vector.broadcast %cst_6 : f32 to vector<128x1024xf32>
    %8 = arith.maximumf %6, %7 : vector<128x1024xf32>
    %9 = arith.truncf %8 : vector<128x1024xf32> to vector<128x1024xbf16>
    %cst_7 = arith.constant dense<0.000000e+00> : vector<1x1024xf32>
    %10 = tpu.matmul %1, %9, %cst_7 {dimension_numbers = #tpu.dot_dimension_numbers<[1], [0], [0], [1], [0, 0, 1, 1], [], []>} : vector<1x128xbf16>, vector<128x1024xbf16>, vector<1x1024xf32> -> vector<1x1024xf32>
    %11 = arith.addf %2, %10 : vector<1x1024xf32>
    %c0_8 = arith.constant 0 : index
    %c0_9 = arith.constant 0 : index
    %c128 = arith.constant 128 : index
    %12 = vector.load %arg0[%c0_8, %c0_9, %c128] : memref<2x4x256xf32, #tpu.memory_space<vmem>>, vector<1x4x128xf32>
    %13 = vector.shape_cast %12 : vector<1x4x128xf32> to vector<4x128xf32>
    %14 = arith.truncf %13 : vector<4x128xf32> to vector<4x128xbf16>
    %cst_10 = arith.constant dense<0.000000e+00> : vector<128x1024xf32>
    %15 = tpu.matmul %14, %0, %cst_10 {dimension_numbers = #tpu.dot_dimension_numbers<[0], [0], [1], [1], [0, 1, 1, 1], [], []>} : vector<4x128xbf16>, vector<4x1024xbf16>, vector<128x1024xf32> -> vector<128x1024xf32>
    %cst_11 = arith.constant 0.000000e+00 : f32
    %16 = vector.broadcast %cst_11 : f32 to vector<128x1024xf32>
    %17 = arith.maximumf %15, %16 : vector<128x1024xf32>
    %18 = arith.truncf %17 : vector<128x1024xf32> to vector<128x1024xbf16>
    %cst_12 = arith.constant dense<0.000000e+00> : vector<1x1024xf32>
    %19 = tpu.matmul %1, %18, %cst_12 {dimension_numbers = #tpu.dot_dimension_numbers<[1], [0], [0], [1], [0, 0, 1, 1], [], []>} : vector<1x128xbf16>, vector<128x1024xbf16>, vector<1x1024xf32> -> vector<1x1024xf32>
    %20 = arith.addf %11, %19 : vector<1x1024xf32>
    %cst_13 = arith.constant 0.000000e+00 : f32
    %21 = vector.broadcast %cst_13 : f32 to vector<1x1024xf32>
    %c1 = arith.constant 1 : index
    %c0_14 = arith.constant 0 : index
    %c0_15 = arith.constant 0 : index
    %22 = vector.load %arg0[%c1, %c0_14, %c0_15] : memref<2x4x256xf32, #tpu.memory_space<vmem>>, vector<1x4x128xf32>
    %23 = vector.shape_cast %22 : vector<1x4x128xf32> to vector<4x128xf32>
    %24 = arith.truncf %23 : vector<4x128xf32> to vector<4x128xbf16>
    %cst_16 = arith.constant dense<0.000000e+00> : vector<128x1024xf32>
    %25 = tpu.matmul %24, %0, %cst_16 {dimension_numbers = #tpu.dot_dimension_numbers<[0], [0], [1], [1], [0, 1, 1, 1], [], []>} : vector<4x128xbf16>, vector<4x1024xbf16>, vector<128x1024xf32> -> vector<128x1024xf32>
    %cst_17 = arith.constant 0.000000e+00 : f32
    %26 = vector.broadcast %cst_17 : f32 to vector<128x1024xf32>
    %27 = arith.maximumf %25, %26 : vector<128x1024xf32>
    %28 = arith.truncf %27 : vector<128x1024xf32> to vector<128x1024xbf16>
    %cst_18 = arith.constant dense<0.000000e+00> : vector<1x1024xf32>
    %29 = tpu.matmul %1, %28, %cst_18 {dimension_numbers = #tpu.dot_dimension_numbers<[1], [0], [0], [1], [0, 0, 1, 1], [], []>} : vector<1x128xbf16>, vector<128x1024xbf16>, vector<1x1024xf32> -> vector<1x1024xf32>
    %30 = arith.addf %21, %29 : vector<1x1024xf32>
    %c1_19 = arith.constant 1 : index
    %c0_20 = arith.constant 0 : index
    %c128_21 = arith.constant 128 : index
    %31 = vector.load %arg0[%c1_19, %c0_20, %c128_21] : memref<2x4x256xf32, #tpu.memory_space<vmem>>, vector<1x4x128xf32>
    %32 = vector.shape_cast %31 : vector<1x4x128xf32> to vector<4x128xf32>
    %33 = arith.truncf %32 : vector<4x128xf32> to vector<4x128xbf16>
    %cst_22 = arith.constant dense<0.000000e+00> : vector<128x1024xf32>
    %34 = tpu.matmul %33, %0, %cst_22 {dimension_numbers = #tpu.dot_dimension_numbers<[0], [0], [1], [1], [0, 1, 1, 1], [], []>} : vector<4x128xbf16>, vector<4x1024xbf16>, vector<128x1024xf32> -> vector<128x1024xf32>
    %cst_23 = arith.constant 0.000000e+00 : f32
    %35 = vector.broadcast %cst_23 : f32 to vector<128x1024xf32>
    %36 = arith.maximumf %34, %35 : vector<128x1024xf32>
    %37 = arith.truncf %36 : vector<128x1024xf32> to vector<128x1024xbf16>
    %cst_24 = arith.constant dense<0.000000e+00> : vector<1x1024xf32>
    %38 = tpu.matmul %1, %37, %cst_24 {dimension_numbers = #tpu.dot_dimension_numbers<[1], [0], [0], [1], [0, 0, 1, 1], [], []>} : vector<1x128xbf16>, vector<128x1024xbf16>, vector<1x1024xf32> -> vector<1x1024xf32>
    %39 = arith.addf %30, %38 : vector<1x1024xf32>
    %40 = tpu.concatenate %20, %39 in 0 : vector<1x1024xf32>, vector<1x1024xf32> -> vector<2x1024xf32>
    %c0_25 = arith.constant 0 : index
    %c0_26 = arith.constant 0 : index
    %41 = vector.load %arg10[%c0_25, %c0_26] : memref<2x1024xf32, #tpu.memory_space<vmem>>, vector<2x1024xf32>
    tpu.vector_store %arg10[%c0_25, %c0_26], %40 {strides = array<i32>} : memref<2x1024xf32, #tpu.memory_space<vmem>>, vector<2x1024xf32>,
    %c0_27 = arith.constant 0 : index
    %c0_28 = arith.constant 0 : index
    %42 = vector.load %arg2[%c0_27, %c0_28] : memref<1x1024xf32, #tpu.memory_space<vmem>>, vector<1x1024xf32>
    %43 = vector.broadcast %42 : vector<1x1024xf32> to vector<2x1024xf32>
    %44 = arith.subf %40, %43 : vector<2x1024xf32>
    %45 = arith.truncf %44 : vector<2x1024xf32> to vector<2x1024xbf16>
    %c0_29 = arith.constant 0 : index
    %c0_30 = arith.constant 0 : index
    %46 = vector.load %arg3[%c0_29, %c0_30] : memref<32x1024xbf16, #tpu.memory_space<vmem>>, vector<32x1024xbf16>
    %cst_31 = arith.constant dense<0.000000e+00> : vector<2x32xf32>
    %47 = tpu.matmul %45, %46, %cst_31 {dimension_numbers = #tpu.dot_dimension_numbers<[1], [1], [0], [0], [0, 0, 1, 0], [], []>} : vector<2x1024xbf16>, vector<32x1024xbf16>, vector<2x32xf32> -> vector<2x32xf32>
    %c0_32 = arith.constant 0 : index
    %c0_33 = arith.constant 0 : index
    %48 = vector.load %arg4[%c0_32, %c0_33] : memref<1x32xf32, #tpu.memory_space<vmem>>, vector<1x32xf32>
    %49 = vector.broadcast %48 : vector<1x32xf32> to vector<2x32xf32>
    %50 = arith.addf %47, %49 : vector<2x32xf32>
    %51 = arith.truncf %50 : vector<2x32xf32> to vector<2x32xbf16>
    %c0_34 = arith.constant 0 : index
    %c0_35 = arith.constant 0 : index
    %52 = vector.load %arg5[%c0_34, %c0_35] : memref<1024x32xbf16, #tpu.memory_space<vmem>>, vector<1024x32xbf16>
    %cst_36 = arith.constant dense<0.000000e+00> : vector<2x1024xf32>
    %53 = tpu.matmul %51, %52, %cst_36 {dimension_numbers = #tpu.dot_dimension_numbers<[1], [1], [0], [0], [0, 0, 1, 0], [], []>} : vector<2x32xbf16>, vector<1024x32xbf16>, vector<2x1024xf32> -> vector<2x1024xf32>
    %c0_37 = arith.constant 0 : index
    %c0_38 = arith.constant 0 : index
    %54 = vector.load %arg6[%c0_37, %c0_38] : memref<1x1024xf32, #tpu.memory_space<vmem>>, vector<1x1024xf32>
    %55 = vector.broadcast %54 : vector<1x1024xf32> to vector<2x1024xf32>
    %56 = arith.addf %53, %55 : vector<2x1024xf32>
    %57 = vector.broadcast %42 : vector<1x1024xf32> to vector<2x1024xf32>
    %58 = arith.addf %56, %57 : vector<2x1024xf32>
    %c0_39 = arith.constant 0 : index
    %c0_40 = arith.constant 0 : index
    %59 = vector.load %arg11[%c0_39, %c0_40] : memref<2x1024xf32, #tpu.memory_space<vmem>>, vector<2x1024xf32>
    tpu.vector_store %arg11[%c0_39, %c0_40], %58 {strides = array<i32>} : memref<2x1024xf32, #tpu.memory_space<vmem>>, vector<2x1024xf32>,
    %60 = arith.truncf %40 : vector<2x1024xf32> to vector<2x1024xbf16>
    %c0_41 = arith.constant 0 : index
    %c0_42 = arith.constant 0 : index
    %61 = vector.load %arg7[%c0_41, %c0_42] : memref<8x1024xbf16, #tpu.memory_space<vmem>>, vector<8x1024xbf16>
    %cst_43 = arith.constant dense<0.000000e+00> : vector<2x8xf32>
    %62 = tpu.matmul %60, %61, %cst_43 {dimension_numbers = #tpu.dot_dimension_numbers<[1], [1], [0], [0], [0, 0, 1, 0], [], []>} : vector<2x1024xbf16>, vector<8x1024xbf16>, vector<2x8xf32> -> vector<2x8xf32>
    %c0_44 = arith.constant 0 : index
    %c0_45 = arith.constant 0 : index
    %63 = vector.load %arg8[%c0_44, %c0_45] : memref<1x8xf32, #tpu.memory_space<vmem>>, vector<1x8xf32>
    %64 = vector.broadcast %63 : vector<1x8xf32> to vector<2x8xf32>
    %65 = arith.addf %62, %64 : vector<2x8xf32>
    %c0_46 = arith.constant 0 : index
    %c0_47 = arith.constant 0 : index
    %66 = vector.load %arg9[%c0_46, %c0_47] : memref<2x8xf32, #tpu.memory_space<vmem>>, vector<2x8xf32>
    tpu.vector_store %arg9[%c0_46, %c0_47], %65 {strides = array<i32>} : memref<2x8xf32, #tpu.memory_space<vmem>>, vector<2x8xf32>,
    return
  }
}

</mosaic_0001>

<llo_original>
// kernel: _net_forward_core.1
$region0: #{_net_forward_core.1}
  #allocation0 [shape = 'u32[]', space=smem, size = 0x4, offset = 0x4, fixed_abs, tag = 'smem constant byte address 0x4 - core index']
  #allocation1 [shape = 'u32[144,128]{1,0:T(1,128)}', space=vmem, size = 0x12000, scoped, tag = 'internal scratch']
  %s0 = inlined_call_operand.vmem [shape: f32[2,4,256], index: 0, kind: input, shape index: {}]
  %s1 = inlined_call_operand.hbm [shape: bf16[4,1024], index: 1, kind: input, shape index: {}]
  %s2 = inlined_call_operand.vmem [shape: f32[1,1024], index: 2, kind: input, shape index: {}, may-alias: {2,6}]
  %s3 = inlined_call_operand.vmem [shape: bf16[32,1024], index: 3, kind: input, shape index: {}]
  %s4 = inlined_call_operand.vmem [shape: f32[1,32], index: 4, kind: input, shape index: {}]
  %s5 = inlined_call_operand.hbm [shape: bf16[1024,32], index: 5, kind: input, shape index: {}]
  %s6 = inlined_call_operand.vmem [shape: f32[1,1024], index: 6, kind: input, shape index: {}, may-alias: {2,6}]
  %s7 = inlined_call_operand.vmem [shape: bf16[8,1024], index: 7, kind: input, shape index: {}]
  %s8 = inlined_call_operand.vmem [shape: f32[1,8], index: 8, kind: input, shape index: {}]
  %s9 = inlined_call_operand.hbm [shape: f32[2,8], index: 9, kind: output, shape index: {0}]
  %s10 = inlined_call_operand.hbm [shape: f32[2,1024], index: 10, kind: output, shape index: {1}]
  %s11 = inlined_call_operand.hbm [shape: f32[2,1024], index: 11, kind: output, shape index: {2}]
  %12 = xla_tuple %s9, %s10, %s11
  %s13 = sld [smem:[#allocation0]]
  $region70: #{_net_forward_core.1} parent=0
    _
  %s15 = ssub.s32 1, %s13
  %s16 = scalar_select 0, %s15, %s13
  $region1: #{_net_forward_core.1} parent=0
    #allocation2 [shape = 'u8[8192]{0}', space=vmem, size = 0x2000, scoped, tag = 'input window, operand 1, single buffered']
    #allocation3 [shape = 's32[1]{0}', space=sflag, size = 0x4, scoped, tag = 'scoped memory for _net_forward_core.1']
    #allocation4 [shape = 's32[1]{0}', space=sflag, size = 0x4, scoped, tag = 'scoped memory for _net_forward_core.1']
    #allocation5 [shape = 'u8[262144]{0}', space=vmem, size = 0x40000, scoped, tag = 'input window, operand 5, single buffered']
    #allocation6 [shape = 's32[1]{0}', space=sflag, size = 0x4, scoped, tag = 'scoped memory for _net_forward_core.1']
    #allocation7 [shape = 'u8[1024]{0}', space=vmem, size = 0x400, scoped, tag = 'output window, operand 0, single buffered']
    #allocation8 [shape = 'u8[8192]{0}', space=vmem, size = 0x2000, scoped, tag = 'output window, operand 1, single buffered']
    #allocation9 [shape = 's32[1]{0}', space=sflag, size = 0x4, scoped, tag = 'scoped memory for _net_forward_core.1']
    #allocation10 [shape = 'u8[8192]{0}', space=vmem, size = 0x2000, scoped, tag = 'output window, operand 2, single buffered']
    %17 = vsyncpa [#allocation3], 0
    %18 = vsyncpa [#allocation6], 0
    %19 = vsyncpa [#allocation4], 0
    %20 = vsyncpa [#allocation9], 0
    // Predicated region
    $region2: #{_net_forward_core.1} parent=1 // pred_check
      _
    $region3: #{_net_forward_core.1} parent=1 // pred_check_branch
      %22 = sbr.rel (0) target = $region5
    $region4: #{_net_forward_core.1} parent=1 // pred_region
      _
    $region5: #{_net_forward_core.1} parent=1 // pred_fallthru
      _
    // Predicated region
    $region6: #{_net_forward_core.1} parent=1 // pred_check
      _
    $region7: #{_net_forward_core.1} parent=1 // pred_check_branch
      %24 = sbr.rel (0) target = $region9
    $region8: #{_net_forward_core.1} parent=1 // pred_region
      %s26 = ssub.s32 256, 256
      %27 = vsyncadd [#allocation3], %s26
      %s29 = sshll.u32 [#allocation2], 4
      %s30 = int_to_ptr.vmem [resolvable:$true] %s29
      %32 = dma.hbm_to_vmem [thread:$0]  %s1, 256, %s30, [#allocation3]
    $region9: #{_net_forward_core.1} parent=1 // pred_fallthru
      _
    // Predicated region
    $region10: #{_net_forward_core.1} parent=1 // pred_check
      _
    $region11: #{_net_forward_core.1} parent=1 // pred_check_branch
      %34 = sbr.rel (0) target = $region13
    $region12: #{_net_forward_core.1} parent=1 // pred_region
      _
    $region13: #{_net_forward_core.1} parent=1 // pred_fallthru
      _
    // Predicated region
    $region14: #{_net_forward_core.1} parent=1 // pred_check
      _
    $region15: #{_net_forward_core.1} parent=1 // pred_check_branch
      %36 = sbr.rel (0) target = $region17
    $region16: #{_net_forward_core.1} parent=1 // pred_region
      _
    $region17: #{_net_forward_core.1} parent=1 // pred_fallthru
      _
    // Predicated region
    $region18: #{_net_forward_core.1} parent=1 // pred_check
      _
    $region19: #{_net_forward_core.1} parent=1 // pred_check_branch
      %38 = sbr.rel (0) target = $region21
    $region20: #{_net_forward_core.1} parent=1 // pred_region
      _
    $region21: #{_net_forward_core.1} parent=1 // pred_fallthru
      _
    // Predicated region
    $region22: #{_net_forward_core.1} parent=1 // pred_check
      _
    $region23: #{_net_forward_core.1} parent=1 // pred_check_branch
      %40 = sbr.rel (0) target = $region25
    $region24: #{_net_forward_core.1} parent=1 // pred_region
      %s42 = ssub.s32 8192, 8192
      %43 = vsyncadd [#allocation6], %s42
      %s44 = sshll.u32 [#allocation5], 4
      %s45 = int_to_ptr.vmem [resolvable:$true] %s44
      %50 = dma.hbm_to_vmem [thread:$0]  %s5, 8192, %s45, [#allocation6], 64, 64, 4
    $region25: #{_net_forward_core.1} parent=1 // pred_fallthru
      _
    // Predicated region
    $region26: #{_net_forward_core.1} parent=1 // pred_check
      _
    $region27: #{_net_forward_core.1} parent=1 // pred_check_branch
      %52 = sbr.rel (0) target = $region29
    $region28: #{_net_forward_core.1} parent=1 // pred_region
      _
    $region29: #{_net_forward_core.1} parent=1 // pred_fallthru
      _
    // Predicated region
    $region30: #{_net_forward_core.1} parent=1 // pred_check
      _
    $region31: #{_net_forward_core.1} parent=1 // pred_check_branch
      %54 = sbr.rel (0) target = $region33
    $region32: #{_net_forward_core.1} parent=1 // pred_region
      _
    $region33: #{_net_forward_core.1} parent=1 // pred_fallthru
      _
    // Predicated region
    $region34: #{_net_forward_core.1} parent=1 // pred_check
      _
    $region35: #{_net_forward_core.1} parent=1 // pred_check_branch
      %56 = sbr.rel (0) target = $region37
    $region36: #{_net_forward_core.1} parent=1 // pred_region
      _
    $region37: #{_net_forward_core.1} parent=1 // pred_fallthru
      _
    // Predicated region
    $region38: #{_net_forward_core.1} parent=1 // pred_check
      _
    $region39: #{_net_forward_core.1} parent=1 // pred_check_branch
      %58 = sbr.rel (0) target = $region41
    $region40: #{_net_forward_core.1} parent=1 // pred_region
      %59 = dma.done [#allocation3], 256
    $region41: #{_net_forward_core.1} parent=1 // pred_fallthru
      _
    // Predicated region
    $region42: #{_net_forward_core.1} parent=1 // pred_check
      _
    $region43: #{_net_forward_core.1} parent=1 // pred_check_branch
      %61 = sbr.rel (0) target = $region45
    $region44: #{_net_forward_core.1} parent=1 // pred_region
      %62 = dma.done [#allocation6], 8192
    $region45: #{_net_forward_core.1} parent=1 // pred_fallthru
      _
    %v65 = vld [vmem:[#allocation2] sm:$0xff]
    %v66 = vld [vmem:[#allocation2 + $0x8] sm:$0xff]
    %v67 = vld [vmem:[%s0] sm:$0xf]
    %v68 = vpack.c.bf16 %v67, %v67
    %69 = vxpose.xlu0.c.b16.start [1/8] %v68, 128
    %70 = vxpose.xlu0.c.b16.cont [2/8] 0, 128
    %71 = vxpose.xlu0.c.b16.cont [3/8] 0, 128
    %72 = vxpose.xlu0.c.b16.cont [4/8] 0, 128
    %73 = vxpose.xlu0.c.b16.cont [5/8] 0, 128
    %74 = vxpose.xlu0.c.b16.cont [6/8] 0, 128
    %75 = vxpose.xlu0.c.b16.cont [7/8] 0, 128
    %76 = vxpose.xlu0.c.b16.end [8/8] 0, 128
    %v77 = vpop.trf.xlu0
    %v78 = vpop.trf.xlu0
    %v79 = vpop.trf.xlu0
    %v80 = vpop.trf.xlu0
    %v81 = vpop.trf.xlu0
    %v82 = vpop.trf.xlu0
    %v83 = vpop.trf.xlu0
    %v84 = vpop.trf.xlu0
    %v87 = vcombine.high %v65, %v65
    %v89 = vunpack.c.l.s4 1983009808
    %v90 = vunpack.c.0.s8 %v89
    %v91 = vlaneseq
    %v92 = vshrl.u32 %v91, 7
    %v93 = vsub.s32 %v90, %v92
    %v94 = vrot.slane %v65, %v93
    %v96 = vunpack.c.l.s4 1983009808
    %v97 = vunpack.c.0.s8 %v96
    %v98 = vlaneseq
    %v99 = vshrl.u32 %v98, 7
    %v100 = vsub.s32 %v97, %v99
    %v101 = vrot.slane %v87, %v100
    %v102 = vcombine.high %v94, %v94
    %v103 = vcombine.high %v101, %v101
    %v104 = vcombine.high %v66, %v66
    %v106 = vunpack.c.l.s4 1983009808
    %v107 = vunpack.c.0.s8 %v106
    %v108 = vlaneseq
    %v109 = vshrl.u32 %v108, 7
    %v110 = vsub.s32 %v107, %v109
    %v111 = vrot.slane %v66, %v110
    %v113 = vunpack.c.l.s4 1983009808
    %v114 = vunpack.c.0.s8 %v113
    %v115 = vlaneseq
    %v116 = vshrl.u32 %v115, 7
    %v117 = vsub.s32 %v114, %v116
    %v118 = vrot.slane %v104, %v117
    %v119 = vcombine.high %v111, %v111
    %v120 = vcombine.high %v118, %v118
    %vm121 = vcmask 31744
    %v123 = vsel %vm121, %v77, 0
    %v126 = vsel %vm121, %v78, 0
    %v129 = vsel %vm121, %v79, 0
    %v132 = vsel %vm121, %v80, 0
    %v135 = vsel %vm121, %v81, 0
    %v138 = vsel %vm121, %v82, 0
    %v141 = vsel %vm121, %v83, 0
    %v144 = vsel %vm121, %v84, 0
    %vm146 = vcmask 1041408
    %v148 = vsel %vm146, %v94, 0
    %v151 = vsel %vm146, %v102, 0
    %v154 = vsel %vm146, %v101, 0
    %v157 = vsel %vm146, %v103, 0
    %v160 = vsel %vm146, %v111, 0
    %v163 = vsel %vm146, %v119, 0
    %v166 = vsel %vm146, %v118, 0
    %v169 = vsel %vm146, %v120, 0
    %171 = vmatprep.subr.bf16.mxu0 0
    %172 = vmatpush1.bf16.msra.mxu0 0
    %173 = vmatprep.subr.bf16.mxu0 0
    %174 = vmatpush1.bf16.msra.mxu0 0
    %175 = vmatprep.subr.bf16.mxu0 0
    %176 = vmatpush1.bf16.msra.mxu0 0
    %177 = vmatprep.subr.bf16.mxu0 0
    %178 = vmatpush1.bf16.msra.mxu0 0
    %179 = vmatprep.subr.bf16.mxu0 0
    %180 = vmatpush1.bf16.msra.mxu0 0
    %181 = vmatprep.subr.bf16.mxu0 0
    %182 = vmatpush1.bf16.msra.mxu0 0
    %183 = vmatprep.subr.bf16.mxu0 0
    %184 = vmatpush1.bf16.msra.mxu0 0
    %185 = vmatprep.subr.bf16.mxu0 %v151
    %186 = vmatpush1.bf16.msra.mxu0 %v148
    %187 = vmatprep.subr.bf16.mxu0 0
    %188 = vmatpush2.bf16.msra.mxu0 0
    %189 = vmatprep.subr.bf16.mxu0 0
    %190 = vmatpush2.bf16.msra.mxu0 0
    %191 = vmatprep.subr.bf16.mxu0 0
    %192 = vmatpush2.bf16.msra.mxu0 0
    %193 = vmatprep.subr.bf16.mxu0 0
    %194 = vmatpush2.bf16.msra.mxu0 0
    %195 = vmatprep.subr.bf16.mxu0 0
    %196 = vmatpush2.bf16.msra.mxu0 0
    %197 = vmatprep.subr.bf16.mxu0 0
    %198 = vmatpush2.bf16.msra.mxu0 0
    %199 = vmatprep.subr.bf16.mxu0 0
    %200 = vmatpush2.bf16.msra.mxu0 0
    %201 = vmatprep.subr.bf16.mxu0 0
    %202 = vmatpush2.bf16.msra.mxu0 0
    %203 = vmatprep.mubr.bf16.mxu0 0
    %204 = vmatmul.mubr.bf16.gmra.mxu0 %v123
    %v205 = vpop.f32.mrf.mxu0
    %v206 = vadd.f32 0.0, %v205
    %v207 = vpop.f32.mrf.mxu0
    %v208 = vadd.f32 0.0, %v207
    %v209 = vpop.f32.mrf.mxu0
    %v210 = vadd.f32 0.0, %v209
    %v211 = vpop.f32.mrf.mxu0
    %v212 = vadd.f32 0.0, %v211
    %213 = vmatprep.mubr.bf16.mxu0 0
    %214 = vmatmul.mubr.bf16.gmra.mxu0 %v126
    %v215 = vpop.f32.mrf.mxu0
    %v216 = vadd.f32 0.0, %v215
    %v217 = vpop.f32.mrf.mxu0
    %v218 = vadd.f32 0.0, %v217
    %v219 = vpop.f32.mrf.mxu0
    %v220 = vadd.f32 0.0, %v219
    %v221 = vpop.f32.mrf.mxu0
    %v222 = vadd.f32 0.0, %v221
    %223 = vmatprep.mubr.bf16.mxu0 0
    %224 = vmatmul.mubr.bf16.gmra.mxu0 %v129
    %v225 = vpop.f32.mrf.mxu0
    %v226 = vadd.f32 0.0, %v225
    %v227 = vpop.f32.mrf.mxu0
    %v228 = vadd.f32 0.0, %v227
    %v229 = vpop.f32.mrf.mxu0
    %v230 = vadd.f32 0.0, %v229
    %v231 = vpop.f32.mrf.mxu0
    %v232 = vadd.f32 0.0, %v231
    %233 = vmatprep.mubr.bf16.mxu0 0
    %234 = vmatmul.mubr.bf16.gmra.mxu0 %v132
    %v235 = vpop.f32.mrf.mxu0
    %v236 = vadd.f32 0.0, %v235
    %v237 = vpop.f32.mrf.mxu0
    %v238 = vadd.f32 0.0, %v237
    %v239 = vpop.f32.mrf.mxu0
    %v240 = vadd.f32 0.0, %v239
    %v241 = vpop.f32.mrf.mxu0
    %v242 = vadd.f32 0.0, %v241
    %243 = vmatprep.mubr.bf16.mxu0 0
    %244 = vmatmul.mubr.bf16.gmra.mxu0 %v135
    %v245 = vpop.f32.mrf.mxu0
    %v246 = vadd.f32 0.0, %v245
    %v247 = vpop.f32.mrf.mxu0
    %v248 = vadd.f32 0.0, %v247
    %v249 = vpop.f32.mrf.mxu0
    %v250 = vadd.f32 0.0, %v249
    %v251 = vpop.f32.mrf.mxu0
    %v252 = vadd.f32 0.0, %v251
    %253 = vmatprep.mubr.bf16.mxu0 0
    %254 = vmatmul.mubr.bf16.gmra.mxu0 %v138
    %v255 = vpop.f32.mrf.mxu0
    %v256 = vadd.f32 0.0, %v255
    %v257 = vpop.f32.mrf.mxu0
    %v258 = vadd.f32 0.0, %v257
    %v259 = vpop.f32.mrf.mxu0
    %v260 = vadd.f32 0.0, %v259
    %v261 = vpop.f32.mrf.mxu0
    %v262 = vadd.f32 0.0, %v261
    %263 = vmatprep.mubr.bf16.mxu0 0
    %264 = vmatmul.mubr.bf16.gmra.mxu0 %v141
    %v265 = vpop.f32.mrf.mxu0
    %v266 = vadd.f32 0.0, %v265
    %v267 = vpop.f32.mrf.mxu0
    %v268 = vadd.f32 0.0, %v267
    %v269 = vpop.f32.mrf.mxu0
    %v270 = vadd.f32 0.0, %v269
    %v271 = vpop.f32.mrf.mxu0
    %v272 = vadd.f32 0.0, %v271
    %273 = vmatprep.mubr.bf16.mxu0 0
    %274 = vmatmul.mubr.bf16.gmra.mxu0 %v144
    %v275 = vpop.f32.mrf.mxu0
    %v276 = vadd.f32 0.0, %v275
    %v277 = vpop.f32.mrf.mxu0
    %v278 = vadd.f32 0.0, %v277
    %v279 = vpop.f32.mrf.mxu0
    %v280 = vadd.f32 0.0, %v279
    %v281 = vpop.f32.mrf.mxu0
    %v282 = vadd.f32 0.0, %v281
    %283 = vdwg.mxu0
    %284 = vmatprep.subr.bf16.mxu0 0
    %285 = vmatpush1.bf16.msra.mxu0 0
    %286 = vmatprep.subr.bf16.mxu0 0
    %287 = vmatpush1.bf16.msra.mxu0 0
    %288 = vmatprep.subr.bf16.mxu0 0
    %289 = vmatpush1.bf16.msra.mxu0 0
    %290 = vmatprep.subr.bf16.mxu0 0
    %291 = vmatpush1.bf16.msra.mxu0 0
    %292 = vmatprep.subr.bf16.mxu0 0
    %293 = vmatpush1.bf16.msra.mxu0 0
    %294 = vmatprep.subr.bf16.mxu0 0
    %295 = vmatpush1.bf16.msra.mxu0 0
    %296 = vmatprep.subr.bf16.mxu0 0
    %297 = vmatpush1.bf16.msra.mxu0 0
    %298 = vmatprep.subr.bf16.mxu0 %v157
    %299 = vmatpush1.bf16.msra.mxu0 %v154
    %300 = vmatprep.subr.bf16.mxu0 0
    %301 = vmatpush2.bf16.msra.mxu0 0
    %302 = vmatprep.subr.bf16.mxu0 0
    %303 = vmatpush2.bf16.msra.mxu0 0
    %304 = vmatprep.subr.bf16.mxu0 0
    %305 = vmatpush2.bf16.msra.mxu0 0
    %306 = vmatprep.subr.bf16.mxu0 0
    %307 = vmatpush2.bf16.msra.mxu0 0
    %308 = vmatprep.subr.bf16.mxu0 0
    %309 = vmatpush2.bf16.msra.mxu0 0
    %310 = vmatprep.subr.bf16.mxu0 0
    %311 = vmatpush2.bf16.msra.mxu0 0
    %312 = vmatprep.subr.bf16.mxu0 0
    %313 = vmatpush2.bf16.msra.mxu0 0
    %314 = vmatprep.subr.bf16.mxu0 0
    %315 = vmatpush2.bf16.msra.mxu0 0
    %316 = vmatprep.mubr.bf16.mxu0 0
    %317 = vmatmul.mubr.bf16.gmra.mxu0 %v123
    %v318 = vpop.f32.mrf.mxu0
    %v319 = vadd.f32 0.0, %v318
    %v320 = vpop.f32.mrf.mxu0
    %v321 = vadd.f32 0.0, %v320
    %v322 = vpop.f32.mrf.mxu0
    %v323 = vadd.f32 0.0, %v322
    %v324 = vpop.f32.mrf.mxu0
    %v325 = vadd.f32 0.0, %v324
    %326 = vmatprep.mubr.bf16.mxu0 0
    %327 = vmatmul.mubr.bf16.gmra.mxu0 %v126
    %v328 = vpop.f32.mrf.mxu0
    %v329 = vadd.f32 0.0, %v328
    %v330 = vpop.f32.mrf.mxu0
    %v331 = vadd.f32 0.0, %v330
    %v332 = vpop.f32.mrf.mxu0
    %v333 = vadd.f32 0.0, %v332
    %v334 = vpop.f32.mrf.mxu0
    %v335 = vadd.f32 0.0, %v334
    %336 = vmatprep.mubr.bf16.mxu0 0
    %337 = vmatmul.mubr.bf16.gmra.mxu0 %v129
    %v338 = vpop.f32.mrf.mxu0
    %v339 = vadd.f32 0.0, %v338
    %v340 = vpop.f32.mrf.mxu0
    %v341 = vadd.f32 0.0, %v340
    %v342 = vpop.f32.mrf.mxu0
    %v343 = vadd.f32 0.0, %v342
    %v344 = vpop.f32.mrf.mxu0
    %v345 = vadd.f32 0.0, %v344
    %346 = vmatprep.mubr.bf16.mxu0 0
    %347 = vmatmul.mubr.bf16.gmra.mxu0 %v132
    %v348 = vpop.f32.mrf.mxu0
    %v349 = vadd.f32 0.0, %v348
    %v350 = vpop.f32.mrf.mxu0
    %v351 = vadd.f32 0.0, %v350
    %v352 = vpop.f32.mrf.mxu0
    %v353 = vadd.f32 0.0, %v352
    %v354 = vpop.f32.mrf.mxu0
    %v355 = vadd.f32 0.0, %v354
    %356 = vmatprep.mubr.bf16.mxu0 0
    %357 = vmatmul.mubr.bf16.gmra.mxu0 %v135
    %v358 = vpop.f32.mrf.mxu0
    %v359 = vadd.f32 0.0, %v358
    %v360 = vpop.f32.mrf.mxu0
    %v361 = vadd.f32 0.0, %v360
    %v362 = vpop.f32.mrf.mxu0
    %v363 = vadd.f32 0.0, %v362
    %v364 = vpop.f32.mrf.mxu0
    %v365 = vadd.f32 0.0, %v364
    %366 = vmatprep.mubr.bf16.mxu0 0
    %367 = vmatmul.mubr.bf16.gmra.mxu0 %v138
    %v368 = vpop.f32.mrf.mxu0
    %v369 = vadd.f32 0.0, %v368
    %v370 = vpop.f32.mrf.mxu0
    %v371 = vadd.f32 0.0, %v370
    %v372 = vpop.f32.mrf.mxu0
    %v373 = vadd.f32 0.0, %v372
    %v374 = vpop.f32.mrf.mxu0
    %v375 = vadd.f32 0.0, %v374
    %376 = vmatprep.mubr.bf16.mxu0 0
    %377 = vmatmul.mubr.bf16.gmra.mxu0 %v141
    %v378 = vpop.f32.mrf.mxu0
    %v379 = vadd.f32 0.0, %v378
    %v380 = vpop.f32.mrf.mxu0
    %v381 = vadd.f32 0.0, %v380
    %v382 = vpop.f32.mrf.mxu0
    %v383 = vadd.f32 0.0, %v382
    %v384 = vpop.f32.mrf.mxu0
    %v385 = vadd.f32 0.0, %v384
    %386 = vmatprep.mubr.bf16.mxu0 0
    %387 = vmatmul.mubr.bf16.gmra.mxu0 %v144
    %v388 = vpop.f32.mrf.mxu0
    %v389 = vadd.f32 0.0, %v388
    %v390 = vpop.f32.mrf.mxu0
    %v391 = vadd.f32 0.0, %v390
    %v392 = vpop.f32.mrf.mxu0
    %v393 = vadd.f32 0.0, %v392
    %v394 = vpop.f32.mrf.mxu0
    %v395 = vadd.f32 0.0, %v394
    %396 = vdwg.mxu0
    %397 = vmatprep.subr.bf16.mxu0 0
    %398 = vmatpush1.bf16.msra.mxu0 0
    %399 = vmatprep.subr.bf16.mxu0 0
    %400 = vmatpush1.bf16.msra.mxu0 0
    %401 = vmatprep.subr.bf16.mxu0 0
    %402 = vmatpush1.bf16.msra.mxu0 0
    %403 = vmatprep.subr.bf16.mxu0 0
    %404 = vmatpush1.bf16.msra.mxu0 0
    %405 = vmatprep.subr.bf16.mxu0 0
    %406 = vmatpush1.bf16.msra.mxu0 0
    %407 = vmatprep.subr.bf16.mxu0 0
    %408 = vmatpush1.bf16.msra.mxu0 0
    %409 = vmatprep.subr.bf16.mxu0 0
    %410 = vmatpush1.bf16.msra.mxu0 0
    %411 = vmatprep.subr.bf16.mxu0 %v163
    %412 = vmatpush1.bf16.msra.mxu0 %v160
    %413 = vmatprep.subr.bf16.mxu0 0
    %414 = vmatpush2.bf16.msra.mxu0 0
    %415 = vmatprep.subr.bf16.mxu0 0
    %416 = vmatpush2.bf16.msra.mxu0 0
    %417 = vmatprep.subr.bf16.mxu0 0
    %418 = vmatpush2.bf16.msra.mxu0 0
    %419 = vmatprep.subr.bf16.mxu0 0
    %420 = vmatpush2.bf16.msra.mxu0 0
    %421 = vmatprep.subr.bf16.mxu0 0
    %422 = vmatpush2.bf16.msra.mxu0 0
    %423 = vmatprep.subr.bf16.mxu0 0
    %424 = vmatpush2.bf16.msra.mxu0 0
    %425 = vmatprep.subr.bf16.mxu0 0
    %426 = vmatpush2.bf16.msra.mxu0 0
    %427 = vmatprep.subr.bf16.mxu0 0
    %428 = vmatpush2.bf16.msra.mxu0 0
    %429 = vmatprep.mubr.bf16.mxu0 0
    %430 = vmatmul.mubr.bf16.gmra.mxu0 %v123
    %v431 = vpop.f32.mrf.mxu0
    %v432 = vadd.f32 0.0, %v431
    %v433 = vpop.f32.mrf.mxu0
    %v434 = vadd.f32 0.0, %v433
    %v435 = vpop.f32.mrf.mxu0
    %v436 = vadd.f32 0.0, %v435
    %v437 = vpop.f32.mrf.mxu0
    %v438 = vadd.f32 0.0, %v437
    %439 = vmatprep.mubr.bf16.mxu0 0
    %440 = vmatmul.mubr.bf16.gmra.mxu0 %v126
    %v441 = vpop.f32.mrf.mxu0
    %v442 = vadd.f32 0.0, %v441
    %v443 = vpop.f32.mrf.mxu0
    %v444 = vadd.f32 0.0, %v443
    %v445 = vpop.f32.mrf.mxu0
    %v446 = vadd.f32 0.0, %v445
    %v447 = vpop.f32.mrf.mxu0
    %v448 = vadd.f32 0.0, %v447
    %449 = vmatprep.mubr.bf16.mxu0 0
    %450 = vmatmul.mubr.bf16.gmra.mxu0 %v129
    %v451 = vpop.f32.mrf.mxu0
    %v452 = vadd.f32 0.0, %v451
    %v453 = vpop.f32.mrf.mxu0
    %v454 = vadd.f32 0.0, %v453
    %v455 = vpop.f32.mrf.mxu0
    %v456 = vadd.f32 0.0, %v455
    %v457 = vpop.f32.mrf.mxu0
    %v458 = vadd.f32 0.0, %v457
    %459 = vmatprep.mubr.bf16.mxu0 0
    %460 = vmatmul.mubr.bf16.gmra.mxu0 %v132
    %v461 = vpop.f32.mrf.mxu0
    %v462 = vadd.f32 0.0, %v461
    %v463 = vpop.f32.mrf.mxu0
    %v464 = vadd.f32 0.0, %v463
    %v465 = vpop.f32.mrf.mxu0
    %v466 = vadd.f32 0.0, %v465
    %v467 = vpop.f32.mrf.mxu0
    %v468 = vadd.f32 0.0, %v467
    %469 = vmatprep.mubr.bf16.mxu0 0
    %470 = vmatmul.mubr.bf16.gmra.mxu0 %v135
    %v471 = vpop.f32.mrf.mxu0
    %v472 = vadd.f32 0.0, %v471
    %v473 = vpop.f32.mrf.mxu0
    %v474 = vadd.f32 0.0, %v473
    %v475 = vpop.f32.mrf.mxu0
    %v476 = vadd.f32 0.0, %v475
    %v477 = vpop.f32.mrf.mxu0
    %v478 = vadd.f32 0.0, %v477
    %479 = vmatprep.mubr.bf16.mxu0 0
    %480 = vmatmul.mubr.bf16.gmra.mxu0 %v138
    %v481 = vpop.f32.mrf.mxu0
    %v482 = vadd.f32 0.0, %v481
    %v483 = vpop.f32.mrf.mxu0
    %v484 = vadd.f32 0.0, %v483
    %v485 = vpop.f32.mrf.mxu0
    %v486 = vadd.f32 0.0, %v485
    %v487 = vpop.f32.mrf.mxu0
    %v488 = vadd.f32 0.0, %v487
    %489 = vmatprep.mubr.bf16.mxu0 0
    %490 = vmatmul.mubr.bf16.gmra.mxu0 %v141
    %v491 = vpop.f32.mrf.mxu0
    %v492 = vadd.f32 0.0, %v491
    %v493 = vpop.f32.mrf.mxu0
    %v494 = vadd.f32 0.0, %v493
    %v495 = vpop.f32.mrf.mxu0
    %v496 = vadd.f32 0.0, %v495
    %v497 = vpop.f32.mrf.mxu0
    %v498 = vadd.f32 0.0, %v497
    %499 = vmatprep.mubr.bf16.mxu0 0
    %500 = vmatmul.mubr.bf16.gmra.mxu0 %v144
    %v501 = vpop.f32.mrf.mxu0
    %v502 = vadd.f32 0.0, %v501
    %v503 = vpop.f32.mrf.mxu0
    %v504 = vadd.f32 0.0, %v503
    %v505 = vpop.f32.mrf.mxu0
    %v506 = vadd.f32 0.0, %v505
    %v507 = vpop.f32.mrf.mxu0
    %v508 = vadd.f32 0.0, %v507
    %509 = vdwg.mxu0
    %510 = vmatprep.subr.bf16.mxu0 0
    %511 = vmatpush1.bf16.msra.mxu0 0
    %512 = vmatprep.subr.bf16.mxu0 0
    %513 = vmatpush1.bf16.msra.mxu0 0
    %514 = vmatprep.subr.bf16.mxu0 0
    %515 = vmatpush1.bf16.msra.mxu0 0
    %516 = vmatprep.subr.bf16.mxu0 0
    %517 = vmatpush1.bf16.msra.mxu0 0
    %518 = vmatprep.subr.bf16.mxu0 0
    %519 = vmatpush1.bf16.msra.mxu0 0
    %520 = vmatprep.subr.bf16.mxu0 0
    %521 = vmatpush1.bf16.msra.mxu0 0
    %522 = vmatprep.subr.bf16.mxu0 0
    %523 = vmatpush1.bf16.msra.mxu0 0
    %524 = vmatprep.subr.bf16.mxu0 %v169
    %525 = vmatpush1.bf16.msra.mxu0 %v166
    %526 = vmatprep.subr.bf16.mxu0 0
    %527 = vmatpush2.bf16.msra.mxu0 0
    %528 = vmatprep.subr.bf16.mxu0 0
    %529 = vmatpush2.bf16.msra.mxu0 0
    %530 = vmatprep.subr.bf16.mxu0 0
    %531 = vmatpush2.bf16.msra.mxu0 0
    %532 = vmatprep.subr.bf16.mxu0 0
    %533 = vmatpush2.bf16.msra.mxu0 0
    %534 = vmatprep.subr.bf16.mxu0 0
    %535 = vmatpush2.bf16.msra.mxu0 0
    %536 = vmatprep.subr.bf16.mxu0 0
    %537 = vmatpush2.bf16.msra.mxu0 0
    %538 = vmatprep.subr.bf16.mxu0 0
    %539 = vmatpush2.bf16.msra.mxu0 0
    %540 = vmatprep.subr.bf16.mxu0 0
    %541 = vmatpush2.bf16.msra.mxu0 0
    %542 = vmatprep.mubr.bf16.mxu0 0
    %543 = vmatmul.mubr.bf16.gmra.mxu0 %v123
    %v544 = vpop.f32.mrf.mxu0
    %v545 = vadd.f32 0.0, %v544
    %v546 = vpop.f32.mrf.mxu0
    %v547 = vadd.f32 0.0, %v546
    %v548 = vpop.f32.mrf.mxu0
    %v549 = vadd.f32 0.0, %v548
    %v550 = vpop.f32.mrf.mxu0
    %v551 = vadd.f32 0.0, %v550
    %552 = vmatprep.mubr.bf16.mxu0 0
    %553 = vmatmul.mubr.bf16.gmra.mxu0 %v126
    %v554 = vpop.f32.mrf.mxu0
    %v555 = vadd.f32 0.0, %v554
    %v556 = vpop.f32.mrf.mxu0
    %v557 = vadd.f32 0.0, %v556
    %v558 = vpop.f32.mrf.mxu0
    %v559 = vadd.f32 0.0, %v558
    %v560 = vpop.f32.mrf.mxu0
    %v561 = vadd.f32 0.0, %v560
    %562 = vmatprep.mubr.bf16.mxu0 0
    %563 = vmatmul.mubr.bf16.gmra.mxu0 %v129
    %v564 = vpop.f32.mrf.mxu0
    %v565 = vadd.f32 0.0, %v564
    %v566 = vpop.f32.mrf.mxu0
    %v567 = vadd.f32 0.0, %v566
    %v568 = vpop.f32.mrf.mxu0
    %v569 = vadd.f32 0.0, %v568
    %v570 = vpop.f32.mrf.mxu0
    %v571 = vadd.f32 0.0, %v570
    %572 = vmatprep.mubr.bf16.mxu0 0
    %573 = vmatmul.mubr.bf16.gmra.mxu0 %v132
    %v574 = vpop.f32.mrf.mxu0
    %v575 = vadd.f32 0.0, %v574
    %v576 = vpop.f32.mrf.mxu0
    %v577 = vadd.f32 0.0, %v576
    %v578 = vpop.f32.mrf.mxu0
    %v579 = vadd.f32 0.0, %v578
    %v580 = vpop.f32.mrf.mxu0
    %v581 = vadd.f32 0.0, %v580
    %582 = vmatprep.mubr.bf16.mxu0 0
    %583 = vmatmul.mubr.bf16.gmra.mxu0 %v135
    %v584 = vpop.f32.mrf.mxu0
    %v585 = vadd.f32 0.0, %v584
    %v586 = vpop.f32.mrf.mxu0
    %v587 = vadd.f32 0.0, %v586
    %v588 = vpop.f32.mrf.mxu0
    %v589 = vadd.f32 0.0, %v588
    %v590 = vpop.f32.mrf.mxu0
    %v591 = vadd.f32 0.0, %v590
    %592 = vmatprep.mubr.bf16.mxu0 0
    %593 = vmatmul.mubr.bf16.gmra.mxu0 %v138
    %v594 = vpop.f32.mrf.mxu0
    %v595 = vadd.f32 0.0, %v594
    %v596 = vpop.f32.mrf.mxu0
    %v597 = vadd.f32 0.0, %v596
    %v598 = vpop.f32.mrf.mxu0
    %v599 = vadd.f32 0.0, %v598
    %v600 = vpop.f32.mrf.mxu0
    %v601 = vadd.f32 0.0, %v600
    %602 = vmatprep.mubr.bf16.mxu0 0
    %603 = vmatmul.mubr.bf16.gmra.mxu0 %v141
    %v604 = vpop.f32.mrf.mxu0
    %v605 = vadd.f32 0.0, %v604
    %v606 = vpop.f32.mrf.mxu0
    %v607 = vadd.f32 0.0, %v606
    %v608 = vpop.f32.mrf.mxu0
    %v609 = vadd.f32 0.0, %v608
    %v610 = vpop.f32.mrf.mxu0
    %v611 = vadd.f32 0.0, %v610
    %612 = vmatprep.mubr.bf16.mxu0 0
    %613 = vmatmul.mubr.bf16.gmra.mxu0 %v144
    %v614 = vpop.f32.mrf.mxu0
    %v615 = vadd.f32 0.0, %v614
    %v616 = vpop.f32.mrf.mxu0
    %v617 = vadd.f32 0.0, %v616
    %v618 = vpop.f32.mrf.mxu0
    %v619 = vadd.f32 0.0, %v618
    %v620 = vpop.f32.mrf.mxu0
    %v621 = vadd.f32 0.0, %v620
    %622 = vdwg.mxu0
    %v623 = vmax.f32 %v206, 0.0
    %v624 = vmax.f32 %v208, 0.0
    %v625 = vmax.f32 %v319, 0.0
    %v626 = vmax.f32 %v321, 0.0
    %v627 = vmax.f32 %v432, 0.0
    %v628 = vmax.f32 %v434, 0.0
    %v629 = vmax.f32 %v545, 0.0
    %v630 = vmax.f32 %v547, 0.0
    %v631 = vmax.f32 %v210, 0.0
    %v632 = vmax.f32 %v212, 0.0
    %v633 = vmax.f32 %v323, 0.0
    %v634 = vmax.f32 %v325, 0.0
    %v635 = vmax.f32 %v436, 0.0
    %v636 = vmax.f32 %v438, 0.0
    %v637 = vmax.f32 %v549, 0.0
    %v638 = vmax.f32 %v551, 0.0
    %v639 = vmax.f32 %v216, 0.0
    %v640 = vmax.f32 %v218, 0.0
    %v641 = vmax.f32 %v329, 0.0
    %v642 = vmax.f32 %v331, 0.0
    %v643 = vmax.f32 %v442, 0.0
    %v644 = vmax.f32 %v444, 0.0
    %v645 = vmax.f32 %v555, 0.0
    %v646 = vmax.f32 %v557, 0.0
    %v647 = vmax.f32 %v220, 0.0
    %v648 = vmax.f32 %v222, 0.0
    %v649 = vmax.f32 %v333, 0.0
    %v650 = vmax.f32 %v335, 0.0
    %v651 = vmax.f32 %v446, 0.0
    %v652 = vmax.f32 %v448, 0.0
    %v653 = vmax.f32 %v559, 0.0
    %v654 = vmax.f32 %v561, 0.0
    %v655 = vmax.f32 %v226, 0.0
    %v656 = vmax.f32 %v228, 0.0
    %v657 = vmax.f32 %v339, 0.0
    %v658 = vmax.f32 %v341, 0.0
    %v659 = vmax.f32 %v452, 0.0
    %v660 = vmax.f32 %v454, 0.0
    %v661 = vmax.f32 %v565, 0.0
    %v662 = vmax.f32 %v567, 0.0
    %v663 = vmax.f32 %v230, 0.0
    %v664 = vmax.f32 %v232, 0.0
    %v665 = vmax.f32 %v343, 0.0
    %v666 = vmax.f32 %v345, 0.0
    %v667 = vmax.f32 %v456, 0.0
    %v668 = vmax.f32 %v458, 0.0
    %v669 = vmax.f32 %v569, 0.0
    %v670 = vmax.f32 %v571, 0.0
    %v671 = vmax.f32 %v236, 0.0
    %v672 = vmax.f32 %v238, 0.0
    %v673 = vmax.f32 %v349, 0.0
    %v674 = vmax.f32 %v351, 0.0
    %v675 = vmax.f32 %v462, 0.0
    %v676 = vmax.f32 %v464, 0.0
    %v677 = vmax.f32 %v575, 0.0
    %v678 = vmax.f32 %v577, 0.0
    %v679 = vmax.f32 %v240, 0.0
    %v680 = vmax.f32 %v242, 0.0
    %v681 = vmax.f32 %v353, 0.0
    %v682 = vmax.f32 %v355, 0.0
    %v683 = vmax.f32 %v466, 0.0
    %v684 = vmax.f32 %v468, 0.0
    %v685 = vmax.f32 %v579, 0.0
    %v686 = vmax.f32 %v581, 0.0
    %v687 = vmax.f32 %v246, 0.0
    %v688 = vmax.f32 %v248, 0.0
    %v689 = vmax.f32 %v359, 0.0
    %v690 = vmax.f32 %v361, 0.0
    %v691 = vmax.f32 %v472, 0.0
    %v692 = vmax.f32 %v474, 0.0
    %v693 = vmax.f32 %v585, 0.0
    %v694 = vmax.f32 %v587, 0.0
    %v695 = vmax.f32 %v250, 0.0
    %v696 = vmax.f32 %v252, 0.0
    %v697 = vmax.f32 %v363, 0.0
    %v698 = vmax.f32 %v365, 0.0
    %v699 = vmax.f32 %v476, 0.0
    %v700 = vmax.f32 %v478, 0.0
    %v701 = vmax.f32 %v589, 0.0
    %v702 = vmax.f32 %v591, 0.0
    %v703 = vmax.f32 %v256, 0.0
    %v704 = vmax.f32 %v258, 0.0
    %v705 = vmax.f32 %v369, 0.0
    %v706 = vmax.f32 %v371, 0.0
    %v707 = vmax.f32 %v482, 0.0
    %v708 = vmax.f32 %v484, 0.0
    %v709 = vmax.f32 %v595, 0.0
    %v710 = vmax.f32 %v597, 0.0
    %v711 = vmax.f32 %v260, 0.0
    %v712 = vmax.f32 %v262, 0.0
    %v713 = vmax.f32 %v373, 0.0
    %v714 = vmax.f32 %v375, 0.0
    %v715 = vmax.f32 %v486, 0.0
    %v716 = vmax.f32 %v488, 0.0
    %v717 = vmax.f32 %v599, 0.0
    %v718 = vmax.f32 %v601, 0.0
    %v719 = vmax.f32 %v266, 0.0
    %v720 = vmax.f32 %v268, 0.0
    %v721 = vmax.f32 %v379, 0.0
    %v722 = vmax.f32 %v381, 0.0
    %v723 = vmax.f32 %v492, 0.0
    %v724 = vmax.f32 %v494, 0.0
    %v725 = vmax.f32 %v605, 0.0
    %v726 = vmax.f32 %v607, 0.0
    %v727 = vmax.f32 %v270, 0.0
    %v728 = vmax.f32 %v272, 0.0
    %v729 = vmax.f32 %v383, 0.0
    %v730 = vmax.f32 %v385, 0.0
    %v731 = vmax.f32 %v496, 0.0
    %v732 = vmax.f32 %v498, 0.0
    %v733 = vmax.f32 %v609, 0.0
    %v734 = vmax.f32 %v611, 0.0
    %v735 = vmax.f32 %v276, 0.0
    %v736 = vmax.f32 %v278, 0.0
    %v737 = vmax.f32 %v389, 0.0
    %v738 = vmax.f32 %v391, 0.0
    %v739 = vmax.f32 %v502, 0.0
    %v740 = vmax.f32 %v504, 0.0
    %v741 = vmax.f32 %v615, 0.0
    %v742 = vmax.f32 %v617, 0.0
    %v743 = vmax.f32 %v280, 0.0
    %v744 = vmax.f32 %v282, 0.0
    %v745 = vmax.f32 %v393, 0.0
    %v746 = vmax.f32 %v395, 0.0
    %v747 = vmax.f32 %v506, 0.0
    %v748 = vmax.f32 %v508, 0.0
    %v749 = vmax.f32 %v619, 0.0
    %v750 = vmax.f32 %v621, 0.0
    %v751 = vpack.c.bf16 %v631, %v623
    %v752 = vpack.c.bf16 %v632, %v624
    %v753 = vpack.c.bf16 %v633, %v625
    %v754 = vpack.c.bf16 %v634, %v626
    %v755 = vpack.c.bf16 %v635, %v627
    %v756 = vpack.c.bf16 %v636, %v628
    %v757 = vpack.c.bf16 %v637, %v629
    %v758 = vpack.c.bf16 %v638, %v630
    %v759 = vpack.c.bf16 %v647, %v639
    %v760 = vpack.c.bf16 %v648, %v640
    %v761 = vpack.c.bf16 %v649, %v641
    %v762 = vpack.c.bf16 %v650, %v642
    %v763 = vpack.c.bf16 %v651, %v643
    %v764 = vpack.c.bf16 %v652, %v644
    %v765 = vpack.c.bf16 %v653, %v645
    %v766 = vpack.c.bf16 %v654, %v646
    %v767 = vpack.c.bf16 %v663, %v655
    %v768 = vpack.c.bf16 %v664, %v656
    %v769 = vpack.c.bf16 %v665, %v657
    %v770 = vpack.c.bf16 %v666, %v658
    %v771 = vpack.c.bf16 %v667, %v659
    %v772 = vpack.c.bf16 %v668, %v660
    %v773 = vpack.c.bf16 %v669, %v661
    %v774 = vpack.c.bf16 %v670, %v662
    %v775 = vpack.c.bf16 %v679, %v671
    %v776 = vpack.c.bf16 %v680, %v672
    %v777 = vpack.c.bf16 %v681, %v673
    %v778 = vpack.c.bf16 %v682, %v674
    %v779 = vpack.c.bf16 %v683, %v675
    %v780 = vpack.c.bf16 %v684, %v676
    %v781 = vpack.c.bf16 %v685, %v677
    %v782 = vpack.c.bf16 %v686, %v678
    %v783 = vpack.c.bf16 %v695, %v687
    %v784 = vpack.c.bf16 %v696, %v688
    %v785 = vpack.c.bf16 %v697, %v689
    %v786 = vpack.c.bf16 %v698, %v690
    %v787 = vpack.c.bf16 %v699, %v691
    %v788 = vpack.c.bf16 %v700, %v692
    %v789 = vpack.c.bf16 %v701, %v693
    %v790 = vpack.c.bf16 %v702, %v694
    %v791 = vpack.c.bf16 %v711, %v703
    %v792 = vpack.c.bf16 %v712, %v704
    %v793 = vpack.c.bf16 %v713, %v705
    %v794 = vpack.c.bf16 %v714, %v706
    %v795 = vpack.c.bf16 %v715, %v707
    %v796 = vpack.c.bf16 %v716, %v708
    %v797 = vpack.c.bf16 %v717, %v709
    %v798 = vpack.c.bf16 %v718, %v710
    %v799 = vpack.c.bf16 %v727, %v719
    %v800 = vpack.c.bf16 %v728, %v720
    %v801 = vpack.c.bf16 %v729, %v721
    %v802 = vpack.c.bf16 %v730, %v722
    %v803 = vpack.c.bf16 %v731, %v723
    %v804 = vpack.c.bf16 %v732, %v724
    %v805 = vpack.c.bf16 %v733, %v725
    %v806 = vpack.c.bf16 %v734, %v726
    %v807 = vpack.c.bf16 %v743, %v735
    %v808 = vpack.c.bf16 %v744, %v736
    %v809 = vpack.c.bf16 %v745, %v737
    %v810 = vpack.c.bf16 %v746, %v738
    %v811 = vpack.c.bf16 %v747, %v739
    %v812 = vpack.c.bf16 %v748, %v740
    %v813 = vpack.c.bf16 %v749, %v741
    %v814 = vpack.c.bf16 %v750, %v742
    %v815 = vld [vmem:[%s0 + $0x4] sm:$0xf]
    %v816 = vpack.c.bf16 %v815, %v815
    %817 = vxpose.xlu0.c.b16.start [1/8] %v816, 128
    %818 = vxpose.xlu0.c.b16.cont [2/8] 0, 128
    %819 = vxpose.xlu0.c.b16.cont [3/8] 0, 128
    %820 = vxpose.xlu0.c.b16.cont [4/8] 0, 128
    %821 = vxpose.xlu0.c.b16.cont [5/8] 0, 128
    %822 = vxpose.xlu0.c.b16.cont [6/8] 0, 128
    %823 = vxpose.xlu0.c.b16.cont [7/8] 0, 128
    %824 = vxpose.xlu0.c.b16.end [8/8] 0, 128
    %v825 = vpop.trf.xlu0
    %v826 = vpop.trf.xlu0
    %v827 = vpop.trf.xlu0
    %v828 = vpop.trf.xlu0
    %v829 = vpop.trf.xlu0
    %v830 = vpop.trf.xlu0
    %v831 = vpop.trf.xlu0
    %v832 = vpop.trf.xlu0
    %v834 = vsel %vm121, %v825, 0
    %v837 = vsel %vm121, %v826, 0
    %v840 = vsel %vm121, %v827, 0
    %v843 = vsel %vm121, %v828, 0
    %v846 = vsel %vm121, %v829, 0
    %v849 = vsel %vm121, %v830, 0
    %v852 = vsel %vm121, %v831, 0
    %v855 = vsel %vm121, %v832, 0
    %857 = vmatprep.subr.bf16.mxu0 0
    %858 = vmatpush1.bf16.msra.mxu0 0
    %859 = vmatprep.subr.bf16.mxu0 0
    %860 = vmatpush1.bf16.msra.mxu0 0
    %861 = vmatprep.subr.bf16.mxu0 0
    %862 = vmatpush1.bf16.msra.mxu0 0
    %863 = vmatprep.subr.bf16.mxu0 0
    %864 = vmatpush1.bf16.msra.mxu0 0
    %865 = vmatprep.subr.bf16.mxu0 0
    %866 = vmatpush1.bf16.msra.mxu0 0
    %867 = vmatprep.subr.bf16.mxu0 0
    %868 = vmatpush1.bf16.msra.mxu0 0
    %869 = vmatprep.subr.bf16.mxu0 0
    %870 = vmatpush1.bf16.msra.mxu0 0
    %871 = vmatprep.subr.bf16.mxu0 %v151
    %872 = vmatpush1.bf16.msra.mxu0 %v148
    %873 = vmatprep.subr.bf16.mxu0 0
    %874 = vmatpush2.bf16.msra.mxu0 0
    %875 = vmatprep.subr.bf16.mxu0 0
    %876 = vmatpush2.bf16.msra.mxu0 0
    %877 = vmatprep.subr.bf16.mxu0 0
    %878 = vmatpush2.bf16.msra.mxu0 0
    %879 = vmatprep.subr.bf16.mxu0 0
    %880 = vmatpush2.bf16.msra.mxu0 0
    %881 = vmatprep.subr.bf16.mxu0 0
    %882 = vmatpush2.bf16.msra.mxu0 0
    %883 = vmatprep.subr.bf16.mxu0 0
    %884 = vmatpush2.bf16.msra.mxu0 0
    %885 = vmatprep.subr.bf16.mxu0 0
    %886 = vmatpush2.bf16.msra.mxu0 0
    %887 = vmatprep.subr.bf16.mxu0 0
    %888 = vmatpush2.bf16.msra.mxu0 0
    %889 = vmatprep.mubr.bf16.mxu0 0
    %890 = vmatmul.mubr.bf16.gmra.mxu0 %v834
    %v891 = vpop.f32.mrf.mxu0
    %v892 = vadd.f32 0.0, %v891
    %v893 = vpop.f32.mrf.mxu0
    %v894 = vadd.f32 0.0, %v893
    %v895 = vpop.f32.mrf.mxu0
    %v896 = vadd.f32 0.0, %v895
    %v897 = vpop.f32.mrf.mxu0
    %v898 = vadd.f32 0.0, %v897
    %899 = vmatprep.mubr.bf16.mxu0 0
    %900 = vmatmul.mubr.bf16.gmra.mxu0 %v837
    %v901 = vpop.f32.mrf.mxu0
    %v902 = vadd.f32 0.0, %v901
    %v903 = vpop.f32.mrf.mxu0
    %v904 = vadd.f32 0.0, %v903
    %v905 = vpop.f32.mrf.mxu0
    %v906 = vadd.f32 0.0, %v905
    %v907 = vpop.f32.mrf.mxu0
    %v908 = vadd.f32 0.0, %v907
    %909 = vmatprep.mubr.bf16.mxu0 0
    %910 = vmatmul.mubr.bf16.gmra.mxu0 %v840
    %v911 = vpop.f32.mrf.mxu0
    %v912 = vadd.f32 0.0, %v911
    %v913 = vpop.f32.mrf.mxu0
    %v914 = vadd.f32 0.0, %v913
    %v915 = vpop.f32.mrf.mxu0
    %v916 = vadd.f32 0.0, %v915
    %v917 = vpop.f32.mrf.mxu0
    %v918 = vadd.f32 0.0, %v917
    %919 = vmatprep.mubr.bf16.mxu0 0
    %920 = vmatmul.mubr.bf16.gmra.mxu0 %v843
    %v921 = vpop.f32.mrf.mxu0
    %v922 = vadd.f32 0.0, %v921
    %v923 = vpop.f32.mrf.mxu0
    %v924 = vadd.f32 0.0, %v923
    %v925 = vpop.f32.mrf.mxu0
    %v926 = vadd.f32 0.0, %v925
    %v927 = vpop.f32.mrf.mxu0
    %v928 = vadd.f32 0.0, %v927
    %929 = vmatprep.mubr.bf16.mxu0 0
    %930 = vmatmul.mubr.bf16.gmra.mxu0 %v846
    %v931 = vpop.f32.mrf.mxu0
    %v932 = vadd.f32 0.0, %v931
    %v933 = vpop.f32.mrf.mxu0
    %v934 = vadd.f32 0.0, %v933
    %v935 = vpop.f32.mrf.mxu0
    %v936 = vadd.f32 0.0, %v935
    %v937 = vpop.f32.mrf.mxu0
    %v938 = vadd.f32 0.0, %v937
    %939 = vmatprep.mubr.bf16.mxu0 0
    %940 = vmatmul.mubr.bf16.gmra.mxu0 %v849
    %v941 = vpop.f32.mrf.mxu0
    %v942 = vadd.f32 0.0, %v941
    %v943 = vpop.f32.mrf.mxu0
    %v944 = vadd.f32 0.0, %v943
    %v945 = vpop.f32.mrf.mxu0
    %v946 = vadd.f32 0.0, %v945
    %v947 = vpop.f32.mrf.mxu0
    %v948 = vadd.f32 0.0, %v947
    %949 = vmatprep.mubr.bf16.mxu0 0
    %950 = vmatmul.mubr.bf16.gmra.mxu0 %v852
    %v951 = vpop.f32.mrf.mxu0
    %v952 = vadd.f32 0.0, %v951
    %v953 = vpop.f32.mrf.mxu0
    %v954 = vadd.f32 0.0, %v953
    %v955 = vpop.f32.mrf.mxu0
    %v956 = vadd.f32 0.0, %v955
    %v957 = vpop.f32.mrf.mxu0
    %v958 = vadd.f32 0.0, %v957
    %959 = vmatprep.mubr.bf16.mxu0 0
    %960 = vmatmul.mubr.bf16.gmra.mxu0 %v855
    %v961 = vpop.f32.mrf.mxu0
    %v962 = vadd.f32 0.0, %v961
    %v963 = vpop.f32.mrf.mxu0
    %v964 = vadd.f32 0.0, %v963
    %v965 = vpop.f32.mrf.mxu0
    %v966 = vadd.f32 0.0, %v965
    %v967 = vpop.f32.mrf.mxu0
    %v968 = vadd.f32 0.0, %v967
    %969 = vdwg.mxu0
    %970 = vmatprep.subr.bf16.mxu0 0
    %971 = vmatpush1.bf16.msra.mxu0 0
    %972 = vmatprep.subr.bf16.mxu0 0
    %973 = vmatpush1.bf16.msra.mxu0 0
    %974 = vmatprep.subr.bf16.mxu0 0
    %975 = vmatpush1.bf16.msra.mxu0 0
    %976 = vmatprep.subr.bf16.mxu0 0
    %977 = vmatpush1.bf16.msra.mxu0 0
    %978 = vmatprep.subr.bf16.mxu0 0
    %979 = vmatpush1.bf16.msra.mxu0 0
    %980 = vmatprep.subr.bf16.mxu0 0
    %981 = vmatpush1.bf16.msra.mxu0 0
    %982 = vmatprep.subr.bf16.mxu0 0
    %983 = vmatpush1.bf16.msra.mxu0 0
    %984 = vmatprep.subr.bf16.mxu0 %v157
    %985 = vmatpush1.bf16.msra.mxu0 %v154
    %986 = vmatprep.subr.bf16.mxu0 0
    %987 = vmatpush2.bf16.msra.mxu0 0
    %988 = vmatprep.subr.bf16.mxu0 0
    %989 = vmatpush2.bf16.msra.mxu0 0
    %990 = vmatprep.subr.bf16.mxu0 0
    %991 = vmatpush2.bf16.msra.mxu0 0
    %992 = vmatprep.subr.bf16.mxu0 0
    %993 = vmatpush2.bf16.msra.mxu0 0
    %994 = vmatprep.subr.bf16.mxu0 0
    %995 = vmatpush2.bf16.msra.mxu0 0
    %996 = vmatprep.subr.bf16.mxu0 0
    %997 = vmatpush2.bf16.msra.mxu0 0
    %998 = vmatprep.subr.bf16.mxu0 0
    %999 = vmatpush2.bf16.msra.mxu0 0
    %1000 = vmatprep.subr.bf16.mxu0 0
    %1001 = vmatpush2.bf16.msra.mxu0 0
    %1002 = vmatprep.mubr.bf16.mxu0 0
    %1003 = vmatmul.mubr.bf16.gmra.mxu0 %v834
    %v1004 = vpop.f32.mrf.mxu0
    %v1005 = vadd.f32 0.0, %v1004
    %v1006 = vpop.f32.mrf.mxu0
    %v1007 = vadd.f32 0.0, %v1006
    %v1008 = vpop.f32.mrf.mxu0
    %v1009 = vadd.f32 0.0, %v1008
    %v1010 = vpop.f32.mrf.mxu0
    %v1011 = vadd.f32 0.0, %v1010
    %1012 = vmatprep.mubr.bf16.mxu0 0
    %1013 = vmatmul.mubr.bf16.gmra.mxu0 %v837
    %v1014 = vpop.f32.mrf.mxu0
    %v1015 = vadd.f32 0.0, %v1014
    %v1016 = vpop.f32.mrf.mxu0
    %v1017 = vadd.f32 0.0, %v1016
    %v1018 = vpop.f32.mrf.mxu0
    %v1019 = vadd.f32 0.0, %v1018
    %v1020 = vpop.f32.mrf.mxu0
    %v1021 = vadd.f32 0.0, %v1020
    %1022 = vmatprep.mubr.bf16.mxu0 0
    %1023 = vmatmul.mubr.bf16.gmra.mxu0 %v840
    %v1024 = vpop.f32.mrf.mxu0
    %v1025 = vadd.f32 0.0, %v1024
    %v1026 = vpop.f32.mrf.mxu0
    %v1027 = vadd.f32 0.0, %v1026
    %v1028 = vpop.f32.mrf.mxu0
    %v1029 = vadd.f32 0.0, %v1028
    %v1030 = vpop.f32.mrf.mxu0
    %v1031 = vadd.f32 0.0, %v1030
    %1032 = vmatprep.mubr.bf16.mxu0 0
    %1033 = vmatmul.mubr.bf16.gmra.mxu0 %v843
    %v1034 = vpop.f32.mrf.mxu0
    %v1035 = vadd.f32 0.0, %v1034
    %v1036 = vpop.f32.mrf.mxu0
    %v1037 = vadd.f32 0.0, %v1036
    %v1038 = vpop.f32.mrf.mxu0
    %v1039 = vadd.f32 0.0, %v1038
    %v1040 = vpop.f32.mrf.mxu0
    %v1041 = vadd.f32 0.0, %v1040
    %1042 = vmatprep.mubr.bf16.mxu0 0
    %1043 = vmatmul.mubr.bf16.gmra.mxu0 %v846
    %v1044 = vpop.f32.mrf.mxu0
    %v1045 = vadd.f32 0.0, %v1044
    %v1046 = vpop.f32.mrf.mxu0
    %v1047 = vadd.f32 0.0, %v1046
    %v1048 = vpop.f32.mrf.mxu0
    %v1049 = vadd.f32 0.0, %v1048
    %v1050 = vpop.f32.mrf.mxu0
    %v1051 = vadd.f32 0.0, %v1050
    %1052 = vmatprep.mubr.bf16.mxu0 0
    %1053 = vmatmul.mubr.bf16.gmra.mxu0 %v849
    %v1054 = vpop.f32.mrf.mxu0
    %v1055 = vadd.f32 0.0, %v1054
    %v1056 = vpop.f32.mrf.mxu0
    %v1057 = vadd.f32 0.0, %v1056
    %v1058 = vpop.f32.mrf.mxu0
    %v1059 = vadd.f32 0.0, %v1058
    %v1060 = vpop.f32.mrf.mxu0
    %v1061 = vadd.f32 0.0, %v1060
    %1062 = vmatprep.mubr.bf16.mxu0 0
    %1063 = vmatmul.mubr.bf16.gmra.mxu0 %v852
    %v1064 = vpop.f32.mrf.mxu0
    %v1065 = vadd.f32 0.0, %v1064
    %v1066 = vpop.f32.mrf.mxu0
    %v1067 = vadd.f32 0.0, %v1066
    %v1068 = vpop.f32.mrf.mxu0
    %v1069 = vadd.f32 0.0, %v1068
    %v1070 = vpop.f32.mrf.mxu0
    %v1071 = vadd.f32 0.0, %v1070
    %1072 = vmatprep.mubr.bf16.mxu0 0
    %1073 = vmatmul.mubr.bf16.gmra.mxu0 %v855
    %v1074 = vpop.f32.mrf.mxu0
    %v1075 = vadd.f32 0.0, %v1074
    %v1076 = vpop.f32.mrf.mxu0
    %v1077 = vadd.f32 0.0, %v1076
    %v1078 = vpop.f32.mrf.mxu0
    %v1079 = vadd.f32 0.0, %v1078
    %v1080 = vpop.f32.mrf.mxu0
    %v1081 = vadd.f32 0.0, %v1080
    %1082 = vdwg.mxu0
    %1083 = vmatprep.subr.bf16.mxu0 0
    %1084 = vmatpush1.bf16.msra.mxu0 0
    %1085 = vmatprep.subr.bf16.mxu0 0
    %1086 = vmatpush1.bf16.msra.mxu0 0
    %1087 = vmatprep.subr.bf16.mxu0 0
    %1088 = vmatpush1.bf16.msra.mxu0 0
    %1089 = vmatprep.subr.bf16.mxu0 0
    %1090 = vmatpush1.bf16.msra.mxu0 0
    %1091 = vmatprep.subr.bf16.mxu0 0
    %1092 = vmatpush1.bf16.msra.mxu0 0
    %1093 = vmatprep.subr.bf16.mxu0 0
    %1094 = vmatpush1.bf16.msra.mxu0 0
    %1095 = vmatprep.subr.bf16.mxu0 0
    %1096 = vmatpush1.bf16.msra.mxu0 0
    %1097 = vmatprep.subr.bf16.mxu0 %v163
    %1098 = vmatpush1.bf16.msra.mxu0 %v160
    %1099 = vmatprep.subr.bf16.mxu0 0
    %1100 = vmatpush2.bf16.msra.mxu0 0
    %1101 = vmatprep.subr.bf16.mxu0 0
    %1102 = vmatpush2.bf16.msra.mxu0 0
    %1103 = vmatprep.subr.bf16.mxu0 0
    %1104 = vmatpush2.bf16.msra.mxu0 0
    %1105 = vmatprep.subr.bf16.mxu0 0
    %1106 = vmatpush2.bf16.msra.mxu0 0
    %1107 = vmatprep.subr.bf16.mxu0 0
    %1108 = vmatpush2.bf16.msra.mxu0 0
    %1109 = vmatprep.subr.bf16.mxu0 0
    %1110 = vmatpush2.bf16.msra.mxu0 0
    %1111 = vmatprep.subr.bf16.mxu0 0
    %1112 = vmatpush2.bf16.msra.mxu0 0
    %1113 = vmatprep.subr.bf16.mxu0 0
    %1114 = vmatpush2.bf16.msra.mxu0 0
    %1115 = vmatprep.mubr.bf16.mxu0 0
    %1116 = vmatmul.mubr.bf16.gmra.mxu0 %v834
    %v1117 = vpop.f32.mrf.mxu0
    %v1118 = vadd.f32 0.0, %v1117
    %v1119 = vpop.f32.mrf.mxu0
    %v1120 = vadd.f32 0.0, %v1119
    %v1121 = vpop.f32.mrf.mxu0
    %v1122 = vadd.f32 0.0, %v1121
    %v1123 = vpop.f32.mrf.mxu0
    %v1124 = vadd.f32 0.0, %v1123
    %1125 = vmatprep.mubr.bf16.mxu0 0
    %1126 = vmatmul.mubr.bf16.gmra.mxu0 %v837
    %v1127 = vpop.f32.mrf.mxu0
    %v1128 = vadd.f32 0.0, %v1127
    %v1129 = vpop.f32.mrf.mxu0
    %v1130 = vadd.f32 0.0, %v1129
    %v1131 = vpop.f32.mrf.mxu0
    %v1132 = vadd.f32 0.0, %v1131
    %v1133 = vpop.f32.mrf.mxu0
    %v1134 = vadd.f32 0.0, %v1133
    %1135 = vmatprep.mubr.bf16.mxu0 0
    %1136 = vmatmul.mubr.bf16.gmra.mxu0 %v840
    %v1137 = vpop.f32.mrf.mxu0
    %v1138 = vadd.f32 0.0, %v1137
    %v1139 = vpop.f32.mrf.mxu0
    %v1140 = vadd.f32 0.0, %v1139
    %v1141 = vpop.f32.mrf.mxu0
    %v1142 = vadd.f32 0.0, %v1141
    %v1143 = vpop.f32.mrf.mxu0
    %v1144 = vadd.f32 0.0, %v1143
    %1145 = vmatprep.mubr.bf16.mxu0 0
    %1146 = vmatmul.mubr.bf16.gmra.mxu0 %v843
    %v1147 = vpop.f32.mrf.mxu0
    %v1148 = vadd.f32 0.0, %v1147
    %v1149 = vpop.f32.mrf.mxu0
    %v1150 = vadd.f32 0.0, %v1149
    %v1151 = vpop.f32.mrf.mxu0
    %v1152 = vadd.f32 0.0, %v1151
    %v1153 = vpop.f32.mrf.mxu0
    %v1154 = vadd.f32 0.0, %v1153
    %1155 = vmatprep.mubr.bf16.mxu0 0
    %1156 = vmatmul.mubr.bf16.gmra.mxu0 %v846
    %v1157 = vpop.f32.mrf.mxu0
    %v1158 = vadd.f32 0.0, %v1157
    %v1159 = vpop.f32.mrf.mxu0
    %v1160 = vadd.f32 0.0, %v1159
    %v1161 = vpop.f32.mrf.mxu0
    %v1162 = vadd.f32 0.0, %v1161
    %v1163 = vpop.f32.mrf.mxu0
    %v1164 = vadd.f32 0.0, %v1163
    %1165 = vmatprep.mubr.bf16.mxu0 0
    %1166 = vmatmul.mubr.bf16.gmra.mxu0 %v849
    %v1167 = vpop.f32.mrf.mxu0
    %v1168 = vadd.f32 0.0, %v1167
    %v1169 = vpop.f32.mrf.mxu0
    %v1170 = vadd.f32 0.0, %v1169
    %v1171 = vpop.f32.mrf.mxu0
    %v1172 = vadd.f32 0.0, %v1171
    %v1173 = vpop.f32.mrf.mxu0
    %v1174 = vadd.f32 0.0, %v1173
    %1175 = vmatprep.mubr.bf16.mxu0 0
    %1176 = vmatmul.mubr.bf16.gmra.mxu0 %v852
    %v1177 = vpop.f32.mrf.mxu0
    %v1178 = vadd.f32 0.0, %v1177
    %v1179 = vpop.f32.mrf.mxu0
    %v1180 = vadd.f32 0.0, %v1179
    %v1181 = vpop.f32.mrf.mxu0
    %v1182 = vadd.f32 0.0, %v1181
    %v1183 = vpop.f32.mrf.mxu0
    %v1184 = vadd.f32 0.0, %v1183
    %1185 = vmatprep.mubr.bf16.mxu0 0
    %1186 = vmatmul.mubr.bf16.gmra.mxu0 %v855
    %v1187 = vpop.f32.mrf.mxu0
    %v1188 = vadd.f32 0.0, %v1187
    %v1189 = vpop.f32.mrf.mxu0
    %v1190 = vadd.f32 0.0, %v1189
    %v1191 = vpop.f32.mrf.mxu0
    %v1192 = vadd.f32 0.0, %v1191
    %v1193 = vpop.f32.mrf.mxu0
    %v1194 = vadd.f32 0.0, %v1193
    %1195 = vdwg.mxu0
    %1196 = vmatprep.subr.bf16.mxu0 0
    %1197 = vmatpush1.bf16.msra.mxu0 0
    %1198 = vmatprep.subr.bf16.mxu0 0
    %1199 = vmatpush1.bf16.msra.mxu0 0
    %1200 = vmatprep.subr.bf16.mxu0 0
    %1201 = vmatpush1.bf16.msra.mxu0 0
    %1202 = vmatprep.subr.bf16.mxu0 0
    %1203 = vmatpush1.bf16.msra.mxu0 0
    %1204 = vmatprep.subr.bf16.mxu0 0
    %1205 = vmatpush1.bf16.msra.mxu0 0
    %1206 = vmatprep.subr.bf16.mxu0 0
    %1207 = vmatpush1.bf16.msra.mxu0 0
    %1208 = vmatprep.subr.bf16.mxu0 0
    %1209 = vmatpush1.bf16.msra.mxu0 0
    %1210 = vmatprep.subr.bf16.mxu0 %v169
    %1211 = vmatpush1.bf16.msra.mxu0 %v166
    %1212 = vmatprep.subr.bf16.mxu0 0
    %1213 = vmatpush2.bf16.msra.mxu0 0
    %1214 = vmatprep.subr.bf16.mxu0 0
    %1215 = vmatpush2.bf16.msra.mxu0 0
    %1216 = vmatprep.subr.bf16.mxu0 0
    %1217 = vmatpush2.bf16.msra.mxu0 0
    %1218 = vmatprep.subr.bf16.mxu0 0
    %1219 = vmatpush2.bf16.msra.mxu0 0
    %1220 = vmatprep.subr.bf16.mxu0 0
    %1221 = vmatpush2.bf16.msra.mxu0 0
    %1222 = vmatprep.subr.bf16.mxu0 0
    %1223 = vmatpush2.bf16.msra.mxu0 0
    %1224 = vmatprep.subr.bf16.mxu0 0
    %1225 = vmatpush2.bf16.msra.mxu0 0
    %1226 = vmatprep.subr.bf16.mxu0 0
    %1227 = vmatpush2.bf16.msra.mxu0 0
    %1228 = vmatprep.mubr.bf16.mxu0 0
    %1229 = vmatmul.mubr.bf16.gmra.mxu0 %v834
    %v1230 = vpop.f32.mrf.mxu0
    %v1231 = vadd.f32 0.0, %v1230
    %v1232 = vpop.f32.mrf.mxu0
    %v1233 = vadd.f32 0.0, %v1232
    %v1234 = vpop.f32.mrf.mxu0
    %v1235 = vadd.f32 0.0, %v1234
    %v1236 = vpop.f32.mrf.mxu0
    %v1237 = vadd.f32 0.0, %v1236
    %1238 = vmatprep.mubr.bf16.mxu0 0
    %1239 = vmatmul.mubr.bf16.gmra.mxu0 %v837
    %v1240 = vpop.f32.mrf.mxu0
    %v1241 = vadd.f32 0.0, %v1240
    %v1242 = vpop.f32.mrf.mxu0
    %v1243 = vadd.f32 0.0, %v1242
    %v1244 = vpop.f32.mrf.mxu0
    %v1245 = vadd.f32 0.0, %v1244
    %v1246 = vpop.f32.mrf.mxu0
    %v1247 = vadd.f32 0.0, %v1246
    %1248 = vmatprep.mubr.bf16.mxu0 0
    %1249 = vmatmul.mubr.bf16.gmra.mxu0 %v840
    %v1250 = vpop.f32.mrf.mxu0
    %v1251 = vadd.f32 0.0, %v1250
    %v1252 = vpop.f32.mrf.mxu0
    %v1253 = vadd.f32 0.0, %v1252
    %v1254 = vpop.f32.mrf.mxu0
    %v1255 = vadd.f32 0.0, %v1254
    %v1256 = vpop.f32.mrf.mxu0
    %v1257 = vadd.f32 0.0, %v1256
    %1258 = vmatprep.mubr.bf16.mxu0 0
    %1259 = vmatmul.mubr.bf16.gmra.mxu0 %v843
    %v1260 = vpop.f32.mrf.mxu0
    %v1261 = vadd.f32 0.0, %v1260
    %v1262 = vpop.f32.mrf.mxu0
    %v1263 = vadd.f32 0.0, %v1262
    %v1264 = vpop.f32.mrf.mxu0
    %v1265 = vadd.f32 0.0, %v1264
    %v1266 = vpop.f32.mrf.mxu0
    %v1267 = vadd.f32 0.0, %v1266
    %1268 = vmatprep.mubr.bf16.mxu0 0
    %1269 = vmatmul.mubr.bf16.gmra.mxu0 %v846
    %v1270 = vpop.f32.mrf.mxu0
    %v1271 = vadd.f32 0.0, %v1270
    %v1272 = vpop.f32.mrf.mxu0
    %v1273 = vadd.f32 0.0, %v1272
    %v1274 = vpop.f32.mrf.mxu0
    %v1275 = vadd.f32 0.0, %v1274
    %v1276 = vpop.f32.mrf.mxu0
    %v1277 = vadd.f32 0.0, %v1276
    %1278 = vmatprep.mubr.bf16.mxu0 0
    %1279 = vmatmul.mubr.bf16.gmra.mxu0 %v849
    %v1280 = vpop.f32.mrf.mxu0
    %v1281 = vadd.f32 0.0, %v1280
    %v1282 = vpop.f32.mrf.mxu0
    %v1283 = vadd.f32 0.0, %v1282
    %v1284 = vpop.f32.mrf.mxu0
    %v1285 = vadd.f32 0.0, %v1284
    %v1286 = vpop.f32.mrf.mxu0
    %v1287 = vadd.f32 0.0, %v1286
    %1288 = vmatprep.mubr.bf16.mxu0 0
    %1289 = vmatmul.mubr.bf16.gmra.mxu0 %v852
    %v1290 = vpop.f32.mrf.mxu0
    %v1291 = vadd.f32 0.0, %v1290
    %v1292 = vpop.f32.mrf.mxu0
    %v1293 = vadd.f32 0.0, %v1292
    %v1294 = vpop.f32.mrf.mxu0
    %v1295 = vadd.f32 0.0, %v1294
    %v1296 = vpop.f32.mrf.mxu0
    %v1297 = vadd.f32 0.0, %v1296
    %1298 = vmatprep.mubr.bf16.mxu0 0
    %1299 = vmatmul.mubr.bf16.gmra.mxu0 %v855
    %v1300 = vpop.f32.mrf.mxu0
    %v1301 = vadd.f32 0.0, %v1300
    %v1302 = vpop.f32.mrf.mxu0
    %v1303 = vadd.f32 0.0, %v1302
    %v1304 = vpop.f32.mrf.mxu0
    %v1305 = vadd.f32 0.0, %v1304
    %v1306 = vpop.f32.mrf.mxu0
    %v1307 = vadd.f32 0.0, %v1306
    %1308 = vdwg.mxu0
    %v1309 = vmax.f32 %v892, 0.0
    %v1310 = vmax.f32 %v894, 0.0
    %v1311 = vmax.f32 %v1005, 0.0
    %v1312 = vmax.f32 %v1007, 0.0
    %v1313 = vmax.f32 %v1118, 0.0
    %v1314 = vmax.f32 %v1120, 0.0
    %v1315 = vmax.f32 %v1231, 0.0
    %v1316 = vmax.f32 %v1233, 0.0
    %v1317 = vmax.f32 %v896, 0.0
    %v1318 = vmax.f32 %v898, 0.0
    %v1319 = vmax.f32 %v1009, 0.0
    %v1320 = vmax.f32 %v1011, 0.0
    %v1321 = vmax.f32 %v1122, 0.0
    %v1322 = vmax.f32 %v1124, 0.0
    %v1323 = vmax.f32 %v1235, 0.0
    %v1324 = vmax.f32 %v1237, 0.0
    %v1325 = vmax.f32 %v902, 0.0
    %v1326 = vmax.f32 %v904, 0.0
    %v1327 = vmax.f32 %v1015, 0.0
    %v1328 = vmax.f32 %v1017, 0.0
    %v1329 = vmax.f32 %v1128, 0.0
    %v1330 = vmax.f32 %v1130, 0.0
    %v1331 = vmax.f32 %v1241, 0.0
    %v1332 = vmax.f32 %v1243, 0.0
    %v1333 = vmax.f32 %v906, 0.0
    %v1334 = vmax.f32 %v908, 0.0
    %v1335 = vmax.f32 %v1019, 0.0
    %v1336 = vmax.f32 %v1021, 0.0
    %v1337 = vmax.f32 %v1132, 0.0
    %v1338 = vmax.f32 %v1134, 0.0
    %v1339 = vmax.f32 %v1245, 0.0
    %v1340 = vmax.f32 %v1247, 0.0
    %v1341 = vmax.f32 %v912, 0.0
    %v1342 = vmax.f32 %v914, 0.0
    %v1343 = vmax.f32 %v1025, 0.0
    %v1344 = vmax.f32 %v1027, 0.0
    %v1345 = vmax.f32 %v1138, 0.0
    %v1346 = vmax.f32 %v1140, 0.0
    %v1347 = vmax.f32 %v1251, 0.0
    %v1348 = vmax.f32 %v1253, 0.0
    %v1349 = vmax.f32 %v916, 0.0
    %v1350 = vmax.f32 %v918, 0.0
    %v1351 = vmax.f32 %v1029, 0.0
    %v1352 = vmax.f32 %v1031, 0.0
    %v1353 = vmax.f32 %v1142, 0.0
    %v1354 = vmax.f32 %v1144, 0.0
    %v1355 = vmax.f32 %v1255, 0.0
    %v1356 = vmax.f32 %v1257, 0.0
    %v1357 = vmax.f32 %v922, 0.0
    %v1358 = vmax.f32 %v924, 0.0
    %v1359 = vmax.f32 %v1035, 0.0
    %v1360 = vmax.f32 %v1037, 0.0
    %v1361 = vmax.f32 %v1148, 0.0
    %v1362 = vmax.f32 %v1150, 0.0
    %v1363 = vmax.f32 %v1261, 0.0
    %v1364 = vmax.f32 %v1263, 0.0
    %v1365 = vmax.f32 %v926, 0.0
    %v1366 = vmax.f32 %v928, 0.0
    %v1367 = vmax.f32 %v1039, 0.0
    %v1368 = vmax.f32 %v1041, 0.0
    %v1369 = vmax.f32 %v1152, 0.0
    %v1370 = vmax.f32 %v1154, 0.0
    %v1371 = vmax.f32 %v1265, 0.0
    %v1372 = vmax.f32 %v1267, 0.0
    %v1373 = vmax.f32 %v932, 0.0
    %v1374 = vmax.f32 %v934, 0.0
    %v1375 = vmax.f32 %v1045, 0.0
    %v1376 = vmax.f32 %v1047, 0.0
    %v1377 = vmax.f32 %v1158, 0.0
    %v1378 = vmax.f32 %v1160, 0.0
    %v1379 = vmax.f32 %v1271, 0.0
    %v1380 = vmax.f32 %v1273, 0.0
    %v1381 = vmax.f32 %v936, 0.0
    %v1382 = vmax.f32 %v938, 0.0
    %v1383 = vmax.f32 %v1049, 0.0
    %v1384 = vmax.f32 %v1051, 0.0
    %v1385 = vmax.f32 %v1162, 0.0
    %v1386 = vmax.f32 %v1164, 0.0
    %v1387 = vmax.f32 %v1275, 0.0
    %v1388 = vmax.f32 %v1277, 0.0
    %v1389 = vmax.f32 %v942, 0.0
    %v1390 = vmax.f32 %v944, 0.0
    %v1391 = vmax.f32 %v1055, 0.0
    %v1392 = vmax.f32 %v1057, 0.0
    %v1393 = vmax.f32 %v1168, 0.0
    %v1394 = vmax.f32 %v1170, 0.0
    %v1395 = vmax.f32 %v1281, 0.0
    %v1396 = vmax.f32 %v1283, 0.0
    %v1397 = vmax.f32 %v946, 0.0
    %v1398 = vmax.f32 %v948, 0.0
    %v1399 = vmax.f32 %v1059, 0.0
    %v1400 = vmax.f32 %v1061, 0.0
    %v1401 = vmax.f32 %v1172, 0.0
    %v1402 = vmax.f32 %v1174, 0.0
    %v1403 = vmax.f32 %v1285, 0.0
    %v1404 = vmax.f32 %v1287, 0.0
    %v1405 = vmax.f32 %v952, 0.0
    %v1406 = vmax.f32 %v954, 0.0
    %v1407 = vmax.f32 %v1065, 0.0
    %v1408 = vmax.f32 %v1067, 0.0
    %v1409 = vmax.f32 %v1178, 0.0
    %v1410 = vmax.f32 %v1180, 0.0
    %v1411 = vmax.f32 %v1291, 0.0
    %v1412 = vmax.f32 %v1293, 0.0
    %v1413 = vmax.f32 %v956, 0.0
    %v1414 = vmax.f32 %v958, 0.0
    %v1415 = vmax.f32 %v1069, 0.0
    %v1416 = vmax.f32 %v1071, 0.0
    %v1417 = vmax.f32 %v1182, 0.0
    %v1418 = vmax.f32 %v1184, 0.0
    %v1419 = vmax.f32 %v1295, 0.0
    %v1420 = vmax.f32 %v1297, 0.0
    %v1421 = vmax.f32 %v962, 0.0
    %v1422 = vmax.f32 %v964, 0.0
    %v1423 = vmax.f32 %v1075, 0.0
    %v1424 = vmax.f32 %v1077, 0.0
    %v1425 = vmax.f32 %v1188, 0.0
    %v1426 = vmax.f32 %v1190, 0.0
    %v1427 = vmax.f32 %v1301, 0.0
    %v1428 = vmax.f32 %v1303, 0.0
    %v1429 = vmax.f32 %v966, 0.0
    %v1430 = vmax.f32 %v968, 0.0
    %v1431 = vmax.f32 %v1079, 0.0
    %v1432 = vmax.f32 %v1081, 0.0
    %v1433 = vmax.f32 %v1192, 0.0
    %v1434 = vmax.f32 %v1194, 0.0
    %v1435 = vmax.f32 %v1305, 0.0
    %v1436 = vmax.f32 %v1307, 0.0
    %v1437 = vpack.c.bf16 %v1317, %v1309
    %v1438 = vpack.c.bf16 %v1318, %v1310
    %v1439 = vpack.c.bf16 %v1319, %v1311
    %v1440 = vpack.c.bf16 %v1320, %v1312
    %v1441 = vpack.c.bf16 %v1321, %v1313
    %v1442 = vpack.c.bf16 %v1322, %v1314
    %v1443 = vpack.c.bf16 %v1323, %v1315
    %v1444 = vpack.c.bf16 %v1324, %v1316
    %v1445 = vpack.c.bf16 %v1333, %v1325
    %v1446 = vpack.c.bf16 %v1334, %v1326
    %v1447 = vpack.c.bf16 %v1335, %v1327
    %v1448 = vpack.c.bf16 %v1336, %v1328
    %v1449 = vpack.c.bf16 %v1337, %v1329
    %v1450 = vpack.c.bf16 %v1338, %v1330
    %v1451 = vpack.c.bf16 %v1339, %v1331
    %v1452 = vpack.c.bf16 %v1340, %v1332
    %v1453 = vpack.c.bf16 %v1349, %v1341
    %v1454 = vpack.c.bf16 %v1350, %v1342
    %v1455 = vpack.c.bf16 %v1351, %v1343
    %v1456 = vpack.c.bf16 %v1352, %v1344
    %v1457 = vpack.c.bf16 %v1353, %v1345
    %v1458 = vpack.c.bf16 %v1354, %v1346
    %v1459 = vpack.c.bf16 %v1355, %v1347
    %v1460 = vpack.c.bf16 %v1356, %v1348
    %v1461 = vpack.c.bf16 %v1365, %v1357
    %v1462 = vpack.c.bf16 %v1366, %v1358
    %v1463 = vpack.c.bf16 %v1367, %v1359
    %v1464 = vpack.c.bf16 %v1368, %v1360
    %v1465 = vpack.c.bf16 %v1369, %v1361
    %v1466 = vpack.c.bf16 %v1370, %v1362
    %v1467 = vpack.c.bf16 %v1371, %v1363
    %v1468 = vpack.c.bf16 %v1372, %v1364
    %v1469 = vpack.c.bf16 %v1381, %v1373
    %v1470 = vpack.c.bf16 %v1382, %v1374
    %v1471 = vpack.c.bf16 %v1383, %v1375
    %v1472 = vpack.c.bf16 %v1384, %v1376
    %v1473 = vpack.c.bf16 %v1385, %v1377
    %v1474 = vpack.c.bf16 %v1386, %v1378
    %v1475 = vpack.c.bf16 %v1387, %v1379
    %v1476 = vpack.c.bf16 %v1388, %v1380
    %v1477 = vpack.c.bf16 %v1397, %v1389
    %v1478 = vpack.c.bf16 %v1398, %v1390
    %v1479 = vpack.c.bf16 %v1399, %v1391
    %v1480 = vpack.c.bf16 %v1400, %v1392
    %v1481 = vpack.c.bf16 %v1401, %v1393
    %v1482 = vpack.c.bf16 %v1402, %v1394
    %v1483 = vpack.c.bf16 %v1403, %v1395
    %v1484 = vpack.c.bf16 %v1404, %v1396
    %v1485 = vpack.c.bf16 %v1413, %v1405
    %v1486 = vpack.c.bf16 %v1414, %v1406
    %v1487 = vpack.c.bf16 %v1415, %v1407
    %v1488 = vpack.c.bf16 %v1416, %v1408
    %v1489 = vpack.c.bf16 %v1417, %v1409
    %v1490 = vpack.c.bf16 %v1418, %v1410
    %v1491 = vpack.c.bf16 %v1419, %v1411
    %v1492 = vpack.c.bf16 %v1420, %v1412
    %v1493 = vpack.c.bf16 %v1429, %v1421
    %v1494 = vpack.c.bf16 %v1430, %v1422
    %v1495 = vpack.c.bf16 %v1431, %v1423
    %v1496 = vpack.c.bf16 %v1432, %v1424
    %v1497 = vpack.c.bf16 %v1433, %v1425
    %v1498 = vpack.c.bf16 %v1434, %v1426
    %v1499 = vpack.c.bf16 %v1435, %v1427
    %v1500 = vpack.c.bf16 %v1436, %v1428
    %1501 = vmatprep.subr.bf16.mxu0 %v1494
    %1502 = vmatpush1.bf16.msra.mxu0 %v1493
    %1503 = vmatprep.subr.bf16.mxu0 %v1486
    %1504 = vmatpush1.bf16.msra.mxu0 %v1485
    %1505 = vmatprep.subr.bf16.mxu0 %v1478
    %1506 = vmatpush1.bf16.msra.mxu0 %v1477
    %1507 = vmatprep.subr.bf16.mxu0 %v1470
    %1508 = vmatpush1.bf16.msra.mxu0 %v1469
    %1509 = vmatprep.subr.bf16.mxu0 %v1462
    %1510 = vmatpush1.bf16.msra.mxu0 %v1461
    %1511 = vmatprep.subr.bf16.mxu0 %v1454
    %1512 = vmatpush1.bf16.msra.mxu0 %v1453
    %1513 = vmatprep.subr.bf16.mxu0 %v1446
    %1514 = vmatpush1.bf16.msra.mxu0 %v1445
    %1515 = vmatprep.subr.bf16.mxu0 %v1438
    %1516 = vmatpush1.bf16.msra.mxu0 %v1437
    %1517 = vmatprep.subr.bf16.mxu0 0
    %1518 = vmatpush2.bf16.msra.mxu0 0
    %1519 = vmatprep.subr.bf16.mxu0 0
    %1520 = vmatpush2.bf16.msra.mxu0 0
    %1521 = vmatprep.subr.bf16.mxu0 0
    %1522 = vmatpush2.bf16.msra.mxu0 0
    %1523 = vmatprep.subr.bf16.mxu0 0
    %1524 = vmatpush2.bf16.msra.mxu0 0
    %1525 = vmatprep.subr.bf16.mxu0 0
    %1526 = vmatpush2.bf16.msra.mxu0 0
    %1527 = vmatprep.subr.bf16.mxu0 0
    %1528 = vmatpush2.bf16.msra.mxu0 0
    %1529 = vmatprep.subr.bf16.mxu0 0
    %1530 = vmatpush2.bf16.msra.mxu0 0
    %1531 = vmatprep.subr.bf16.mxu0 0
    %1532 = vmatpush2.bf16.msra.mxu0 0
    %1533 = vmatprep.mubr.bf16.mxu0 0
    %1534 = vmatmul.mubr.bf16.gmra.mxu0 998259584
    %v1535 = vpop.f32.mrf.mxu0
    %v1536 = vadd.f32 0.0, %v1535
    %v1537 = vpop.f32.mrf.mxu0
    %v1538 = vadd.f32 0.0, %v1537
    %v1539 = vpop.f32.mrf.mxu0
    %v1540 = vpop.f32.mrf.mxu0
    %1541 = vdwg.mxu0
    %1542 = vmatprep.subr.bf16.mxu0 %v1496
    %1543 = vmatpush1.bf16.msra.mxu0 %v1495
    %1544 = vmatprep.subr.bf16.mxu0 %v1488
    %1545 = vmatpush1.bf16.msra.mxu0 %v1487
    %1546 = vmatprep.subr.bf16.mxu0 %v1480
    %1547 = vmatpush1.bf16.msra.mxu0 %v1479
    %1548 = vmatprep.subr.bf16.mxu0 %v1472
    %1549 = vmatpush1.bf16.msra.mxu0 %v1471
    %1550 = vmatprep.subr.bf16.mxu0 %v1464
    %1551 = vmatpush1.bf16.msra.mxu0 %v1463
    %1552 = vmatprep.subr.bf16.mxu0 %v1456
    %1553 = vmatpush1.bf16.msra.mxu0 %v1455
    %1554 = vmatprep.subr.bf16.mxu0 %v1448
    %1555 = vmatpush1.bf16.msra.mxu0 %v1447
    %1556 = vmatprep.subr.bf16.mxu0 %v1440
    %1557 = vmatpush1.bf16.msra.mxu0 %v1439
    %1558 = vmatprep.subr.bf16.mxu0 0
    %1559 = vmatpush2.bf16.msra.mxu0 0
    %1560 = vmatprep.subr.bf16.mxu0 0
    %1561 = vmatpush2.bf16.msra.mxu0 0
    %1562 = vmatprep.subr.bf16.mxu0 0
    %1563 = vmatpush2.bf16.msra.mxu0 0
    %1564 = vmatprep.subr.bf16.mxu0 0
    %1565 = vmatpush2.bf16.msra.mxu0 0
    %1566 = vmatprep.subr.bf16.mxu0 0
    %1567 = vmatpush2.bf16.msra.mxu0 0
    %1568 = vmatprep.subr.bf16.mxu0 0
    %1569 = vmatpush2.bf16.msra.mxu0 0
    %1570 = vmatprep.subr.bf16.mxu0 0
    %1571 = vmatpush2.bf16.msra.mxu0 0
    %1572 = vmatprep.subr.bf16.mxu0 0
    %1573 = vmatpush2.bf16.msra.mxu0 0
    %1574 = vmatprep.mubr.bf16.mxu0 0
    %1575 = vmatmul.mubr.bf16.gmra.mxu0 998259584
    %v1576 = vpop.f32.mrf.mxu0
    %v1577 = vadd.f32 0.0, %v1576
    %v1578 = vpop.f32.mrf.mxu0
    %v1579 = vadd.f32 0.0, %v1578
    %v1580 = vpop.f32.mrf.mxu0
    %v1581 = vpop.f32.mrf.mxu0
    %1582 = vdwg.mxu0
    %1583 = vmatprep.subr.bf16.mxu0 %v1498
    %1584 = vmatpush1.bf16.msra.mxu0 %v1497
    %1585 = vmatprep.subr.bf16.mxu0 %v1490
    %1586 = vmatpush1.bf16.msra.mxu0 %v1489
    %1587 = vmatprep.subr.bf16.mxu0 %v1482
    %1588 = vmatpush1.bf16.msra.mxu0 %v1481
    %1589 = vmatprep.subr.bf16.mxu0 %v1474
    %1590 = vmatpush1.bf16.msra.mxu0 %v1473
    %1591 = vmatprep.subr.bf16.mxu0 %v1466
    %1592 = vmatpush1.bf16.msra.mxu0 %v1465
    %1593 = vmatprep.subr.bf16.mxu0 %v1458
    %1594 = vmatpush1.bf16.msra.mxu0 %v1457
    %1595 = vmatprep.subr.bf16.mxu0 %v1450
    %1596 = vmatpush1.bf16.msra.mxu0 %v1449
    %1597 = vmatprep.subr.bf16.mxu0 %v1442
    %1598 = vmatpush1.bf16.msra.mxu0 %v1441
    %1599 = vmatprep.subr.bf16.mxu0 0
    %1600 = vmatpush2.bf16.msra.mxu0 0
    %1601 = vmatprep.subr.bf16.mxu0 0
    %1602 = vmatpush2.bf16.msra.mxu0 0
    %1603 = vmatprep.subr.bf16.mxu0 0
    %1604 = vmatpush2.bf16.msra.mxu0 0
    %1605 = vmatprep.subr.bf16.mxu0 0
    %1606 = vmatpush2.bf16.msra.mxu0 0
    %1607 = vmatprep.subr.bf16.mxu0 0
    %1608 = vmatpush2.bf16.msra.mxu0 0
    %1609 = vmatprep.subr.bf16.mxu0 0
    %1610 = vmatpush2.bf16.msra.mxu0 0
    %1611 = vmatprep.subr.bf16.mxu0 0
    %1612 = vmatpush2.bf16.msra.mxu0 0
    %1613 = vmatprep.subr.bf16.mxu0 0
    %1614 = vmatpush2.bf16.msra.mxu0 0
    %1615 = vmatprep.mubr.bf16.mxu0 0
    %1616 = vmatmul.mubr.bf16.gmra.mxu0 998259584
    %v1617 = vpop.f32.mrf.mxu0
    %v1618 = vadd.f32 0.0, %v1617
    %v1619 = vpop.f32.mrf.mxu0
    %v1620 = vadd.f32 0.0, %v1619
    %v1621 = vpop.f32.mrf.mxu0
    %v1622 = vpop.f32.mrf.mxu0
    %1623 = vdwg.mxu0
    %1624 = vmatprep.subr.bf16.mxu0 %v1500
    %1625 = vmatpush1.bf16.msra.mxu0 %v1499
    %1626 = vmatprep.subr.bf16.mxu0 %v1492
    %1627 = vmatpush1.bf16.msra.mxu0 %v1491
    %1628 = vmatprep.subr.bf16.mxu0 %v1484
    %1629 = vmatpush1.bf16.msra.mxu0 %v1483
    %1630 = vmatprep.subr.bf16.mxu0 %v1476
    %1631 = vmatpush1.bf16.msra.mxu0 %v1475
    %1632 = vmatprep.subr.bf16.mxu0 %v1468
    %1633 = vmatpush1.bf16.msra.mxu0 %v1467
    %1634 = vmatprep.subr.bf16.mxu0 %v1460
    %1635 = vmatpush1.bf16.msra.mxu0 %v1459
    %1636 = vmatprep.subr.bf16.mxu0 %v1452
    %1637 = vmatpush1.bf16.msra.mxu0 %v1451
    %1638 = vmatprep.subr.bf16.mxu0 %v1444
    %1639 = vmatpush1.bf16.msra.mxu0 %v1443
    %1640 = vmatprep.subr.bf16.mxu0 0
    %1641 = vmatpush2.bf16.msra.mxu0 0
    %1642 = vmatprep.subr.bf16.mxu0 0
    %1643 = vmatpush2.bf16.msra.mxu0 0
    %1644 = vmatprep.subr.bf16.mxu0 0
    %1645 = vmatpush2.bf16.msra.mxu0 0
    %1646 = vmatprep.subr.bf16.mxu0 0
    %1647 = vmatpush2.bf16.msra.mxu0 0
    %1648 = vmatprep.subr.bf16.mxu0 0
    %1649 = vmatpush2.bf16.msra.mxu0 0
    %1650 = vmatprep.subr.bf16.mxu0 0
    %1651 = vmatpush2.bf16.msra.mxu0 0
    %1652 = vmatprep.subr.bf16.mxu0 0
    %1653 = vmatpush2.bf16.msra.mxu0 0
    %1654 = vmatprep.subr.bf16.mxu0 0
    %1655 = vmatpush2.bf16.msra.mxu0 0
    %1656 = vmatprep.mubr.bf16.mxu0 0
    %1657 = vmatmul.mubr.bf16.gmra.mxu0 998259584
    %v1658 = vpop.f32.mrf.mxu0
    %v1659 = vadd.f32 0.0, %v1658
    %v1660 = vpop.f32.mrf.mxu0
    %v1661 = vadd.f32 0.0, %v1660
    %v1662 = vpop.f32.mrf.mxu0
    %v1663 = vpop.f32.mrf.mxu0
    %1664 = vdwg.mxu0
    %1665 = vmatprep.subr.bf16.mxu0 %v808
    %1666 = vmatpush1.bf16.msra.mxu0 %v807
    %1667 = vmatprep.subr.bf16.mxu0 %v800
    %1668 = vmatpush1.bf16.msra.mxu0 %v799
    %1669 = vmatprep.subr.bf16.mxu0 %v792
    %1670 = vmatpush1.bf16.msra.mxu0 %v791
    %1671 = vmatprep.subr.bf16.mxu0 %v784
    %1672 = vmatpush1.bf16.msra.mxu0 %v783
    %1673 = vmatprep.subr.bf16.mxu0 %v776
    %1674 = vmatpush1.bf16.msra.mxu0 %v775
    %1675 = vmatprep.subr.bf16.mxu0 %v768
    %1676 = vmatpush1.bf16.msra.mxu0 %v767
    %1677 = vmatprep.subr.bf16.mxu0 %v760
    %1678 = vmatpush1.bf16.msra.mxu0 %v759
    %1679 = vmatprep.subr.bf16.mxu0 %v752
    %1680 = vmatpush1.bf16.msra.mxu0 %v751
    %1681 = vmatprep.subr.bf16.mxu0 0
    %1682 = vmatpush2.bf16.msra.mxu0 0
    %1683 = vmatprep.subr.bf16.mxu0 0
    %1684 = vmatpush2.bf16.msra.mxu0 0
    %1685 = vmatprep.subr.bf16.mxu0 0
    %1686 = vmatpush2.bf16.msra.mxu0 0
    %1687 = vmatprep.subr.bf16.mxu0 0
    %1688 = vmatpush2.bf16.msra.mxu0 0
    %1689 = vmatprep.subr.bf16.mxu0 0
    %1690 = vmatpush2.bf16.msra.mxu0 0
    %1691 = vmatprep.subr.bf16.mxu0 0
    %1692 = vmatpush2.bf16.msra.mxu0 0
    %1693 = vmatprep.subr.bf16.mxu0 0
    %1694 = vmatpush2.bf16.msra.mxu0 0
    %1695 = vmatprep.subr.bf16.mxu0 0
    %1696 = vmatpush2.bf16.msra.mxu0 0
    %1697 = vmatprep.mubr.bf16.mxu0 0
    %1698 = vmatmul.mubr.bf16.gmra.mxu0 998259584
    %v1699 = vpop.f32.mrf.mxu0
    %v1700 = vadd.f32 %v1536, %v1699
    %v1701 = vpop.f32.mrf.mxu0
    %v1702 = vadd.f32 %v1538, %v1701
    %v1703 = vpop.f32.mrf.mxu0
    %v1704 = vpop.f32.mrf.mxu0
    %1705 = vdwg.mxu0
    %1706 = vmatprep.subr.bf16.mxu0 %v810
    %1707 = vmatpush1.bf16.msra.mxu0 %v809
    %1708 = vmatprep.subr.bf16.mxu0 %v802
    %1709 = vmatpush1.bf16.msra.mxu0 %v801
    %1710 = vmatprep.subr.bf16.mxu0 %v794
    %1711 = vmatpush1.bf16.msra.mxu0 %v793
    %1712 = vmatprep.subr.bf16.mxu0 %v786
    %1713 = vmatpush1.bf16.msra.mxu0 %v785
    %1714 = vmatprep.subr.bf16.mxu0 %v778
    %1715 = vmatpush1.bf16.msra.mxu0 %v777
    %1716 = vmatprep.subr.bf16.mxu0 %v770
    %1717 = vmatpush1.bf16.msra.mxu0 %v769
    %1718 = vmatprep.subr.bf16.mxu0 %v762
    %1719 = vmatpush1.bf16.msra.mxu0 %v761
    %1720 = vmatprep.subr.bf16.mxu0 %v754
    %1721 = vmatpush1.bf16.msra.mxu0 %v753
    %1722 = vmatprep.subr.bf16.mxu0 0
    %1723 = vmatpush2.bf16.msra.mxu0 0
    %1724 = vmatprep.subr.bf16.mxu0 0
    %1725 = vmatpush2.bf16.msra.mxu0 0
    %1726 = vmatprep.subr.bf16.mxu0 0
    %1727 = vmatpush2.bf16.msra.mxu0 0
    %1728 = vmatprep.subr.bf16.mxu0 0
    %1729 = vmatpush2.bf16.msra.mxu0 0
    %1730 = vmatprep.subr.bf16.mxu0 0
    %1731 = vmatpush2.bf16.msra.mxu0 0
    %1732 = vmatprep.subr.bf16.mxu0 0
    %1733 = vmatpush2.bf16.msra.mxu0 0
    %1734 = vmatprep.subr.bf16.mxu0 0
    %1735 = vmatpush2.bf16.msra.mxu0 0
    %1736 = vmatprep.subr.bf16.mxu0 0
    %1737 = vmatpush2.bf16.msra.mxu0 0
    %1738 = vmatprep.mubr.bf16.mxu0 0
    %1739 = vmatmul.mubr.bf16.gmra.mxu0 998259584
    %v1740 = vpop.f32.mrf.mxu0
    %v1741 = vadd.f32 %v1577, %v1740
    %v1742 = vpop.f32.mrf.mxu0
    %v1743 = vadd.f32 %v1579, %v1742
    %v1744 = vpop.f32.mrf.mxu0
    %v1745 = vpop.f32.mrf.mxu0
    %1746 = vdwg.mxu0
    %1747 = vmatprep.subr.bf16.mxu0 %v812
    %1748 = vmatpush1.bf16.msra.mxu0 %v811
    %1749 = vmatprep.subr.bf16.mxu0 %v804
    %1750 = vmatpush1.bf16.msra.mxu0 %v803
    %1751 = vmatprep.subr.bf16.mxu0 %v796
    %1752 = vmatpush1.bf16.msra.mxu0 %v795
    %1753 = vmatprep.subr.bf16.mxu0 %v788
    %1754 = vmatpush1.bf16.msra.mxu0 %v787
    %1755 = vmatprep.subr.bf16.mxu0 %v780
    %1756 = vmatpush1.bf16.msra.mxu0 %v779
    %1757 = vmatprep.subr.bf16.mxu0 %v772
    %1758 = vmatpush1.bf16.msra.mxu0 %v771
    %1759 = vmatprep.subr.bf16.mxu0 %v764
    %1760 = vmatpush1.bf16.msra.mxu0 %v763
    %1761 = vmatprep.subr.bf16.mxu0 %v756
    %1762 = vmatpush1.bf16.msra.mxu0 %v755
    %1763 = vmatprep.subr.bf16.mxu0 0
    %1764 = vmatpush2.bf16.msra.mxu0 0
    %1765 = vmatprep.subr.bf16.mxu0 0
    %1766 = vmatpush2.bf16.msra.mxu0 0
    %1767 = vmatprep.subr.bf16.mxu0 0
    %1768 = vmatpush2.bf16.msra.mxu0 0
    %1769 = vmatprep.subr.bf16.mxu0 0
    %1770 = vmatpush2.bf16.msra.mxu0 0
    %1771 = vmatprep.subr.bf16.mxu0 0
    %1772 = vmatpush2.bf16.msra.mxu0 0
    %1773 = vmatprep.subr.bf16.mxu0 0
    %1774 = vmatpush2.bf16.msra.mxu0 0
    %1775 = vmatprep.subr.bf16.mxu0 0
    %1776 = vmatpush2.bf16.msra.mxu0 0
    %1777 = vmatprep.subr.bf16.mxu0 0
    %1778 = vmatpush2.bf16.msra.mxu0 0
    %1779 = vmatprep.mubr.bf16.mxu0 0
    %1780 = vmatmul.mubr.bf16.gmra.mxu0 998259584
    %v1781 = vpop.f32.mrf.mxu0
    %v1782 = vadd.f32 %v1618, %v1781
    %v1783 = vpop.f32.mrf.mxu0
    %v1784 = vadd.f32 %v1620, %v1783
    %v1785 = vpop.f32.mrf.mxu0
    %v1786 = vpop.f32.mrf.mxu0
    %1787 = vdwg.mxu0
    %1788 = vmatprep.subr.bf16.mxu0 %v814
    %1789 = vmatpush1.bf16.msra.mxu0 %v813
    %1790 = vmatprep.subr.bf16.mxu0 %v806
    %1791 = vmatpush1.bf16.msra.mxu0 %v805
    %1792 = vmatprep.subr.bf16.mxu0 %v798
    %1793 = vmatpush1.bf16.msra.mxu0 %v797
    %1794 = vmatprep.subr.bf16.mxu0 %v790
    %1795 = vmatpush1.bf16.msra.mxu0 %v789
    %1796 = vmatprep.subr.bf16.mxu0 %v782
    %1797 = vmatpush1.bf16.msra.mxu0 %v781
    %1798 = vmatprep.subr.bf16.mxu0 %v774
    %1799 = vmatpush1.bf16.msra.mxu0 %v773
    %1800 = vmatprep.subr.bf16.mxu0 %v766
    %1801 = vmatpush1.bf16.msra.mxu0 %v765
    %1802 = vmatprep.subr.bf16.mxu0 %v758
    %1803 = vmatpush1.bf16.msra.mxu0 %v757
    %1804 = vmatprep.subr.bf16.mxu0 0
    %1805 = vmatpush2.bf16.msra.mxu0 0
    %1806 = vmatprep.subr.bf16.mxu0 0
    %1807 = vmatpush2.bf16.msra.mxu0 0
    %1808 = vmatprep.subr.bf16.mxu0 0
    %1809 = vmatpush2.bf16.msra.mxu0 0
    %1810 = vmatprep.subr.bf16.mxu0 0
    %1811 = vmatpush2.bf16.msra.mxu0 0
    %1812 = vmatprep.subr.bf16.mxu0 0
    %1813 = vmatpush2.bf16.msra.mxu0 0
    %1814 = vmatprep.subr.bf16.mxu0 0
    %1815 = vmatpush2.bf16.msra.mxu0 0
    %1816 = vmatprep.subr.bf16.mxu0 0
    %1817 = vmatpush2.bf16.msra.mxu0 0
    %1818 = vmatprep.subr.bf16.mxu0 0
    %1819 = vmatpush2.bf16.msra.mxu0 0
    %1820 = vmatprep.mubr.bf16.mxu0 0
    %1821 = vmatmul.mubr.bf16.gmra.mxu0 998259584
    %v1822 = vpop.f32.mrf.mxu0
    %v1823 = vadd.f32 %v1659, %v1822
    %v1824 = vpop.f32.mrf.mxu0
    %v1825 = vadd.f32 %v1661, %v1824
    %v1826 = vpop.f32.mrf.mxu0
    %v1827 = vpop.f32.mrf.mxu0
    %1828 = vdwg.mxu0
    %s1829 = scalar_lea.vmem %s0, 8
    %v1830 = vld [vmem:[%s1829] sm:$0xf]
    %v1831 = vpack.c.bf16 %v1830, %v1830
    %1832 = vxpose.xlu0.c.b16.start [1/8] %v1831, 128
    %1833 = vxpose.xlu0.c.b16.cont [2/8] 0, 128
    %1834 = vxpose.xlu0.c.b16.cont [3/8] 0, 128
    %1835 = vxpose.xlu0.c.b16.cont [4/8] 0, 128
    %1836 = vxpose.xlu0.c.b16.cont [5/8] 0, 128
    %1837 = vxpose.xlu0.c.b16.cont [6/8] 0, 128
    %1838 = vxpose.xlu0.c.b16.cont [7/8] 0, 128
    %1839 = vxpose.xlu0.c.b16.end [8/8] 0, 128
    %v1840 = vpop.trf.xlu0
    %v1841 = vpop.trf.xlu0
    %v1842 = vpop.trf.xlu0
    %v1843 = vpop.trf.xlu0
    %v1844 = vpop.trf.xlu0
    %v1845 = vpop.trf.xlu0
    %v1846 = vpop.trf.xlu0
    %v1847 = vpop.trf.xlu0
    %v1849 = vsel %vm121, %v1840, 0
    %v1852 = vsel %vm121, %v1841, 0
    %v1855 = vsel %vm121, %v1842, 0
    %v1858 = vsel %vm121, %v1843, 0
    %v1861 = vsel %vm121, %v1844, 0
    %v1864 = vsel %vm121, %v1845, 0
    %v1867 = vsel %vm121, %v1846, 0
    %v1870 = vsel %vm121, %v1847, 0
    %1872 = vmatprep.subr.bf16.mxu0 0
    %1873 = vmatpush1.bf16.msra.mxu0 0
    %1874 = vmatprep.subr.bf16.mxu0 0
    %1875 = vmatpush1.bf16.msra.mxu0 0
    %1876 = vmatprep.subr.bf16.mxu0 0
    %1877 = vmatpush1.bf16.msra.mxu0 0
    %1878 = vmatprep.subr.bf16.mxu0 0
    %1879 = vmatpush1.bf16.msra.mxu0 0
    %1880 = vmatprep.subr.bf16.mxu0 0
    %1881 = vmatpush1.bf16.msra.mxu0 0
    %1882 = vmatprep.subr.bf16.mxu0 0
    %1883 = vmatpush1.bf16.msra.mxu0 0
    %1884 = vmatprep.subr.bf16.mxu0 0
    %1885 = vmatpush1.bf16.msra.mxu0 0
    %1886 = vmatprep.subr.bf16.mxu0 %v151
    %1887 = vmatpush1.bf16.msra.mxu0 %v148
    %1888 = vmatprep.subr.bf16.mxu0 0
    %1889 = vmatpush2.bf16.msra.mxu0 0
    %1890 = vmatprep.subr.bf16.mxu0 0
    %1891 = vmatpush2.bf16.msra.mxu0 0
    %1892 = vmatprep.subr.bf16.mxu0 0
    %1893 = vmatpush2.bf16.msra.mxu0 0
    %1894 = vmatprep.subr.bf16.mxu0 0
    %1895 = vmatpush2.bf16.msra.mxu0 0
    %1896 = vmatprep.subr.bf16.mxu0 0
    %1897 = vmatpush2.bf16.msra.mxu0 0
    %1898 = vmatprep.subr.bf16.mxu0 0
    %1899 = vmatpush2.bf16.msra.mxu0 0
    %1900 = vmatprep.subr.bf16.mxu0 0
    %1901 = vmatpush2.bf16.msra.mxu0 0
    %1902 = vmatprep.subr.bf16.mxu0 0
    %1903 = vmatpush2.bf16.msra.mxu0 0
    %1904 = vmatprep.mubr.bf16.mxu0 0
    %1905 = vmatmul.mubr.bf16.gmra.mxu0 %v1849
    %v1906 = vpop.f32.mrf.mxu0
    %v1907 = vadd.f32 0.0, %v1906
    %v1908 = vpop.f32.mrf.mxu0
    %v1909 = vadd.f32 0.0, %v1908
    %v1910 = vpop.f32.mrf.mxu0
    %v1911 = vadd.f32 0.0, %v1910
    %v1912 = vpop.f32.mrf.mxu0
    %v1913 = vadd.f32 0.0, %v1912
    %1914 = vmatprep.mubr.bf16.mxu0 0
    %1915 = vmatmul.mubr.bf16.gmra.mxu0 %v1852
    %v1916 = vpop.f32.mrf.mxu0
    %v1917 = vadd.f32 0.0, %v1916
    %v1918 = vpop.f32.mrf.mxu0
    %v1919 = vadd.f32 0.0, %v1918
    %v1920 = vpop.f32.mrf.mxu0
    %v1921 = vadd.f32 0.0, %v1920
    %v1922 = vpop.f32.mrf.mxu0
    %v1923 = vadd.f32 0.0, %v1922
    %1924 = vmatprep.mubr.bf16.mxu0 0
    %1925 = vmatmul.mubr.bf16.gmra.mxu0 %v1855
    %v1926 = vpop.f32.mrf.mxu0
    %v1927 = vadd.f32 0.0, %v1926
    %v1928 = vpop.f32.mrf.mxu0
    %v1929 = vadd.f32 0.0, %v1928
    %v1930 = vpop.f32.mrf.mxu0
    %v1931 = vadd.f32 0.0, %v1930
    %v1932 = vpop.f32.mrf.mxu0
    %v1933 = vadd.f32 0.0, %v1932
    %1934 = vmatprep.mubr.bf16.mxu0 0
    %1935 = vmatmul.mubr.bf16.gmra.mxu0 %v1858
    %v1936 = vpop.f32.mrf.mxu0
    %v1937 = vadd.f32 0.0, %v1936
    %v1938 = vpop.f32.mrf.mxu0
    %v1939 = vadd.f32 0.0, %v1938
    %v1940 = vpop.f32.mrf.mxu0
    %v1941 = vadd.f32 0.0, %v1940
    %v1942 = vpop.f32.mrf.mxu0
    %v1943 = vadd.f32 0.0, %v1942
    %1944 = vmatprep.mubr.bf16.mxu0 0
    %1945 = vmatmul.mubr.bf16.gmra.mxu0 %v1861
    %v1946 = vpop.f32.mrf.mxu0
    %v1947 = vadd.f32 0.0, %v1946
    %v1948 = vpop.f32.mrf.mxu0
    %v1949 = vadd.f32 0.0, %v1948
    %v1950 = vpop.f32.mrf.mxu0
    %v1951 = vadd.f32 0.0, %v1950
    %v1952 = vpop.f32.mrf.mxu0
    %v1953 = vadd.f32 0.0, %v1952
    %1954 = vmatprep.mubr.bf16.mxu0 0
    %1955 = vmatmul.mubr.bf16.gmra.mxu0 %v1864
    %v1956 = vpop.f32.mrf.mxu0
    %v1957 = vadd.f32 0.0, %v1956
    %v1958 = vpop.f32.mrf.mxu0
    %v1959 = vadd.f32 0.0, %v1958
    %v1960 = vpop.f32.mrf.mxu0
    %v1961 = vadd.f32 0.0, %v1960
    %v1962 = vpop.f32.mrf.mxu0
    %v1963 = vadd.f32 0.0, %v1962
    %1964 = vmatprep.mubr.bf16.mxu0 0
    %1965 = vmatmul.mubr.bf16.gmra.mxu0 %v1867
    %v1966 = vpop.f32.mrf.mxu0
    %v1967 = vadd.f32 0.0, %v1966
    %v1968 = vpop.f32.mrf.mxu0
    %v1969 = vadd.f32 0.0, %v1968
    %v1970 = vpop.f32.mrf.mxu0
    %v1971 = vadd.f32 0.0, %v1970
    %v1972 = vpop.f32.mrf.mxu0
    %v1973 = vadd.f32 0.0, %v1972
    %1974 = vmatprep.mubr.bf16.mxu0 0
    %1975 = vmatmul.mubr.bf16.gmra.mxu0 %v1870
    %v1976 = vpop.f32.mrf.mxu0
    %v1977 = vadd.f32 0.0, %v1976
    %v1978 = vpop.f32.mrf.mxu0
    %v1979 = vadd.f32 0.0, %v1978
    %v1980 = vpop.f32.mrf.mxu0
    %v1981 = vadd.f32 0.0, %v1980
    %v1982 = vpop.f32.mrf.mxu0
    %v1983 = vadd.f32 0.0, %v1982
    %1984 = vdwg.mxu0
    %1985 = vmatprep.subr.bf16.mxu0 0
    %1986 = vmatpush1.bf16.msra.mxu0 0
    %1987 = vmatprep.subr.bf16.mxu0 0
    %1988 = vmatpush1.bf16.msra.mxu0 0
    %1989 = vmatprep.subr.bf16.mxu0 0
    %1990 = vmatpush1.bf16.msra.mxu0 0
    %1991 = vmatprep.subr.bf16.mxu0 0
    %1992 = vmatpush1.bf16.msra.mxu0 0
    %1993 = vmatprep.subr.bf16.mxu0 0
    %1994 = vmatpush1.bf16.msra.mxu0 0
    %1995 = vmatprep.subr.bf16.mxu0 0
    %1996 = vmatpush1.bf16.msra.mxu0 0
    %1997 = vmatprep.subr.bf16.mxu0 0
    %1998 = vmatpush1.bf16.msra.mxu0 0
    %1999 = vmatprep.subr.bf16.mxu0 %v157
    %2000 = vmatpush1.bf16.msra.mxu0 %v154
    %2001 = vmatprep.subr.bf16.mxu0 0
    %2002 = vmatpush2.bf16.msra.mxu0 0
    %2003 = vmatprep.subr.bf16.mxu0 0
    %2004 = vmatpush2.bf16.msra.mxu0 0
    %2005 = vmatprep.subr.bf16.mxu0 0
    %2006 = vmatpush2.bf16.msra.mxu0 0
    %2007 = vmatprep.subr.bf16.mxu0 0
    %2008 = vmatpush2.bf16.msra.mxu0 0
    %2009 = vmatprep.subr.bf16.mxu0 0
    %2010 = vmatpush2.bf16.msra.mxu0 0
    %2011 = vmatprep.subr.bf16.mxu0 0
    %2012 = vmatpush2.bf16.msra.mxu0 0
    %2013 = vmatprep.subr.bf16.mxu0 0
    %2014 = vmatpush2.bf16.msra.mxu0 0
    %2015 = vmatprep.subr.bf16.mxu0 0
    %2016 = vmatpush2.bf16.msra.mxu0 0
    %2017 = vmatprep.mubr.bf16.mxu0 0
    %2018 = vmatmul.mubr.bf16.gmra.mxu0 %v1849
    %v2019 = vpop.f32.mrf.mxu0
    %v2020 = vadd.f32 0.0, %v2019
    %v2021 = vpop.f32.mrf.mxu0
    %v2022 = vadd.f32 0.0, %v2021
    %v2023 = vpop.f32.mrf.mxu0
    %v2024 = vadd.f32 0.0, %v2023
    %v2025 = vpop.f32.mrf.mxu0
    %v2026 = vadd.f32 0.0, %v2025
    %2027 = vmatprep.mubr.bf16.mxu0 0
    %2028 = vmatmul.mubr.bf16.gmra.mxu0 %v1852
    %v2029 = vpop.f32.mrf.mxu0
    %v2030 = vadd.f32 0.0, %v2029
    %v2031 = vpop.f32.mrf.mxu0
    %v2032 = vadd.f32 0.0, %v2031
    %v2033 = vpop.f32.mrf.mxu0
    %v2034 = vadd.f32 0.0, %v2033
    %v2035 = vpop.f32.mrf.mxu0
    %v2036 = vadd.f32 0.0, %v2035
    %2037 = vmatprep.mubr.bf16.mxu0 0
    %2038 = vmatmul.mubr.bf16.gmra.mxu0 %v1855
    %v2039 = vpop.f32.mrf.mxu0
    %v2040 = vadd.f32 0.0, %v2039
    %v2041 = vpop.f32.mrf.mxu0
    %v2042 = vadd.f32 0.0, %v2041
    %v2043 = vpop.f32.mrf.mxu0
    %v2044 = vadd.f32 0.0, %v2043
    %v2045 = vpop.f32.mrf.mxu0
    %v2046 = vadd.f32 0.0, %v2045
    %2047 = vmatprep.mubr.bf16.mxu0 0
    %2048 = vmatmul.mubr.bf16.gmra.mxu0 %v1858
    %v2049 = vpop.f32.mrf.mxu0
    %v2050 = vadd.f32 0.0, %v2049
    %v2051 = vpop.f32.mrf.mxu0
    %v2052 = vadd.f32 0.0, %v2051
    %v2053 = vpop.f32.mrf.mxu0
    %v2054 = vadd.f32 0.0, %v2053
    %v2055 = vpop.f32.mrf.mxu0
    %v2056 = vadd.f32 0.0, %v2055
    %2057 = vmatprep.mubr.bf16.mxu0 0
    %2058 = vmatmul.mubr.bf16.gmra.mxu0 %v1861
    %v2059 = vpop.f32.mrf.mxu0
    %v2060 = vadd.f32 0.0, %v2059
    %v2061 = vpop.f32.mrf.mxu0
    %v2062 = vadd.f32 0.0, %v2061
    %v2063 = vpop.f32.mrf.mxu0
    %v2064 = vadd.f32 0.0, %v2063
    %v2065 = vpop.f32.mrf.mxu0
    %v2066 = vadd.f32 0.0, %v2065
    %2067 = vmatprep.mubr.bf16.mxu0 0
    %2068 = vmatmul.mubr.bf16.gmra.mxu0 %v1864
    %v2069 = vpop.f32.mrf.mxu0
    %v2070 = vadd.f32 0.0, %v2069
    %v2071 = vpop.f32.mrf.mxu0
    %v2072 = vadd.f32 0.0, %v2071
    %v2073 = vpop.f32.mrf.mxu0
    %v2074 = vadd.f32 0.0, %v2073
    %v2075 = vpop.f32.mrf.mxu0
    %v2076 = vadd.f32 0.0, %v2075
    %2077 = vmatprep.mubr.bf16.mxu0 0
    %2078 = vmatmul.mubr.bf16.gmra.mxu0 %v1867
    %v2079 = vpop.f32.mrf.mxu0
    %v2080 = vadd.f32 0.0, %v2079
    %v2081 = vpop.f32.mrf.mxu0
    %v2082 = vadd.f32 0.0, %v2081
    %v2083 = vpop.f32.mrf.mxu0
    %v2084 = vadd.f32 0.0, %v2083
    %v2085 = vpop.f32.mrf.mxu0
    %v2086 = vadd.f32 0.0, %v2085
    %2087 = vmatprep.mubr.bf16.mxu0 0
    %2088 = vmatmul.mubr.bf16.gmra.mxu0 %v1870
    %v2089 = vpop.f32.mrf.mxu0
    %v2090 = vadd.f32 0.0, %v2089
    %v2091 = vpop.f32.mrf.mxu0
    %v2092 = vadd.f32 0.0, %v2091
    %v2093 = vpop.f32.mrf.mxu0
    %v2094 = vadd.f32 0.0, %v2093
    %v2095 = vpop.f32.mrf.mxu0
    %v2096 = vadd.f32 0.0, %v2095
    %2097 = vdwg.mxu0
    %2098 = vmatprep.subr.bf16.mxu0 0
    %2099 = vmatpush1.bf16.msra.mxu0 0
    %2100 = vmatprep.subr.bf16.mxu0 0
    %2101 = vmatpush1.bf16.msra.mxu0 0
    %2102 = vmatprep.subr.bf16.mxu0 0
    %2103 = vmatpush1.bf16.msra.mxu0 0
    %2104 = vmatprep.subr.bf16.mxu0 0
    %2105 = vmatpush1.bf16.msra.mxu0 0
    %2106 = vmatprep.subr.bf16.mxu0 0
    %2107 = vmatpush1.bf16.msra.mxu0 0
    %2108 = vmatprep.subr.bf16.mxu0 0
    %2109 = vmatpush1.bf16.msra.mxu0 0
    %2110 = vmatprep.subr.bf16.mxu0 0
    %2111 = vmatpush1.bf16.msra.mxu0 0
    %2112 = vmatprep.subr.bf16.mxu0 %v163
    %2113 = vmatpush1.bf16.msra.mxu0 %v160
    %2114 = vmatprep.subr.bf16.mxu0 0
    %2115 = vmatpush2.bf16.msra.mxu0 0
    %2116 = vmatprep.subr.bf16.mxu0 0
    %2117 = vmatpush2.bf16.msra.mxu0 0
    %2118 = vmatprep.subr.bf16.mxu0 0
    %2119 = vmatpush2.bf16.msra.mxu0 0
    %2120 = vmatprep.subr.bf16.mxu0 0
    %2121 = vmatpush2.bf16.msra.mxu0 0
    %2122 = vmatprep.subr.bf16.mxu0 0
    %2123 = vmatpush2.bf16.msra.mxu0 0
    %2124 = vmatprep.subr.bf16.mxu0 0
    %2125 = vmatpush2.bf16.msra.mxu0 0
    %2126 = vmatprep.subr.bf16.mxu0 0
    %2127 = vmatpush2.bf16.msra.mxu0 0
    %2128 = vmatprep.subr.bf16.mxu0 0
    %2129 = vmatpush2.bf16.msra.mxu0 0
    %2130 = vmatprep.mubr.bf16.mxu0 0
    %2131 = vmatmul.mubr.bf16.gmra.mxu0 %v1849
    %v2132 = vpop.f32.mrf.mxu0
    %v2133 = vadd.f32 0.0, %v2132
    %v2134 = vpop.f32.mrf.mxu0
    %v2135 = vadd.f32 0.0, %v2134
    %v2136 = vpop.f32.mrf.mxu0
    %v2137 = vadd.f32 0.0, %v2136
    %v2138 = vpop.f32.mrf.mxu0
    %v2139 = vadd.f32 0.0, %v2138
    %2140 = vmatprep.mubr.bf16.mxu0 0
    %2141 = vmatmul.mubr.bf16.gmra.mxu0 %v1852
    %v2142 = vpop.f32.mrf.mxu0
    %v2143 = vadd.f32 0.0, %v2142
    %v2144 = vpop.f32.mrf.mxu0
    %v2145 = vadd.f32 0.0, %v2144
    %v2146 = vpop.f32.mrf.mxu0
    %v2147 = vadd.f32 0.0, %v2146
    %v2148 = vpop.f32.mrf.mxu0
    %v2149 = vadd.f32 0.0, %v2148
    %2150 = vmatprep.mubr.bf16.mxu0 0
    %2151 = vmatmul.mubr.bf16.gmra.mxu0 %v1855
    %v2152 = vpop.f32.mrf.mxu0
    %v2153 = vadd.f32 0.0, %v2152
    %v2154 = vpop.f32.mrf.mxu0
    %v2155 = vadd.f32 0.0, %v2154
    %v2156 = vpop.f32.mrf.mxu0
    %v2157 = vadd.f32 0.0, %v2156
    %v2158 = vpop.f32.mrf.mxu0
    %v2159 = vadd.f32 0.0, %v2158
    %2160 = vmatprep.mubr.bf16.mxu0 0
    %2161 = vmatmul.mubr.bf16.gmra.mxu0 %v1858
    %v2162 = vpop.f32.mrf.mxu0
    %v2163 = vadd.f32 0.0, %v2162
    %v2164 = vpop.f32.mrf.mxu0
    %v2165 = vadd.f32 0.0, %v2164
    %v2166 = vpop.f32.mrf.mxu0
    %v2167 = vadd.f32 0.0, %v2166
    %v2168 = vpop.f32.mrf.mxu0
    %v2169 = vadd.f32 0.0, %v2168
    %2170 = vmatprep.mubr.bf16.mxu0 0
    %2171 = vmatmul.mubr.bf16.gmra.mxu0 %v1861
    %v2172 = vpop.f32.mrf.mxu0
    %v2173 = vadd.f32 0.0, %v2172
    %v2174 = vpop.f32.mrf.mxu0
    %v2175 = vadd.f32 0.0, %v2174
    %v2176 = vpop.f32.mrf.mxu0
    %v2177 = vadd.f32 0.0, %v2176
    %v2178 = vpop.f32.mrf.mxu0
    %v2179 = vadd.f32 0.0, %v2178
    %2180 = vmatprep.mubr.bf16.mxu0 0
    %2181 = vmatmul.mubr.bf16.gmra.mxu0 %v1864
    %v2182 = vpop.f32.mrf.mxu0
    %v2183 = vadd.f32 0.0, %v2182
    %v2184 = vpop.f32.mrf.mxu0
    %v2185 = vadd.f32 0.0, %v2184
    %v2186 = vpop.f32.mrf.mxu0
    %v2187 = vadd.f32 0.0, %v2186
    %v2188 = vpop.f32.mrf.mxu0
    %v2189 = vadd.f32 0.0, %v2188
    %2190 = vmatprep.mubr.bf16.mxu0 0
    %2191 = vmatmul.mubr.bf16.gmra.mxu0 %v1867
    %v2192 = vpop.f32.mrf.mxu0
    %v2193 = vadd.f32 0.0, %v2192
    %v2194 = vpop.f32.mrf.mxu0
    %v2195 = vadd.f32 0.0, %v2194
    %v2196 = vpop.f32.mrf.mxu0
    %v2197 = vadd.f32 0.0, %v2196
    %v2198 = vpop.f32.mrf.mxu0
    %v2199 = vadd.f32 0.0, %v2198
    %2200 = vmatprep.mubr.bf16.mxu0 0
    %2201 = vmatmul.mubr.bf16.gmra.mxu0 %v1870
    %v2202 = vpop.f32.mrf.mxu0
    %v2203 = vadd.f32 0.0, %v2202
    %v2204 = vpop.f32.mrf.mxu0
    %v2205 = vadd.f32 0.0, %v2204
    %v2206 = vpop.f32.mrf.mxu0
    %v2207 = vadd.f32 0.0, %v2206
    %v2208 = vpop.f32.mrf.mxu0
    %v2209 = vadd.f32 0.0, %v2208
    %2210 = vdwg.mxu0
    %2211 = vmatprep.subr.bf16.mxu0 0
    %2212 = vmatpush1.bf16.msra.mxu0 0
    %2213 = vmatprep.subr.bf16.mxu0 0
    %2214 = vmatpush1.bf16.msra.mxu0 0
    %2215 = vmatprep.subr.bf16.mxu0 0
    %2216 = vmatpush1.bf16.msra.mxu0 0
    %2217 = vmatprep.subr.bf16.mxu0 0
    %2218 = vmatpush1.bf16.msra.mxu0 0
    %2219 = vmatprep.subr.bf16.mxu0 0
    %2220 = vmatpush1.bf16.msra.mxu0 0
    %2221 = vmatprep.subr.bf16.mxu0 0
    %2222 = vmatpush1.bf16.msra.mxu0 0
    %2223 = vmatprep.subr.bf16.mxu0 0
    %2224 = vmatpush1.bf16.msra.mxu0 0
    %2225 = vmatprep.subr.bf16.mxu0 %v169
    %2226 = vmatpush1.bf16.msra.mxu0 %v166
    %2227 = vmatprep.subr.bf16.mxu0 0
    %2228 = vmatpush2.bf16.msra.mxu0 0
    %2229 = vmatprep.subr.bf16.mxu0 0
    %2230 = vmatpush2.bf16.msra.mxu0 0
    %2231 = vmatprep.subr.bf16.mxu0 0
    %2232 = vmatpush2.bf16.msra.mxu0 0
    %2233 = vmatprep.subr.bf16.mxu0 0
    %2234 = vmatpush2.bf16.msra.mxu0 0
    %2235 = vmatprep.subr.bf16.mxu0 0
    %2236 = vmatpush2.bf16.msra.mxu0 0
    %2237 = vmatprep.subr.bf16.mxu0 0
    %2238 = vmatpush2.bf16.msra.mxu0 0
    %2239 = vmatprep.subr.bf16.mxu0 0
    %2240 = vmatpush2.bf16.msra.mxu0 0
    %2241 = vmatprep.subr.bf16.mxu0 0
    %2242 = vmatpush2.bf16.msra.mxu0 0
    %2243 = vmatprep.mubr.bf16.mxu0 0
    %2244 = vmatmul.mubr.bf16.gmra.mxu0 %v1849
    %v2245 = vpop.f32.mrf.mxu0
    %v2246 = vadd.f32 0.0, %v2245
    %v2247 = vpop.f32.mrf.mxu0
    %v2248 = vadd.f32 0.0, %v2247
    %v2249 = vpop.f32.mrf.mxu0
    %v2250 = vadd.f32 0.0, %v2249
    %v2251 = vpop.f32.mrf.mxu0
    %v2252 = vadd.f32 0.0, %v2251
    %2253 = vmatprep.mubr.bf16.mxu0 0
    %2254 = vmatmul.mubr.bf16.gmra.mxu0 %v1852
    %v2255 = vpop.f32.mrf.mxu0
    %v2256 = vadd.f32 0.0, %v2255
    %v2257 = vpop.f32.mrf.mxu0
    %v2258 = vadd.f32 0.0, %v2257
    %v2259 = vpop.f32.mrf.mxu0
    %v2260 = vadd.f32 0.0, %v2259
    %v2261 = vpop.f32.mrf.mxu0
    %v2262 = vadd.f32 0.0, %v2261
    %2263 = vmatprep.mubr.bf16.mxu0 0
    %2264 = vmatmul.mubr.bf16.gmra.mxu0 %v1855
    %v2265 = vpop.f32.mrf.mxu0
    %v2266 = vadd.f32 0.0, %v2265
    %v2267 = vpop.f32.mrf.mxu0
    %v2268 = vadd.f32 0.0, %v2267
    %v2269 = vpop.f32.mrf.mxu0
    %v2270 = vadd.f32 0.0, %v2269
    %v2271 = vpop.f32.mrf.mxu0
    %v2272 = vadd.f32 0.0, %v2271
    %2273 = vmatprep.mubr.bf16.mxu0 0
    %2274 = vmatmul.mubr.bf16.gmra.mxu0 %v1858
    %v2275 = vpop.f32.mrf.mxu0
    %v2276 = vadd.f32 0.0, %v2275
    %v2277 = vpop.f32.mrf.mxu0
    %v2278 = vadd.f32 0.0, %v2277
    %v2279 = vpop.f32.mrf.mxu0
    %v2280 = vadd.f32 0.0, %v2279
    %v2281 = vpop.f32.mrf.mxu0
    %v2282 = vadd.f32 0.0, %v2281
    %2283 = vmatprep.mubr.bf16.mxu0 0
    %2284 = vmatmul.mubr.bf16.gmra.mxu0 %v1861
    %v2285 = vpop.f32.mrf.mxu0
    %v2286 = vadd.f32 0.0, %v2285
    %v2287 = vpop.f32.mrf.mxu0
    %v2288 = vadd.f32 0.0, %v2287
    %v2289 = vpop.f32.mrf.mxu0
    %v2290 = vadd.f32 0.0, %v2289
    %v2291 = vpop.f32.mrf.mxu0
    %v2292 = vadd.f32 0.0, %v2291
    %2293 = vmatprep.mubr.bf16.mxu0 0
    %2294 = vmatmul.mubr.bf16.gmra.mxu0 %v1864
    %v2295 = vpop.f32.mrf.mxu0
    %v2296 = vadd.f32 0.0, %v2295
    %v2297 = vpop.f32.mrf.mxu0
    %v2298 = vadd.f32 0.0, %v2297
    %v2299 = vpop.f32.mrf.mxu0
    %v2300 = vadd.f32 0.0, %v2299
    %v2301 = vpop.f32.mrf.mxu0
    %v2302 = vadd.f32 0.0, %v2301
    %2303 = vmatprep.mubr.bf16.mxu0 0
    %2304 = vmatmul.mubr.bf16.gmra.mxu0 %v1867
    %v2305 = vpop.f32.mrf.mxu0
    %v2306 = vadd.f32 0.0, %v2305
    %v2307 = vpop.f32.mrf.mxu0
    %v2308 = vadd.f32 0.0, %v2307
    %v2309 = vpop.f32.mrf.mxu0
    %v2310 = vadd.f32 0.0, %v2309
    %v2311 = vpop.f32.mrf.mxu0
    %v2312 = vadd.f32 0.0, %v2311
    %2313 = vmatprep.mubr.bf16.mxu0 0
    %2314 = vmatmul.mubr.bf16.gmra.mxu0 %v1870
    %v2315 = vpop.f32.mrf.mxu0
    %v2316 = vadd.f32 0.0, %v2315
    %v2317 = vpop.f32.mrf.mxu0
    %v2318 = vadd.f32 0.0, %v2317
    %v2319 = vpop.f32.mrf.mxu0
    %v2320 = vadd.f32 0.0, %v2319
    %v2321 = vpop.f32.mrf.mxu0
    %v2322 = vadd.f32 0.0, %v2321
    %2323 = vdwg.mxu0
    %v2324 = vmax.f32 %v1907, 0.0
    %v2325 = vmax.f32 %v1909, 0.0
    %v2326 = vmax.f32 %v2020, 0.0
    %v2327 = vmax.f32 %v2022, 0.0
    %v2328 = vmax.f32 %v2133, 0.0
    %v2329 = vmax.f32 %v2135, 0.0
    %v2330 = vmax.f32 %v2246, 0.0
    %v2331 = vmax.f32 %v2248, 0.0
    %v2332 = vmax.f32 %v1911, 0.0
    %v2333 = vmax.f32 %v1913, 0.0
    %v2334 = vmax.f32 %v2024, 0.0
    %v2335 = vmax.f32 %v2026, 0.0
    %v2336 = vmax.f32 %v2137, 0.0
    %v2337 = vmax.f32 %v2139, 0.0
    %v2338 = vmax.f32 %v2250, 0.0
    %v2339 = vmax.f32 %v2252, 0.0
    %v2340 = vmax.f32 %v1917, 0.0
    %v2341 = vmax.f32 %v1919, 0.0
    %v2342 = vmax.f32 %v2030, 0.0
    %v2343 = vmax.f32 %v2032, 0.0
    %v2344 = vmax.f32 %v2143, 0.0
    %v2345 = vmax.f32 %v2145, 0.0
    %v2346 = vmax.f32 %v2256, 0.0
    %v2347 = vmax.f32 %v2258, 0.0
    %v2348 = vmax.f32 %v1921, 0.0
    %v2349 = vmax.f32 %v1923, 0.0
    %v2350 = vmax.f32 %v2034, 0.0
    %v2351 = vmax.f32 %v2036, 0.0
    %v2352 = vmax.f32 %v2147, 0.0
    %v2353 = vmax.f32 %v2149, 0.0
    %v2354 = vmax.f32 %v2260, 0.0
    %v2355 = vmax.f32 %v2262, 0.0
    %v2356 = vmax.f32 %v1927, 0.0
    %v2357 = vmax.f32 %v1929, 0.0
    %v2358 = vmax.f32 %v2040, 0.0
    %v2359 = vmax.f32 %v2042, 0.0
    %v2360 = vmax.f32 %v2153, 0.0
    %v2361 = vmax.f32 %v2155, 0.0
    %v2362 = vmax.f32 %v2266, 0.0
    %v2363 = vmax.f32 %v2268, 0.0
    %v2364 = vmax.f32 %v1931, 0.0
    %v2365 = vmax.f32 %v1933, 0.0
    %v2366 = vmax.f32 %v2044, 0.0
    %v2367 = vmax.f32 %v2046, 0.0
    %v2368 = vmax.f32 %v2157, 0.0
    %v2369 = vmax.f32 %v2159, 0.0
    %v2370 = vmax.f32 %v2270, 0.0
    %v2371 = vmax.f32 %v2272, 0.0
    %v2372 = vmax.f32 %v1937, 0.0
    %v2373 = vmax.f32 %v1939, 0.0
    %v2374 = vmax.f32 %v2050, 0.0
    %v2375 = vmax.f32 %v2052, 0.0
    %v2376 = vmax.f32 %v2163, 0.0
    %v2377 = vmax.f32 %v2165, 0.0
    %v2378 = vmax.f32 %v2276, 0.0
    %v2379 = vmax.f32 %v2278, 0.0
    %v2380 = vmax.f32 %v1941, 0.0
    %v2381 = vmax.f32 %v1943, 0.0
    %v2382 = vmax.f32 %v2054, 0.0
    %v2383 = vmax.f32 %v2056, 0.0
    %v2384 = vmax.f32 %v2167, 0.0
    %v2385 = vmax.f32 %v2169, 0.0
    %v2386 = vmax.f32 %v2280, 0.0
    %v2387 = vmax.f32 %v2282, 0.0
    %v2388 = vmax.f32 %v1947, 0.0
    %v2389 = vmax.f32 %v1949, 0.0
    %v2390 = vmax.f32 %v2060, 0.0
    %v2391 = vmax.f32 %v2062, 0.0
    %v2392 = vmax.f32 %v2173, 0.0
    %v2393 = vmax.f32 %v2175, 0.0
    %v2394 = vmax.f32 %v2286, 0.0
    %v2395 = vmax.f32 %v2288, 0.0
    %v2396 = vmax.f32 %v1951, 0.0
    %v2397 = vmax.f32 %v1953, 0.0
    %v2398 = vmax.f32 %v2064, 0.0
    %v2399 = vmax.f32 %v2066, 0.0
    %v2400 = vmax.f32 %v2177, 0.0
    %v2401 = vmax.f32 %v2179, 0.0
    %v2402 = vmax.f32 %v2290, 0.0
    %v2403 = vmax.f32 %v2292, 0.0
    %v2404 = vmax.f32 %v1957, 0.0
    %v2405 = vmax.f32 %v1959, 0.0
    %v2406 = vmax.f32 %v2070, 0.0
    %v2407 = vmax.f32 %v2072, 0.0
    %v2408 = vmax.f32 %v2183, 0.0
    %v2409 = vmax.f32 %v2185, 0.0
    %v2410 = vmax.f32 %v2296, 0.0
    %v2411 = vmax.f32 %v2298, 0.0
    %v2412 = vmax.f32 %v1961, 0.0
    %v2413 = vmax.f32 %v1963, 0.0
    %v2414 = vmax.f32 %v2074, 0.0
    %v2415 = vmax.f32 %v2076, 0.0
    %v2416 = vmax.f32 %v2187, 0.0
    %v2417 = vmax.f32 %v2189, 0.0
    %v2418 = vmax.f32 %v2300, 0.0
    %v2419 = vmax.f32 %v2302, 0.0
    %v2420 = vmax.f32 %v1967, 0.0
    %v2421 = vmax.f32 %v1969, 0.0
    %v2422 = vmax.f32 %v2080, 0.0
    %v2423 = vmax.f32 %v2082, 0.0
    %v2424 = vmax.f32 %v2193, 0.0
    %v2425 = vmax.f32 %v2195, 0.0
    %v2426 = vmax.f32 %v2306, 0.0
    %v2427 = vmax.f32 %v2308, 0.0
    %v2428 = vmax.f32 %v1971, 0.0
    %v2429 = vmax.f32 %v1973, 0.0
    %v2430 = vmax.f32 %v2084, 0.0
    %v2431 = vmax.f32 %v2086, 0.0
    %v2432 = vmax.f32 %v2197, 0.0
    %v2433 = vmax.f32 %v2199, 0.0
    %v2434 = vmax.f32 %v2310, 0.0
    %v2435 = vmax.f32 %v2312, 0.0
    %v2436 = vmax.f32 %v1977, 0.0
    %v2437 = vmax.f32 %v1979, 0.0
    %v2438 = vmax.f32 %v2090, 0.0
    %v2439 = vmax.f32 %v2092, 0.0
    %v2440 = vmax.f32 %v2203, 0.0
    %v2441 = vmax.f32 %v2205, 0.0
    %v2442 = vmax.f32 %v2316, 0.0
    %v2443 = vmax.f32 %v2318, 0.0
    %v2444 = vmax.f32 %v1981, 0.0
    %v2445 = vmax.f32 %v1983, 0.0
    %v2446 = vmax.f32 %v2094, 0.0
    %v2447 = vmax.f32 %v2096, 0.0
    %v2448 = vmax.f32 %v2207, 0.0
    %v2449 = vmax.f32 %v2209, 0.0
    %v2450 = vmax.f32 %v2320, 0.0
    %v2451 = vmax.f32 %v2322, 0.0
    %v2452 = vpack.c.bf16 %v2332, %v2324
    %v2453 = vpack.c.bf16 %v2333, %v2325
    %v2454 = vpack.c.bf16 %v2334, %v2326
    %v2455 = vpack.c.bf16 %v2335, %v2327
    %v2456 = vpack.c.bf16 %v2336, %v2328
    %v2457 = vpack.c.bf16 %v2337, %v2329
    %v2458 = vpack.c.bf16 %v2338, %v2330
    %v2459 = vpack.c.bf16 %v2339, %v2331
    %v2460 = vpack.c.bf16 %v2348, %v2340
    %v2461 = vpack.c.bf16 %v2349, %v2341
    %v2462 = vpack.c.bf16 %v2350, %v2342
    %v2463 = vpack.c.bf16 %v2351, %v2343
    %v2464 = vpack.c.bf16 %v2352, %v2344
    %v2465 = vpack.c.bf16 %v2353, %v2345
    %v2466 = vpack.c.bf16 %v2354, %v2346
    %v2467 = vpack.c.bf16 %v2355, %v2347
    %v2468 = vpack.c.bf16 %v2364, %v2356
    %v2469 = vpack.c.bf16 %v2365, %v2357
    %v2470 = vpack.c.bf16 %v2366, %v2358
    %v2471 = vpack.c.bf16 %v2367, %v2359
    %v2472 = vpack.c.bf16 %v2368, %v2360
    %v2473 = vpack.c.bf16 %v2369, %v2361
    %v2474 = vpack.c.bf16 %v2370, %v2362
    %v2475 = vpack.c.bf16 %v2371, %v2363
    %v2476 = vpack.c.bf16 %v2380, %v2372
    %v2477 = vpack.c.bf16 %v2381, %v2373
    %v2478 = vpack.c.bf16 %v2382, %v2374
    %v2479 = vpack.c.bf16 %v2383, %v2375
    %v2480 = vpack.c.bf16 %v2384, %v2376
    %v2481 = vpack.c.bf16 %v2385, %v2377
    %v2482 = vpack.c.bf16 %v2386, %v2378
    %v2483 = vpack.c.bf16 %v2387, %v2379
    %v2484 = vpack.c.bf16 %v2396, %v2388
    %v2485 = vpack.c.bf16 %v2397, %v2389
    %v2486 = vpack.c.bf16 %v2398, %v2390
    %v2487 = vpack.c.bf16 %v2399, %v2391
    %v2488 = vpack.c.bf16 %v2400, %v2392
    %v2489 = vpack.c.bf16 %v2401, %v2393
    %v2490 = vpack.c.bf16 %v2402, %v2394
    %v2491 = vpack.c.bf16 %v2403, %v2395
    %v2492 = vpack.c.bf16 %v2412, %v2404
    %v2493 = vpack.c.bf16 %v2413, %v2405
    %v2494 = vpack.c.bf16 %v2414, %v2406
    %v2495 = vpack.c.bf16 %v2415, %v2407
    %v2496 = vpack.c.bf16 %v2416, %v2408
    %v2497 = vpack.c.bf16 %v2417, %v2409
    %v2498 = vpack.c.bf16 %v2418, %v2410
    %v2499 = vpack.c.bf16 %v2419, %v2411
    %v2500 = vpack.c.bf16 %v2428, %v2420
    %v2501 = vpack.c.bf16 %v2429, %v2421
    %v2502 = vpack.c.bf16 %v2430, %v2422
    %v2503 = vpack.c.bf16 %v2431, %v2423
    %v2504 = vpack.c.bf16 %v2432, %v2424
    %v2505 = vpack.c.bf16 %v2433, %v2425
    %v2506 = vpack.c.bf16 %v2434, %v2426
    %v2507 = vpack.c.bf16 %v2435, %v2427
    %v2508 = vpack.c.bf16 %v2444, %v2436
    %v2509 = vpack.c.bf16 %v2445, %v2437
    %v2510 = vpack.c.bf16 %v2446, %v2438
    %v2511 = vpack.c.bf16 %v2447, %v2439
    %v2512 = vpack.c.bf16 %v2448, %v2440
    %v2513 = vpack.c.bf16 %v2449, %v2441
    %v2514 = vpack.c.bf16 %v2450, %v2442
    %v2515 = vpack.c.bf16 %v2451, %v2443
    %v2516 = vld [vmem:[%s1829 + $0x4] sm:$0xf]
    %v2517 = vpack.c.bf16 %v2516, %v2516
    %2518 = vxpose.xlu0.c.b16.start [1/8] %v2517, 128
    %2519 = vxpose.xlu0.c.b16.cont [2/8] 0, 128
    %2520 = vxpose.xlu0.c.b16.cont [3/8] 0, 128
    %2521 = vxpose.xlu0.c.b16.cont [4/8] 0, 128
    %2522 = vxpose.xlu0.c.b16.cont [5/8] 0, 128
    %2523 = vxpose.xlu0.c.b16.cont [6/8] 0, 128
    %2524 = vxpose.xlu0.c.b16.cont [7/8] 0, 128
    %2525 = vxpose.xlu0.c.b16.end [8/8] 0, 128
    %v2526 = vpop.trf.xlu0
    %v2527 = vpop.trf.xlu0
    %v2528 = vpop.trf.xlu0
    %v2529 = vpop.trf.xlu0
    %v2530 = vpop.trf.xlu0
    %v2531 = vpop.trf.xlu0
    %v2532 = vpop.trf.xlu0
    %v2533 = vpop.trf.xlu0
    %v2535 = vsel %vm121, %v2526, 0
    %v2538 = vsel %vm121, %v2527, 0
    %v2541 = vsel %vm121, %v2528, 0
    %v2544 = vsel %vm121, %v2529, 0
    %v2547 = vsel %vm121, %v2530, 0
    %v2550 = vsel %vm121, %v2531, 0
    %v2553 = vsel %vm121, %v2532, 0
    %v2556 = vsel %vm121, %v2533, 0
    %2558 = vmatprep.subr.bf16.mxu0 0
    %2559 = vmatpush1.bf16.msra.mxu0 0
    %2560 = vmatprep.subr.bf16.mxu0 0
    %2561 = vmatpush1.bf16.msra.mxu0 0
    %2562 = vmatprep.subr.bf16.mxu0 0
    %2563 = vmatpush1.bf16.msra.mxu0 0
    %2564 = vmatprep.subr.bf16.mxu0 0
    %2565 = vmatpush1.bf16.msra.mxu0 0
    %2566 = vmatprep.subr.bf16.mxu0 0
    %2567 = vmatpush1.bf16.msra.mxu0 0
    %2568 = vmatprep.subr.bf16.mxu0 0
    %2569 = vmatpush1.bf16.msra.mxu0 0
    %2570 = vmatprep.subr.bf16.mxu0 0
    %2571 = vmatpush1.bf16.msra.mxu0 0
    %2572 = vmatprep.subr.bf16.mxu0 %v151
    %2573 = vmatpush1.bf16.msra.mxu0 %v148
    %2574 = vmatprep.subr.bf16.mxu0 0
    %2575 = vmatpush2.bf16.msra.mxu0 0
    %2576 = vmatprep.subr.bf16.mxu0 0
    %2577 = vmatpush2.bf16.msra.mxu0 0
    %2578 = vmatprep.subr.bf16.mxu0 0
    %2579 = vmatpush2.bf16.msra.mxu0 0
    %2580 = vmatprep.subr.bf16.mxu0 0
    %2581 = vmatpush2.bf16.msra.mxu0 0
    %2582 = vmatprep.subr.bf16.mxu0 0
    %2583 = vmatpush2.bf16.msra.mxu0 0
    %2584 = vmatprep.subr.bf16.mxu0 0
    %2585 = vmatpush2.bf16.msra.mxu0 0
    %2586 = vmatprep.subr.bf16.mxu0 0
    %2587 = vmatpush2.bf16.msra.mxu0 0
    %2588 = vmatprep.subr.bf16.mxu0 0
    %2589 = vmatpush2.bf16.msra.mxu0 0
    %2590 = vmatprep.mubr.bf16.mxu0 0
    %2591 = vmatmul.mubr.bf16.gmra.mxu0 %v2535
    %v2592 = vpop.f32.mrf.mxu0
    %v2593 = vadd.f32 0.0, %v2592
    %v2594 = vpop.f32.mrf.mxu0
    %v2595 = vadd.f32 0.0, %v2594
    %v2596 = vpop.f32.mrf.mxu0
    %v2597 = vadd.f32 0.0, %v2596
    %v2598 = vpop.f32.mrf.mxu0
    %v2599 = vadd.f32 0.0, %v2598
    %2600 = vmatprep.mubr.bf16.mxu0 0
    %2601 = vmatmul.mubr.bf16.gmra.mxu0 %v2538
    %v2602 = vpop.f32.mrf.mxu0
    %v2603 = vadd.f32 0.0, %v2602
    %v2604 = vpop.f32.mrf.mxu0
    %v2605 = vadd.f32 0.0, %v2604
    %v2606 = vpop.f32.mrf.mxu0
    %v2607 = vadd.f32 0.0, %v2606
    %v2608 = vpop.f32.mrf.mxu0
    %v2609 = vadd.f32 0.0, %v2608
    %2610 = vmatprep.mubr.bf16.mxu0 0
    %2611 = vmatmul.mubr.bf16.gmra.mxu0 %v2541
    %v2612 = vpop.f32.mrf.mxu0
    %v2613 = vadd.f32 0.0, %v2612
    %v2614 = vpop.f32.mrf.mxu0
    %v2615 = vadd.f32 0.0, %v2614
    %v2616 = vpop.f32.mrf.mxu0
    %v2617 = vadd.f32 0.0, %v2616
    %v2618 = vpop.f32.mrf.mxu0
    %v2619 = vadd.f32 0.0, %v2618
    %2620 = vmatprep.mubr.bf16.mxu0 0
    %2621 = vmatmul.mubr.bf16.gmra.mxu0 %v2544
    %v2622 = vpop.f32.mrf.mxu0
    %v2623 = vadd.f32 0.0, %v2622
    %v2624 = vpop.f32.mrf.mxu0
    %v2625 = vadd.f32 0.0, %v2624
    %v2626 = vpop.f32.mrf.mxu0
    %v2627 = vadd.f32 0.0, %v2626
    %v2628 = vpop.f32.mrf.mxu0
    %v2629 = vadd.f32 0.0, %v2628
    %2630 = vmatprep.mubr.bf16.mxu0 0
    %2631 = vmatmul.mubr.bf16.gmra.mxu0 %v2547
    %v2632 = vpop.f32.mrf.mxu0
    %v2633 = vadd.f32 0.0, %v2632
    %v2634 = vpop.f32.mrf.mxu0
    %v2635 = vadd.f32 0.0, %v2634
    %v2636 = vpop.f32.mrf.mxu0
    %v2637 = vadd.f32 0.0, %v2636
    %v2638 = vpop.f32.mrf.mxu0
    %v2639 = vadd.f32 0.0, %v2638
    %2640 = vmatprep.mubr.bf16.mxu0 0
    %2641 = vmatmul.mubr.bf16.gmra.mxu0 %v2550
    %v2642 = vpop.f32.mrf.mxu0
    %v2643 = vadd.f32 0.0, %v2642
    %v2644 = vpop.f32.mrf.mxu0
    %v2645 = vadd.f32 0.0, %v2644
    %v2646 = vpop.f32.mrf.mxu0
    %v2647 = vadd.f32 0.0, %v2646
    %v2648 = vpop.f32.mrf.mxu0
    %v2649 = vadd.f32 0.0, %v2648
    %2650 = vmatprep.mubr.bf16.mxu0 0
    %2651 = vmatmul.mubr.bf16.gmra.mxu0 %v2553
    %v2652 = vpop.f32.mrf.mxu0
    %v2653 = vadd.f32 0.0, %v2652
    %v2654 = vpop.f32.mrf.mxu0
    %v2655 = vadd.f32 0.0, %v2654
    %v2656 = vpop.f32.mrf.mxu0
    %v2657 = vadd.f32 0.0, %v2656
    %v2658 = vpop.f32.mrf.mxu0
    %v2659 = vadd.f32 0.0, %v2658
    %2660 = vmatprep.mubr.bf16.mxu0 0
    %2661 = vmatmul.mubr.bf16.gmra.mxu0 %v2556
    %v2662 = vpop.f32.mrf.mxu0
    %v2663 = vadd.f32 0.0, %v2662
    %v2664 = vpop.f32.mrf.mxu0
    %v2665 = vadd.f32 0.0, %v2664
    %v2666 = vpop.f32.mrf.mxu0
    %v2667 = vadd.f32 0.0, %v2666
    %v2668 = vpop.f32.mrf.mxu0
    %v2669 = vadd.f32 0.0, %v2668
    %2670 = vdwg.mxu0
    %2671 = vmatprep.subr.bf16.mxu0 0
    %2672 = vmatpush1.bf16.msra.mxu0 0
    %2673 = vmatprep.subr.bf16.mxu0 0
    %2674 = vmatpush1.bf16.msra.mxu0 0
    %2675 = vmatprep.subr.bf16.mxu0 0
    %2676 = vmatpush1.bf16.msra.mxu0 0
    %2677 = vmatprep.subr.bf16.mxu0 0
    %2678 = vmatpush1.bf16.msra.mxu0 0
    %2679 = vmatprep.subr.bf16.mxu0 0
    %2680 = vmatpush1.bf16.msra.mxu0 0
    %2681 = vmatprep.subr.bf16.mxu0 0
    %2682 = vmatpush1.bf16.msra.mxu0 0
    %2683 = vmatprep.subr.bf16.mxu0 0
    %2684 = vmatpush1.bf16.msra.mxu0 0
    %2685 = vmatprep.subr.bf16.mxu0 %v157
    %2686 = vmatpush1.bf16.msra.mxu0 %v154
    %2687 = vmatprep.subr.bf16.mxu0 0
    %2688 = vmatpush2.bf16.msra.mxu0 0
    %2689 = vmatprep.subr.bf16.mxu0 0
    %2690 = vmatpush2.bf16.msra.mxu0 0
    %2691 = vmatprep.subr.bf16.mxu0 0
    %2692 = vmatpush2.bf16.msra.mxu0 0
    %2693 = vmatprep.subr.bf16.mxu0 0
    %2694 = vmatpush2.bf16.msra.mxu0 0
    %2695 = vmatprep.subr.bf16.mxu0 0
    %2696 = vmatpush2.bf16.msra.mxu0 0
    %2697 = vmatprep.subr.bf16.mxu0 0
    %2698 = vmatpush2.bf16.msra.mxu0 0
    %2699 = vmatprep.subr.bf16.mxu0 0
    %2700 = vmatpush2.bf16.msra.mxu0 0
    %2701 = vmatprep.subr.bf16.mxu0 0
    %2702 = vmatpush2.bf16.msra.mxu0 0
    %2703 = vmatprep.mubr.bf16.mxu0 0
    %2704 = vmatmul.mubr.bf16.gmra.mxu0 %v2535
    %v2705 = vpop.f32.mrf.mxu0
    %v2706 = vadd.f32 0.0, %v2705
    %v2707 = vpop.f32.mrf.mxu0
    %v2708 = vadd.f32 0.0, %v2707
    %v2709 = vpop.f32.mrf.mxu0
    %v2710 = vadd.f32 0.0, %v2709
    %v2711 = vpop.f32.mrf.mxu0
    %v2712 = vadd.f32 0.0, %v2711
    %2713 = vmatprep.mubr.bf16.mxu0 0
    %2714 = vmatmul.mubr.bf16.gmra.mxu0 %v2538
    %v2715 = vpop.f32.mrf.mxu0
    %v2716 = vadd.f32 0.0, %v2715
    %v2717 = vpop.f32.mrf.mxu0
    %v2718 = vadd.f32 0.0, %v2717
    %v2719 = vpop.f32.mrf.mxu0
    %v2720 = vadd.f32 0.0, %v2719
    %v2721 = vpop.f32.mrf.mxu0
    %v2722 = vadd.f32 0.0, %v2721
    %2723 = vmatprep.mubr.bf16.mxu0 0
    %2724 = vmatmul.mubr.bf16.gmra.mxu0 %v2541
    %v2725 = vpop.f32.mrf.mxu0
    %v2726 = vadd.f32 0.0, %v2725
    %v2727 = vpop.f32.mrf.mxu0
    %v2728 = vadd.f32 0.0, %v2727
    %v2729 = vpop.f32.mrf.mxu0
    %v2730 = vadd.f32 0.0, %v2729
    %v2731 = vpop.f32.mrf.mxu0
    %v2732 = vadd.f32 0.0, %v2731
    %2733 = vmatprep.mubr.bf16.mxu0 0
    %2734 = vmatmul.mubr.bf16.gmra.mxu0 %v2544
    %v2735 = vpop.f32.mrf.mxu0
    %v2736 = vadd.f32 0.0, %v2735
    %v2737 = vpop.f32.mrf.mxu0
    %v2738 = vadd.f32 0.0, %v2737
    %v2739 = vpop.f32.mrf.mxu0
    %v2740 = vadd.f32 0.0, %v2739
    %v2741 = vpop.f32.mrf.mxu0
    %v2742 = vadd.f32 0.0, %v2741
    %2743 = vmatprep.mubr.bf16.mxu0 0
    %2744 = vmatmul.mubr.bf16.gmra.mxu0 %v2547
    %v2745 = vpop.f32.mrf.mxu0
    %v2746 = vadd.f32 0.0, %v2745
    %v2747 = vpop.f32.mrf.mxu0
    %v2748 = vadd.f32 0.0, %v2747
    %v2749 = vpop.f32.mrf.mxu0
    %v2750 = vadd.f32 0.0, %v2749
    %v2751 = vpop.f32.mrf.mxu0
    %v2752 = vadd.f32 0.0, %v2751
    %2753 = vmatprep.mubr.bf16.mxu0 0
    %2754 = vmatmul.mubr.bf16.gmra.mxu0 %v2550
    %v2755 = vpop.f32.mrf.mxu0
    %v2756 = vadd.f32 0.0, %v2755
    %v2757 = vpop.f32.mrf.mxu0
    %v2758 = vadd.f32 0.0, %v2757
    %v2759 = vpop.f32.mrf.mxu0
    %v2760 = vadd.f32 0.0, %v2759
    %v2761 = vpop.f32.mrf.mxu0
    %v2762 = vadd.f32 0.0, %v2761
    %2763 = vmatprep.mubr.bf16.mxu0 0
    %2764 = vmatmul.mubr.bf16.gmra.mxu0 %v2553
    %v2765 = vpop.f32.mrf.mxu0
    %v2766 = vadd.f32 0.0, %v2765
    %v2767 = vpop.f32.mrf.mxu0
    %v2768 = vadd.f32 0.0, %v2767
    %v2769 = vpop.f32.mrf.mxu0
    %v2770 = vadd.f32 0.0, %v2769
    %v2771 = vpop.f32.mrf.mxu0
    %v2772 = vadd.f32 0.0, %v2771
    %2773 = vmatprep.mubr.bf16.mxu0 0
    %2774 = vmatmul.mubr.bf16.gmra.mxu0 %v2556
    %v2775 = vpop.f32.mrf.mxu0
    %v2776 = vadd.f32 0.0, %v2775
    %v2777 = vpop.f32.mrf.mxu0
    %v2778 = vadd.f32 0.0, %v2777
    %v2779 = vpop.f32.mrf.mxu0
    %v2780 = vadd.f32 0.0, %v2779
    %v2781 = vpop.f32.mrf.mxu0
    %v2782 = vadd.f32 0.0, %v2781
    %2783 = vdwg.mxu0
    %2784 = vmatprep.subr.bf16.mxu0 0
    %2785 = vmatpush1.bf16.msra.mxu0 0
    %2786 = vmatprep.subr.bf16.mxu0 0
    %2787 = vmatpush1.bf16.msra.mxu0 0
    %2788 = vmatprep.subr.bf16.mxu0 0
    %2789 = vmatpush1.bf16.msra.mxu0 0
    %2790 = vmatprep.subr.bf16.mxu0 0
    %2791 = vmatpush1.bf16.msra.mxu0 0
    %2792 = vmatprep.subr.bf16.mxu0 0
    %2793 = vmatpush1.bf16.msra.mxu0 0
    %2794 = vmatprep.subr.bf16.mxu0 0
    %2795 = vmatpush1.bf16.msra.mxu0 0
    %2796 = vmatprep.subr.bf16.mxu0 0
    %2797 = vmatpush1.bf16.msra.mxu0 0
    %2798 = vmatprep.subr.bf16.mxu0 %v163
    %2799 = vmatpush1.bf16.msra.mxu0 %v160
    %2800 = vmatprep.subr.bf16.mxu0 0
    %2801 = vmatpush2.bf16.msra.mxu0 0
    %2802 = vmatprep.subr.bf16.mxu0 0
    %2803 = vmatpush2.bf16.msra.mxu0 0
    %2804 = vmatprep.subr.bf16.mxu0 0
    %2805 = vmatpush2.bf16.msra.mxu0 0
    %2806 = vmatprep.subr.bf16.mxu0 0
    %2807 = vmatpush2.bf16.msra.mxu0 0
    %2808 = vmatprep.subr.bf16.mxu0 0
    %2809 = vmatpush2.bf16.msra.mxu0 0
    %2810 = vmatprep.subr.bf16.mxu0 0
    %2811 = vmatpush2.bf16.msra.mxu0 0
    %2812 = vmatprep.subr.bf16.mxu0 0
    %2813 = vmatpush2.bf16.msra.mxu0 0
    %2814 = vmatprep.subr.bf16.mxu0 0
    %2815 = vmatpush2.bf16.msra.mxu0 0
    %2816 = vmatprep.mubr.bf16.mxu0 0
    %2817 = vmatmul.mubr.bf16.gmra.mxu0 %v2535
    %v2818 = vpop.f32.mrf.mxu0
    %v2819 = vadd.f32 0.0, %v2818
    %v2820 = vpop.f32.mrf.mxu0
    %v2821 = vadd.f32 0.0, %v2820
    %v2822 = vpop.f32.mrf.mxu0
    %v2823 = vadd.f32 0.0, %v2822
    %v2824 = vpop.f32.mrf.mxu0
    %v2825 = vadd.f32 0.0, %v2824
    %2826 = vmatprep.mubr.bf16.mxu0 0
    %2827 = vmatmul.mubr.bf16.gmra.mxu0 %v2538
    %v2828 = vpop.f32.mrf.mxu0
    %v2829 = vadd.f32 0.0, %v2828
    %v2830 = vpop.f32.mrf.mxu0
    %v2831 = vadd.f32 0.0, %v2830
    %v2832 = vpop.f32.mrf.mxu0
    %v2833 = vadd.f32 0.0, %v2832
    %v2834 = vpop.f32.mrf.mxu0
    %v2835 = vadd.f32 0.0, %v2834
    %2836 = vmatprep.mubr.bf16.mxu0 0
    %2837 = vmatmul.mubr.bf16.gmra.mxu0 %v2541
    %v2838 = vpop.f32.mrf.mxu0
    %v2839 = vadd.f32 0.0, %v2838
    %v2840 = vpop.f32.mrf.mxu0
    %v2841 = vadd.f32 0.0, %v2840
    %v2842 = vpop.f32.mrf.mxu0
    %v2843 = vadd.f32 0.0, %v2842
    %v2844 = vpop.f32.mrf.mxu0
    %v2845 = vadd.f32 0.0, %v2844
    %2846 = vmatprep.mubr.bf16.mxu0 0
    %2847 = vmatmul.mubr.bf16.gmra.mxu0 %v2544
    %v2848 = vpop.f32.mrf.mxu0
    %v2849 = vadd.f32 0.0, %v2848
    %v2850 = vpop.f32.mrf.mxu0
    %v2851 = vadd.f32 0.0, %v2850
    %v2852 = vpop.f32.mrf.mxu0
    %v2853 = vadd.f32 0.0, %v2852
    %v2854 = vpop.f32.mrf.mxu0
    %v2855 = vadd.f32 0.0, %v2854
    %2856 = vmatprep.mubr.bf16.mxu0 0
    %2857 = vmatmul.mubr.bf16.gmra.mxu0 %v2547
    %v2858 = vpop.f32.mrf.mxu0
    %v2859 = vadd.f32 0.0, %v2858
    %v2860 = vpop.f32.mrf.mxu0
    %v2861 = vadd.f32 0.0, %v2860
    %v2862 = vpop.f32.mrf.mxu0
    %v2863 = vadd.f32 0.0, %v2862
    %v2864 = vpop.f32.mrf.mxu0
    %v2865 = vadd.f32 0.0, %v2864
    %2866 = vmatprep.mubr.bf16.mxu0 0
    %2867 = vmatmul.mubr.bf16.gmra.mxu0 %v2550
    %v2868 = vpop.f32.mrf.mxu0
    %v2869 = vadd.f32 0.0, %v2868
    %v2870 = vpop.f32.mrf.mxu0
    %v2871 = vadd.f32 0.0, %v2870
    %v2872 = vpop.f32.mrf.mxu0
    %v2873 = vadd.f32 0.0, %v2872
    %v2874 = vpop.f32.mrf.mxu0
    %v2875 = vadd.f32 0.0, %v2874
    %2876 = vmatprep.mubr.bf16.mxu0 0
    %2877 = vmatmul.mubr.bf16.gmra.mxu0 %v2553
    %v2878 = vpop.f32.mrf.mxu0
    %v2879 = vadd.f32 0.0, %v2878
    %v2880 = vpop.f32.mrf.mxu0
    %v2881 = vadd.f32 0.0, %v2880
    %v2882 = vpop.f32.mrf.mxu0
    %v2883 = vadd.f32 0.0, %v2882
    %v2884 = vpop.f32.mrf.mxu0
    %v2885 = vadd.f32 0.0, %v2884
    %2886 = vmatprep.mubr.bf16.mxu0 0
    %2887 = vmatmul.mubr.bf16.gmra.mxu0 %v2556
    %v2888 = vpop.f32.mrf.mxu0
    %v2889 = vadd.f32 0.0, %v2888
    %v2890 = vpop.f32.mrf.mxu0
    %v2891 = vadd.f32 0.0, %v2890
    %v2892 = vpop.f32.mrf.mxu0
    %v2893 = vadd.f32 0.0, %v2892
    %v2894 = vpop.f32.mrf.mxu0
    %v2895 = vadd.f32 0.0, %v2894
    %2896 = vdwg.mxu0
    %2897 = vmatprep.subr.bf16.mxu0 0
    %2898 = vmatpush1.bf16.msra.mxu0 0
    %2899 = vmatprep.subr.bf16.mxu0 0
    %2900 = vmatpush1.bf16.msra.mxu0 0
    %2901 = vmatprep.subr.bf16.mxu0 0
    %2902 = vmatpush1.bf16.msra.mxu0 0
    %2903 = vmatprep.subr.bf16.mxu0 0
    %2904 = vmatpush1.bf16.msra.mxu0 0
    %2905 = vmatprep.subr.bf16.mxu0 0
    %2906 = vmatpush1.bf16.msra.mxu0 0
    %2907 = vmatprep.subr.bf16.mxu0 0
    %2908 = vmatpush1.bf16.msra.mxu0 0
    %2909 = vmatprep.subr.bf16.mxu0 0
    %2910 = vmatpush1.bf16.msra.mxu0 0
    %2911 = vmatprep.subr.bf16.mxu0 %v169
    %2912 = vmatpush1.bf16.msra.mxu0 %v166
    %2913 = vmatprep.subr.bf16.mxu0 0
    %2914 = vmatpush2.bf16.msra.mxu0 0
    %2915 = vmatprep.subr.bf16.mxu0 0
    %2916 = vmatpush2.bf16.msra.mxu0 0
    %2917 = vmatprep.subr.bf16.mxu0 0
    %2918 = vmatpush2.bf16.msra.mxu0 0
    %2919 = vmatprep.subr.bf16.mxu0 0
    %2920 = vmatpush2.bf16.msra.mxu0 0
    %2921 = vmatprep.subr.bf16.mxu0 0
    %2922 = vmatpush2.bf16.msra.mxu0 0
    %2923 = vmatprep.subr.bf16.mxu0 0
    %2924 = vmatpush2.bf16.msra.mxu0 0
    %2925 = vmatprep.subr.bf16.mxu0 0
    %2926 = vmatpush2.bf16.msra.mxu0 0
    %2927 = vmatprep.subr.bf16.mxu0 0
    %2928 = vmatpush2.bf16.msra.mxu0 0
    %2929 = vmatprep.mubr.bf16.mxu0 0
    %2930 = vmatmul.mubr.bf16.gmra.mxu0 %v2535
    %v2931 = vpop.f32.mrf.mxu0
    %v2932 = vadd.f32 0.0, %v2931
    %v2933 = vpop.f32.mrf.mxu0
    %v2934 = vadd.f32 0.0, %v2933
    %v2935 = vpop.f32.mrf.mxu0
    %v2936 = vadd.f32 0.0, %v2935
    %v2937 = vpop.f32.mrf.mxu0
    %v2938 = vadd.f32 0.0, %v2937
    %2939 = vmatprep.mubr.bf16.mxu0 0
    %2940 = vmatmul.mubr.bf16.gmra.mxu0 %v2538
    %v2941 = vpop.f32.mrf.mxu0
    %v2942 = vadd.f32 0.0, %v2941
    %v2943 = vpop.f32.mrf.mxu0
    %v2944 = vadd.f32 0.0, %v2943
    %v2945 = vpop.f32.mrf.mxu0
    %v2946 = vadd.f32 0.0, %v2945
    %v2947 = vpop.f32.mrf.mxu0
    %v2948 = vadd.f32 0.0, %v2947
    %2949 = vmatprep.mubr.bf16.mxu0 0
    %2950 = vmatmul.mubr.bf16.gmra.mxu0 %v2541
    %v2951 = vpop.f32.mrf.mxu0
    %v2952 = vadd.f32 0.0, %v2951
    %v2953 = vpop.f32.mrf.mxu0
    %v2954 = vadd.f32 0.0, %v2953
    %v2955 = vpop.f32.mrf.mxu0
    %v2956 = vadd.f32 0.0, %v2955
    %v2957 = vpop.f32.mrf.mxu0
    %v2958 = vadd.f32 0.0, %v2957
    %2959 = vmatprep.mubr.bf16.mxu0 0
    %2960 = vmatmul.mubr.bf16.gmra.mxu0 %v2544
    %v2961 = vpop.f32.mrf.mxu0
    %v2962 = vadd.f32 0.0, %v2961
    %v2963 = vpop.f32.mrf.mxu0
    %v2964 = vadd.f32 0.0, %v2963
    %v2965 = vpop.f32.mrf.mxu0
    %v2966 = vadd.f32 0.0, %v2965
    %v2967 = vpop.f32.mrf.mxu0
    %v2968 = vadd.f32 0.0, %v2967
    %2969 = vmatprep.mubr.bf16.mxu0 0
    %2970 = vmatmul.mubr.bf16.gmra.mxu0 %v2547
    %v2971 = vpop.f32.mrf.mxu0
    %v2972 = vadd.f32 0.0, %v2971
    %v2973 = vpop.f32.mrf.mxu0
    %v2974 = vadd.f32 0.0, %v2973
    %v2975 = vpop.f32.mrf.mxu0
    %v2976 = vadd.f32 0.0, %v2975
    %v2977 = vpop.f32.mrf.mxu0
    %v2978 = vadd.f32 0.0, %v2977
    %2979 = vmatprep.mubr.bf16.mxu0 0
    %2980 = vmatmul.mubr.bf16.gmra.mxu0 %v2550
    %v2981 = vpop.f32.mrf.mxu0
    %v2982 = vadd.f32 0.0, %v2981
    %v2983 = vpop.f32.mrf.mxu0
    %v2984 = vadd.f32 0.0, %v2983
    %v2985 = vpop.f32.mrf.mxu0
    %v2986 = vadd.f32 0.0, %v2985
    %v2987 = vpop.f32.mrf.mxu0
    %v2988 = vadd.f32 0.0, %v2987
    %2989 = vmatprep.mubr.bf16.mxu0 0
    %2990 = vmatmul.mubr.bf16.gmra.mxu0 %v2553
    %v2991 = vpop.f32.mrf.mxu0
    %v2992 = vadd.f32 0.0, %v2991
    %v2993 = vpop.f32.mrf.mxu0
    %v2994 = vadd.f32 0.0, %v2993
    %v2995 = vpop.f32.mrf.mxu0
    %v2996 = vadd.f32 0.0, %v2995
    %v2997 = vpop.f32.mrf.mxu0
    %v2998 = vadd.f32 0.0, %v2997
    %2999 = vmatprep.mubr.bf16.mxu0 0
    %3000 = vmatmul.mubr.bf16.gmra.mxu0 %v2556
    %v3001 = vpop.f32.mrf.mxu0
    %v3002 = vadd.f32 0.0, %v3001
    %v3003 = vpop.f32.mrf.mxu0
    %v3004 = vadd.f32 0.0, %v3003
    %v3005 = vpop.f32.mrf.mxu0
    %v3006 = vadd.f32 0.0, %v3005
    %v3007 = vpop.f32.mrf.mxu0
    %v3008 = vadd.f32 0.0, %v3007
    %3009 = vdwg.mxu0
    %v3010 = vmax.f32 %v2593, 0.0
    %v3011 = vmax.f32 %v2595, 0.0
    %v3012 = vmax.f32 %v2706, 0.0
    %v3013 = vmax.f32 %v2708, 0.0
    %v3014 = vmax.f32 %v2819, 0.0
    %v3015 = vmax.f32 %v2821, 0.0
    %v3016 = vmax.f32 %v2932, 0.0
    %v3017 = vmax.f32 %v2934, 0.0
    %v3018 = vmax.f32 %v2597, 0.0
    %v3019 = vmax.f32 %v2599, 0.0
    %v3020 = vmax.f32 %v2710, 0.0
    %v3021 = vmax.f32 %v2712, 0.0
    %v3022 = vmax.f32 %v2823, 0.0
    %v3023 = vmax.f32 %v2825, 0.0
    %v3024 = vmax.f32 %v2936, 0.0
    %v3025 = vmax.f32 %v2938, 0.0
    %v3026 = vmax.f32 %v2603, 0.0
    %v3027 = vmax.f32 %v2605, 0.0
    %v3028 = vmax.f32 %v2716, 0.0
    %v3029 = vmax.f32 %v2718, 0.0
    %v3030 = vmax.f32 %v2829, 0.0
    %v3031 = vmax.f32 %v2831, 0.0
    %v3032 = vmax.f32 %v2942, 0.0
    %v3033 = vmax.f32 %v2944, 0.0
    %v3034 = vmax.f32 %v2607, 0.0
    %v3035 = vmax.f32 %v2609, 0.0
    %v3036 = vmax.f32 %v2720, 0.0
    %v3037 = vmax.f32 %v2722, 0.0
    %v3038 = vmax.f32 %v2833, 0.0
    %v3039 = vmax.f32 %v2835, 0.0
    %v3040 = vmax.f32 %v2946, 0.0
    %v3041 = vmax.f32 %v2948, 0.0
    %v3042 = vmax.f32 %v2613, 0.0
    %v3043 = vmax.f32 %v2615, 0.0
    %v3044 = vmax.f32 %v2726, 0.0
    %v3045 = vmax.f32 %v2728, 0.0
    %v3046 = vmax.f32 %v2839, 0.0
    %v3047 = vmax.f32 %v2841, 0.0
    %v3048 = vmax.f32 %v2952, 0.0
    %v3049 = vmax.f32 %v2954, 0.0
    %v3050 = vmax.f32 %v2617, 0.0
    %v3051 = vmax.f32 %v2619, 0.0
    %v3052 = vmax.f32 %v2730, 0.0
    %v3053 = vmax.f32 %v2732, 0.0
    %v3054 = vmax.f32 %v2843, 0.0
    %v3055 = vmax.f32 %v2845, 0.0
    %v3056 = vmax.f32 %v2956, 0.0
    %v3057 = vmax.f32 %v2958, 0.0
    %v3058 = vmax.f32 %v2623, 0.0
    %v3059 = vmax.f32 %v2625, 0.0
    %v3060 = vmax.f32 %v2736, 0.0
    %v3061 = vmax.f32 %v2738, 0.0
    %v3062 = vmax.f32 %v2849, 0.0
    %v3063 = vmax.f32 %v2851, 0.0
    %v3064 = vmax.f32 %v2962, 0.0
    %v3065 = vmax.f32 %v2964, 0.0
    %v3066 = vmax.f32 %v2627, 0.0
    %v3067 = vmax.f32 %v2629, 0.0
    %v3068 = vmax.f32 %v2740, 0.0
    %v3069 = vmax.f32 %v2742, 0.0
    %v3070 = vmax.f32 %v2853, 0.0
    %v3071 = vmax.f32 %v2855, 0.0
    %v3072 = vmax.f32 %v2966, 0.0
    %v3073 = vmax.f32 %v2968, 0.0
    %v3074 = vmax.f32 %v2633, 0.0
    %v3075 = vmax.f32 %v2635, 0.0
    %v3076 = vmax.f32 %v2746, 0.0
    %v3077 = vmax.f32 %v2748, 0.0
    %v3078 = vmax.f32 %v2859, 0.0
    %v3079 = vmax.f32 %v2861, 0.0
    %v3080 = vmax.f32 %v2972, 0.0
    %v3081 = vmax.f32 %v2974, 0.0
    %v3082 = vmax.f32 %v2637, 0.0
    %v3083 = vmax.f32 %v2639, 0.0
    %v3084 = vmax.f32 %v2750, 0.0
    %v3085 = vmax.f32 %v2752, 0.0
    %v3086 = vmax.f32 %v2863, 0.0
    %v3087 = vmax.f32 %v2865, 0.0
    %v3088 = vmax.f32 %v2976, 0.0
    %v3089 = vmax.f32 %v2978, 0.0
    %v3090 = vmax.f32 %v2643, 0.0
    %v3091 = vmax.f32 %v2645, 0.0
    %v3092 = vmax.f32 %v2756, 0.0
    %v3093 = vmax.f32 %v2758, 0.0
    %v3094 = vmax.f32 %v2869, 0.0
    %v3095 = vmax.f32 %v2871, 0.0
    %v3096 = vmax.f32 %v2982, 0.0
    %v3097 = vmax.f32 %v2984, 0.0
    %v3098 = vmax.f32 %v2647, 0.0
    %v3099 = vmax.f32 %v2649, 0.0
    %v3100 = vmax.f32 %v2760, 0.0
    %v3101 = vmax.f32 %v2762, 0.0
    %v3102 = vmax.f32 %v2873, 0.0
    %v3103 = vmax.f32 %v2875, 0.0
    %v3104 = vmax.f32 %v2986, 0.0
    %v3105 = vmax.f32 %v2988, 0.0
    %v3106 = vmax.f32 %v2653, 0.0
    %v3107 = vmax.f32 %v2655, 0.0
    %v3108 = vmax.f32 %v2766, 0.0
    %v3109 = vmax.f32 %v2768, 0.0
    %v3110 = vmax.f32 %v2879, 0.0
    %v3111 = vmax.f32 %v2881, 0.0
    %v3112 = vmax.f32 %v2992, 0.0
    %v3113 = vmax.f32 %v2994, 0.0
    %v3114 = vmax.f32 %v2657, 0.0
    %v3115 = vmax.f32 %v2659, 0.0
    %v3116 = vmax.f32 %v2770, 0.0
    %v3117 = vmax.f32 %v2772, 0.0
    %v3118 = vmax.f32 %v2883, 0.0
    %v3119 = vmax.f32 %v2885, 0.0
    %v3120 = vmax.f32 %v2996, 0.0
    %v3121 = vmax.f32 %v2998, 0.0
    %v3122 = vmax.f32 %v2663, 0.0
    %v3123 = vmax.f32 %v2665, 0.0
    %v3124 = vmax.f32 %v2776, 0.0
    %v3125 = vmax.f32 %v2778, 0.0
    %v3126 = vmax.f32 %v2889, 0.0
    %v3127 = vmax.f32 %v2891, 0.0
    %v3128 = vmax.f32 %v3002, 0.0
    %v3129 = vmax.f32 %v3004, 0.0
    %v3130 = vmax.f32 %v2667, 0.0
    %v3131 = vmax.f32 %v2669, 0.0
    %v3132 = vmax.f32 %v2780, 0.0
    %v3133 = vmax.f32 %v2782, 0.0
    %v3134 = vmax.f32 %v2893, 0.0
    %v3135 = vmax.f32 %v2895, 0.0
    %v3136 = vmax.f32 %v3006, 0.0
    %v3137 = vmax.f32 %v3008, 0.0
    %v3138 = vpack.c.bf16 %v3018, %v3010
    %v3139 = vpack.c.bf16 %v3019, %v3011
    %v3140 = vpack.c.bf16 %v3020, %v3012
    %v3141 = vpack.c.bf16 %v3021, %v3013
    %v3142 = vpack.c.bf16 %v3022, %v3014
    %v3143 = vpack.c.bf16 %v3023, %v3015
    %v3144 = vpack.c.bf16 %v3024, %v3016
    %v3145 = vpack.c.bf16 %v3025, %v3017
    %v3146 = vpack.c.bf16 %v3034, %v3026
    %v3147 = vpack.c.bf16 %v3035, %v3027
    %v3148 = vpack.c.bf16 %v3036, %v3028
    %v3149 = vpack.c.bf16 %v3037, %v3029
    %v3150 = vpack.c.bf16 %v3038, %v3030
    %v3151 = vpack.c.bf16 %v3039, %v3031
    %v3152 = vpack.c.bf16 %v3040, %v3032
    %v3153 = vpack.c.bf16 %v3041, %v3033
    %v3154 = vpack.c.bf16 %v3050, %v3042
    %v3155 = vpack.c.bf16 %v3051, %v3043
    %v3156 = vpack.c.bf16 %v3052, %v3044
    %v3157 = vpack.c.bf16 %v3053, %v3045
    %v3158 = vpack.c.bf16 %v3054, %v3046
    %v3159 = vpack.c.bf16 %v3055, %v3047
    %v3160 = vpack.c.bf16 %v3056, %v3048
    %v3161 = vpack.c.bf16 %v3057, %v3049
    %v3162 = vpack.c.bf16 %v3066, %v3058
    %v3163 = vpack.c.bf16 %v3067, %v3059
    %v3164 = vpack.c.bf16 %v3068, %v3060
    %v3165 = vpack.c.bf16 %v3069, %v3061
    %v3166 = vpack.c.bf16 %v3070, %v3062
    %v3167 = vpack.c.bf16 %v3071, %v3063
    %v3168 = vpack.c.bf16 %v3072, %v3064
    %v3169 = vpack.c.bf16 %v3073, %v3065
    %v3170 = vpack.c.bf16 %v3082, %v3074
    %v3171 = vpack.c.bf16 %v3083, %v3075
    %v3172 = vpack.c.bf16 %v3084, %v3076
    %v3173 = vpack.c.bf16 %v3085, %v3077
    %v3174 = vpack.c.bf16 %v3086, %v3078
    %v3175 = vpack.c.bf16 %v3087, %v3079
    %v3176 = vpack.c.bf16 %v3088, %v3080
    %v3177 = vpack.c.bf16 %v3089, %v3081
    %v3178 = vpack.c.bf16 %v3098, %v3090
    %v3179 = vpack.c.bf16 %v3099, %v3091
    %v3180 = vpack.c.bf16 %v3100, %v3092
    %v3181 = vpack.c.bf16 %v3101, %v3093
    %v3182 = vpack.c.bf16 %v3102, %v3094
    %v3183 = vpack.c.bf16 %v3103, %v3095
    %v3184 = vpack.c.bf16 %v3104, %v3096
    %v3185 = vpack.c.bf16 %v3105, %v3097
    %v3186 = vpack.c.bf16 %v3114, %v3106
    %v3187 = vpack.c.bf16 %v3115, %v3107
    %v3188 = vpack.c.bf16 %v3116, %v3108
    %v3189 = vpack.c.bf16 %v3117, %v3109
    %v3190 = vpack.c.bf16 %v3118, %v3110
    %v3191 = vpack.c.bf16 %v3119, %v3111
    %v3192 = vpack.c.bf16 %v3120, %v3112
    %v3193 = vpack.c.bf16 %v3121, %v3113
    %v3194 = vpack.c.bf16 %v3130, %v3122
    %v3195 = vpack.c.bf16 %v3131, %v3123
    %v3196 = vpack.c.bf16 %v3132, %v3124
    %v3197 = vpack.c.bf16 %v3133, %v3125
    %v3198 = vpack.c.bf16 %v3134, %v3126
    %v3199 = vpack.c.bf16 %v3135, %v3127
    %v3200 = vpack.c.bf16 %v3136, %v3128
    %v3201 = vpack.c.bf16 %v3137, %v3129
    %3202 = vmatprep.subr.bf16.mxu0 %v3195
    %3203 = vmatpush1.bf16.msra.mxu0 %v3194
    %3204 = vmatprep.subr.bf16.mxu0 %v3187
    %3205 = vmatpush1.bf16.msra.mxu0 %v3186
    %3206 = vmatprep.subr.bf16.mxu0 %v3179
    %3207 = vmatpush1.bf16.msra.mxu0 %v3178
    %3208 = vmatprep.subr.bf16.mxu0 %v3171
    %3209 = vmatpush1.bf16.msra.mxu0 %v3170
    %3210 = vmatprep.subr.bf16.mxu0 %v3163
    %3211 = vmatpush1.bf16.msra.mxu0 %v3162
    %3212 = vmatprep.subr.bf16.mxu0 %v3155
    %3213 = vmatpush1.bf16.msra.mxu0 %v3154
    %3214 = vmatprep.subr.bf16.mxu0 %v3147
    %3215 = vmatpush1.bf16.msra.mxu0 %v3146
    %3216 = vmatprep.subr.bf16.mxu0 %v3139
    %3217 = vmatpush1.bf16.msra.mxu0 %v3138
    %3218 = vmatprep.subr.bf16.mxu0 0
    %3219 = vmatpush2.bf16.msra.mxu0 0
    %3220 = vmatprep.subr.bf16.mxu0 0
    %3221 = vmatpush2.bf16.msra.mxu0 0
    %3222 = vmatprep.subr.bf16.mxu0 0
    %3223 = vmatpush2.bf16.msra.mxu0 0
    %3224 = vmatprep.subr.bf16.mxu0 0
    %3225 = vmatpush2.bf16.msra.mxu0 0
    %3226 = vmatprep.subr.bf16.mxu0 0
    %3227 = vmatpush2.bf16.msra.mxu0 0
    %3228 = vmatprep.subr.bf16.mxu0 0
    %3229 = vmatpush2.bf16.msra.mxu0 0
    %3230 = vmatprep.subr.bf16.mxu0 0
    %3231 = vmatpush2.bf16.msra.mxu0 0
    %3232 = vmatprep.subr.bf16.mxu0 0
    %3233 = vmatpush2.bf16.msra.mxu0 0
    %3234 = vmatprep.mubr.bf16.mxu0 0
    %3235 = vmatmul.mubr.bf16.gmra.mxu0 998259584
    %v3236 = vpop.f32.mrf.mxu0
    %v3237 = vadd.f32 0.0, %v3236
    %v3238 = vpop.f32.mrf.mxu0
    %v3239 = vadd.f32 0.0, %v3238
    %v3240 = vpop.f32.mrf.mxu0
    %v3241 = vpop.f32.mrf.mxu0
    %3242 = vdwg.mxu0
    %3243 = vmatprep.subr.bf16.mxu0 %v3197
    %3244 = vmatpush1.bf16.msra.mxu0 %v3196
    %3245 = vmatprep.subr.bf16.mxu0 %v3189
    %3246 = vmatpush1.bf16.msra.mxu0 %v3188
    %3247 = vmatprep.subr.bf16.mxu0 %v3181
    %3248 = vmatpush1.bf16.msra.mxu0 %v3180
    %3249 = vmatprep.subr.bf16.mxu0 %v3173
    %3250 = vmatpush1.bf16.msra.mxu0 %v3172
    %3251 = vmatprep.subr.bf16.mxu0 %v3165
    %3252 = vmatpush1.bf16.msra.mxu0 %v3164
    %3253 = vmatprep.subr.bf16.mxu0 %v3157
    %3254 = vmatpush1.bf16.msra.mxu0 %v3156
    %3255 = vmatprep.subr.bf16.mxu0 %v3149
    %3256 = vmatpush1.bf16.msra.mxu0 %v3148
    %3257 = vmatprep.subr.bf16.mxu0 %v3141
    %3258 = vmatpush1.bf16.msra.mxu0 %v3140
    %3259 = vmatprep.subr.bf16.mxu0 0
    %3260 = vmatpush2.bf16.msra.mxu0 0
    %3261 = vmatprep.subr.bf16.mxu0 0
    %3262 = vmatpush2.bf16.msra.mxu0 0
    %3263 = vmatprep.subr.bf16.mxu0 0
    %3264 = vmatpush2.bf16.msra.mxu0 0
    %3265 = vmatprep.subr.bf16.mxu0 0
    %3266 = vmatpush2.bf16.msra.mxu0 0
    %3267 = vmatprep.subr.bf16.mxu0 0
    %3268 = vmatpush2.bf16.msra.mxu0 0
    %3269 = vmatprep.subr.bf16.mxu0 0
    %3270 = vmatpush2.bf16.msra.mxu0 0
    %3271 = vmatprep.subr.bf16.mxu0 0
    %3272 = vmatpush2.bf16.msra.mxu0 0
    %3273 = vmatprep.subr.bf16.mxu0 0
    %3274 = vmatpush2.bf16.msra.mxu0 0
    %3275 = vmatprep.mubr.bf16.mxu0 0
    %3276 = vmatmul.mubr.bf16.gmra.mxu0 998259584
    %v3277 = vpop.f32.mrf.mxu0
    %v3278 = vadd.f32 0.0, %v3277
    %v3279 = vpop.f32.mrf.mxu0
    %v3280 = vadd.f32 0.0, %v3279
    %v3281 = vpop.f32.mrf.mxu0
    %v3282 = vpop.f32.mrf.mxu0
    %3283 = vdwg.mxu0
    %3284 = vmatprep.subr.bf16.mxu0 %v3199
    %3285 = vmatpush1.bf16.msra.mxu0 %v3198
    %3286 = vmatprep.subr.bf16.mxu0 %v3191
    %3287 = vmatpush1.bf16.msra.mxu0 %v3190
    %3288 = vmatprep.subr.bf16.mxu0 %v3183
    %3289 = vmatpush1.bf16.msra.mxu0 %v3182
    %3290 = vmatprep.subr.bf16.mxu0 %v3175
    %3291 = vmatpush1.bf16.msra.mxu0 %v3174
    %3292 = vmatprep.subr.bf16.mxu0 %v3167
    %3293 = vmatpush1.bf16.msra.mxu0 %v3166
    %3294 = vmatprep.subr.bf16.mxu0 %v3159
    %3295 = vmatpush1.bf16.msra.mxu0 %v3158
    %3296 = vmatprep.subr.bf16.mxu0 %v3151
    %3297 = vmatpush1.bf16.msra.mxu0 %v3150
    %3298 = vmatprep.subr.bf16.mxu0 %v3143
    %3299 = vmatpush1.bf16.msra.mxu0 %v3142
    %3300 = vmatprep.subr.bf16.mxu0 0
    %3301 = vmatpush2.bf16.msra.mxu0 0
    %3302 = vmatprep.subr.bf16.mxu0 0
    %3303 = vmatpush2.bf16.msra.mxu0 0
    %3304 = vmatprep.subr.bf16.mxu0 0
    %3305 = vmatpush2.bf16.msra.mxu0 0
    %3306 = vmatprep.subr.bf16.mxu0 0
    %3307 = vmatpush2.bf16.msra.mxu0 0
    %3308 = vmatprep.subr.bf16.mxu0 0
    %3309 = vmatpush2.bf16.msra.mxu0 0
    %3310 = vmatprep.subr.bf16.mxu0 0
    %3311 = vmatpush2.bf16.msra.mxu0 0
    %3312 = vmatprep.subr.bf16.mxu0 0
    %3313 = vmatpush2.bf16.msra.mxu0 0
    %3314 = vmatprep.subr.bf16.mxu0 0
    %3315 = vmatpush2.bf16.msra.mxu0 0
    %3316 = vmatprep.mubr.bf16.mxu0 0
    %3317 = vmatmul.mubr.bf16.gmra.mxu0 998259584
    %v3318 = vpop.f32.mrf.mxu0
    %v3319 = vadd.f32 0.0, %v3318
    %v3320 = vpop.f32.mrf.mxu0
    %v3321 = vadd.f32 0.0, %v3320
    %v3322 = vpop.f32.mrf.mxu0
    %v3323 = vpop.f32.mrf.mxu0
    %3324 = vdwg.mxu0
    %3325 = vmatprep.subr.bf16.mxu0 %v3201
    %3326 = vmatpush1.bf16.msra.mxu0 %v3200
    %3327 = vmatprep.subr.bf16.mxu0 %v3193
    %3328 = vmatpush1.bf16.msra.mxu0 %v3192
    %3329 = vmatprep.subr.bf16.mxu0 %v3185
    %3330 = vmatpush1.bf16.msra.mxu0 %v3184
    %3331 = vmatprep.subr.bf16.mxu0 %v3177
    %3332 = vmatpush1.bf16.msra.mxu0 %v3176
    %3333 = vmatprep.subr.bf16.mxu0 %v3169
    %3334 = vmatpush1.bf16.msra.mxu0 %v3168
    %3335 = vmatprep.subr.bf16.mxu0 %v3161
    %3336 = vmatpush1.bf16.msra.mxu0 %v3160
    %3337 = vmatprep.subr.bf16.mxu0 %v3153
    %3338 = vmatpush1.bf16.msra.mxu0 %v3152
    %3339 = vmatprep.subr.bf16.mxu0 %v3145
    %3340 = vmatpush1.bf16.msra.mxu0 %v3144
    %3341 = vmatprep.subr.bf16.mxu0 0
    %3342 = vmatpush2.bf16.msra.mxu0 0
    %3343 = vmatprep.subr.bf16.mxu0 0
    %3344 = vmatpush2.bf16.msra.mxu0 0
    %3345 = vmatprep.subr.bf16.mxu0 0
    %3346 = vmatpush2.bf16.msra.mxu0 0
    %3347 = vmatprep.subr.bf16.mxu0 0
    %3348 = vmatpush2.bf16.msra.mxu0 0
    %3349 = vmatprep.subr.bf16.mxu0 0
    %3350 = vmatpush2.bf16.msra.mxu0 0
    %3351 = vmatprep.subr.bf16.mxu0 0
    %3352 = vmatpush2.bf16.msra.mxu0 0
    %3353 = vmatprep.subr.bf16.mxu0 0
    %3354 = vmatpush2.bf16.msra.mxu0 0
    %3355 = vmatprep.subr.bf16.mxu0 0
    %3356 = vmatpush2.bf16.msra.mxu0 0
    %3357 = vmatprep.mubr.bf16.mxu0 0
    %3358 = vmatmul.mubr.bf16.gmra.mxu0 998259584
    %v3359 = vpop.f32.mrf.mxu0
    %v3360 = vadd.f32 0.0, %v3359
    %v3361 = vpop.f32.mrf.mxu0
    %v3362 = vadd.f32 0.0, %v3361
    %v3363 = vpop.f32.mrf.mxu0
    %v3364 = vpop.f32.mrf.mxu0
    %3365 = vdwg.mxu0
    %3366 = vmatprep.subr.bf16.mxu0 %v2509
    %3367 = vmatpush1.bf16.msra.mxu0 %v2508
    %3368 = vmatprep.subr.bf16.mxu0 %v2501
    %3369 = vmatpush1.bf16.msra.mxu0 %v2500
    %3370 = vmatprep.subr.bf16.mxu0 %v2493
    %3371 = vmatpush1.bf16.msra.mxu0 %v2492
    %3372 = vmatprep.subr.bf16.mxu0 %v2485
    %3373 = vmatpush1.bf16.msra.mxu0 %v2484
    %3374 = vmatprep.subr.bf16.mxu0 %v2477
    %3375 = vmatpush1.bf16.msra.mxu0 %v2476
    %3376 = vmatprep.subr.bf16.mxu0 %v2469
    %3377 = vmatpush1.bf16.msra.mxu0 %v2468
    %3378 = vmatprep.subr.bf16.mxu0 %v2461
    %3379 = vmatpush1.bf16.msra.mxu0 %v2460
    %3380 = vmatprep.subr.bf16.mxu0 %v2453
    %3381 = vmatpush1.bf16.msra.mxu0 %v2452
    %3382 = vmatprep.subr.bf16.mxu0 0
    %3383 = vmatpush2.bf16.msra.mxu0 0
    %3384 = vmatprep.subr.bf16.mxu0 0
    %3385 = vmatpush2.bf16.msra.mxu0 0
    %3386 = vmatprep.subr.bf16.mxu0 0
    %3387 = vmatpush2.bf16.msra.mxu0 0
    %3388 = vmatprep.subr.bf16.mxu0 0
    %3389 = vmatpush2.bf16.msra.mxu0 0
    %3390 = vmatprep.subr.bf16.mxu0 0
    %3391 = vmatpush2.bf16.msra.mxu0 0
    %3392 = vmatprep.subr.bf16.mxu0 0
    %3393 = vmatpush2.bf16.msra.mxu0 0
    %3394 = vmatprep.subr.bf16.mxu0 0
    %3395 = vmatpush2.bf16.msra.mxu0 0
    %3396 = vmatprep.subr.bf16.mxu0 0
    %3397 = vmatpush2.bf16.msra.mxu0 0
    %3398 = vmatprep.mubr.bf16.mxu0 0
    %3399 = vmatmul.mubr.bf16.gmra.mxu0 998259584
    %v3400 = vpop.f32.mrf.mxu0
    %v3401 = vadd.f32 %v3237, %v3400
    %v3402 = vpop.f32.mrf.mxu0
    %v3403 = vadd.f32 %v3239, %v3402
    %v3404 = vpop.f32.mrf.mxu0
    %v3405 = vpop.f32.mrf.mxu0
    %3406 = vdwg.mxu0
    %3407 = vmatprep.subr.bf16.mxu0 %v2511
    %3408 = vmatpush1.bf16.msra.mxu0 %v2510
    %3409 = vmatprep.subr.bf16.mxu0 %v2503
    %3410 = vmatpush1.bf16.msra.mxu0 %v2502
    %3411 = vmatprep.subr.bf16.mxu0 %v2495
    %3412 = vmatpush1.bf16.msra.mxu0 %v2494
    %3413 = vmatprep.subr.bf16.mxu0 %v2487
    %3414 = vmatpush1.bf16.msra.mxu0 %v2486
    %3415 = vmatprep.subr.bf16.mxu0 %v2479
    %3416 = vmatpush1.bf16.msra.mxu0 %v2478
    %3417 = vmatprep.subr.bf16.mxu0 %v2471
    %3418 = vmatpush1.bf16.msra.mxu0 %v2470
    %3419 = vmatprep.subr.bf16.mxu0 %v2463
    %3420 = vmatpush1.bf16.msra.mxu0 %v2462
    %3421 = vmatprep.subr.bf16.mxu0 %v2455
    %3422 = vmatpush1.bf16.msra.mxu0 %v2454
    %3423 = vmatprep.subr.bf16.mxu0 0
    %3424 = vmatpush2.bf16.msra.mxu0 0
    %3425 = vmatprep.subr.bf16.mxu0 0
    %3426 = vmatpush2.bf16.msra.mxu0 0
    %3427 = vmatprep.subr.bf16.mxu0 0
    %3428 = vmatpush2.bf16.msra.mxu0 0
    %3429 = vmatprep.subr.bf16.mxu0 0
    %3430 = vmatpush2.bf16.msra.mxu0 0
    %3431 = vmatprep.subr.bf16.mxu0 0
    %3432 = vmatpush2.bf16.msra.mxu0 0
    %3433 = vmatprep.subr.bf16.mxu0 0
    %3434 = vmatpush2.bf16.msra.mxu0 0
    %3435 = vmatprep.subr.bf16.mxu0 0
    %3436 = vmatpush2.bf16.msra.mxu0 0
    %3437 = vmatprep.subr.bf16.mxu0 0
    %3438 = vmatpush2.bf16.msra.mxu0 0
    %3439 = vmatprep.mubr.bf16.mxu0 0
    %3440 = vmatmul.mubr.bf16.gmra.mxu0 998259584
    %v3441 = vpop.f32.mrf.mxu0
    %v3442 = vadd.f32 %v3278, %v3441
    %v3443 = vpop.f32.mrf.mxu0
    %v3444 = vadd.f32 %v3280, %v3443
    %v3445 = vpop.f32.mrf.mxu0
    %v3446 = vpop.f32.mrf.mxu0
    %3447 = vdwg.mxu0
    %3448 = vmatprep.subr.bf16.mxu0 %v2513
    %3449 = vmatpush1.bf16.msra.mxu0 %v2512
    %3450 = vmatprep.subr.bf16.mxu0 %v2505
    %3451 = vmatpush1.bf16.msra.mxu0 %v2504
    %3452 = vmatprep.subr.bf16.mxu0 %v2497
    %3453 = vmatpush1.bf16.msra.mxu0 %v2496
    %3454 = vmatprep.subr.bf16.mxu0 %v2489
    %3455 = vmatpush1.bf16.msra.mxu0 %v2488
    %3456 = vmatprep.subr.bf16.mxu0 %v2481
    %3457 = vmatpush1.bf16.msra.mxu0 %v2480
    %3458 = vmatprep.subr.bf16.mxu0 %v2473
    %3459 = vmatpush1.bf16.msra.mxu0 %v2472
    %3460 = vmatprep.subr.bf16.mxu0 %v2465
    %3461 = vmatpush1.bf16.msra.mxu0 %v2464
    %3462 = vmatprep.subr.bf16.mxu0 %v2457
    %3463 = vmatpush1.bf16.msra.mxu0 %v2456
    %3464 = vmatprep.subr.bf16.mxu0 0
    %3465 = vmatpush2.bf16.msra.mxu0 0
    %3466 = vmatprep.subr.bf16.mxu0 0
    %3467 = vmatpush2.bf16.msra.mxu0 0
    %3468 = vmatprep.subr.bf16.mxu0 0
    %3469 = vmatpush2.bf16.msra.mxu0 0
    %3470 = vmatprep.subr.bf16.mxu0 0
    %3471 = vmatpush2.bf16.msra.mxu0 0
    %3472 = vmatprep.subr.bf16.mxu0 0
    %3473 = vmatpush2.bf16.msra.mxu0 0
    %3474 = vmatprep.subr.bf16.mxu0 0
    %3475 = vmatpush2.bf16.msra.mxu0 0
    %3476 = vmatprep.subr.bf16.mxu0 0
    %3477 = vmatpush2.bf16.msra.mxu0 0
    %3478 = vmatprep.subr.bf16.mxu0 0
    %3479 = vmatpush2.bf16.msra.mxu0 0
    %3480 = vmatprep.mubr.bf16.mxu0 0
    %3481 = vmatmul.mubr.bf16.gmra.mxu0 998259584
    %v3482 = vpop.f32.mrf.mxu0
    %v3483 = vadd.f32 %v3319, %v3482
    %v3484 = vpop.f32.mrf.mxu0
    %v3485 = vadd.f32 %v3321, %v3484
    %v3486 = vpop.f32.mrf.mxu0
    %v3487 = vpop.f32.mrf.mxu0
    %3488 = vdwg.mxu0
    %3489 = vmatprep.subr.bf16.mxu0 %v2515
    %3490 = vmatpush1.bf16.msra.mxu0 %v2514
    %3491 = vmatprep.subr.bf16.mxu0 %v2507
    %3492 = vmatpush1.bf16.msra.mxu0 %v2506
    %3493 = vmatprep.subr.bf16.mxu0 %v2499
    %3494 = vmatpush1.bf16.msra.mxu0 %v2498
    %3495 = vmatprep.subr.bf16.mxu0 %v2491
    %3496 = vmatpush1.bf16.msra.mxu0 %v2490
    %3497 = vmatprep.subr.bf16.mxu0 %v2483
    %3498 = vmatpush1.bf16.msra.mxu0 %v2482
    %3499 = vmatprep.subr.bf16.mxu0 %v2475
    %3500 = vmatpush1.bf16.msra.mxu0 %v2474
    %3501 = vmatprep.subr.bf16.mxu0 %v2467
    %3502 = vmatpush1.bf16.msra.mxu0 %v2466
    %3503 = vmatprep.subr.bf16.mxu0 %v2459
    %3504 = vmatpush1.bf16.msra.mxu0 %v2458
    %3505 = vmatprep.subr.bf16.mxu0 0
    %3506 = vmatpush2.bf16.msra.mxu0 0
    %3507 = vmatprep.subr.bf16.mxu0 0
    %3508 = vmatpush2.bf16.msra.mxu0 0
    %3509 = vmatprep.subr.bf16.mxu0 0
    %3510 = vmatpush2.bf16.msra.mxu0 0
    %3511 = vmatprep.subr.bf16.mxu0 0
    %3512 = vmatpush2.bf16.msra.mxu0 0
    %3513 = vmatprep.subr.bf16.mxu0 0
    %3514 = vmatpush2.bf16.msra.mxu0 0
    %3515 = vmatprep.subr.bf16.mxu0 0
    %3516 = vmatpush2.bf16.msra.mxu0 0
    %3517 = vmatprep.subr.bf16.mxu0 0
    %3518 = vmatpush2.bf16.msra.mxu0 0
    %3519 = vmatprep.subr.bf16.mxu0 0
    %3520 = vmatpush2.bf16.msra.mxu0 0
    %3521 = vmatprep.mubr.bf16.mxu0 0
    %3522 = vmatmul.mubr.bf16.gmra.mxu0 998259584
    %v3523 = vpop.f32.mrf.mxu0
    %v3524 = vadd.f32 %v3360, %v3523
    %v3525 = vpop.f32.mrf.mxu0
    %v3526 = vadd.f32 %v3362, %v3525
    %v3527 = vpop.f32.mrf.mxu0
    %v3528 = vpop.f32.mrf.mxu0
    %3529 = vdwg.mxu0
    %v3538 = vrot.slane %v3401, 7
    %v3539 = vrot.slane %v3403, 7
    %v3540 = vrot.slane %v3442, 7
    %v3541 = vrot.slane %v3444, 7
    %v3542 = vrot.slane %v3483, 7
    %v3543 = vrot.slane %v3485, 7
    %v3544 = vrot.slane %v3524, 7
    %v3545 = vrot.slane %v3526, 7
    %vm3554 = vcmask 1040384
    %v3555 = vsel %vm3554, %v1700, %v3538
    %v3556 = vsel %vm3554, %v1702, %v3539
    %v3557 = vsel %vm3554, %v1741, %v3540
    %v3558 = vsel %vm3554, %v1743, %v3541
    %v3559 = vsel %vm3554, %v1782, %v3542
    %v3560 = vsel %vm3554, %v1784, %v3543
    %v3561 = vsel %vm3554, %v1823, %v3544
    %v3562 = vsel %vm3554, %v1825, %v3545
    %v3571 = vcombine.low %v3555, %v3556
    %v3572 = vcombine.low %v3557, %v3558
    %v3574 = vunpack.c.l.s4 1983009808
    %v3575 = vunpack.c.0.s8 %v3574
    %v3576 = vlaneseq
    %v3577 = vshrl.u32 %v3576, 7
    %v3578 = vsub.s32 %v3575, %v3577
    %v3579 = vrot.slane %v3571, %v3578
    %v3581 = vunpack.c.l.s4 1983009808
    %v3582 = vunpack.c.0.s8 %v3581
    %v3583 = vlaneseq
    %v3584 = vshrl.u32 %v3583, 7
    %v3585 = vsub.s32 %v3582, %v3584
    %v3586 = vrot.slane %v3572, %v3585
    %v3587 = vcombine.low %v3579, %v3586
    %v3588 = vcombine.low %v3559, %v3560
    %v3589 = vcombine.low %v3561, %v3562
    %v3591 = vunpack.c.l.s4 1983009808
    %v3592 = vunpack.c.0.s8 %v3591
    %v3593 = vlaneseq
    %v3594 = vshrl.u32 %v3593, 7
    %v3595 = vsub.s32 %v3592, %v3594
    %v3596 = vrot.slane %v3588, %v3595
    %v3598 = vunpack.c.l.s4 1983009808
    %v3599 = vunpack.c.0.s8 %v3598
    %v3600 = vlaneseq
    %v3601 = vshrl.u32 %v3600, 7
    %v3602 = vsub.s32 %v3599, %v3601
    %v3603 = vrot.slane %v3589, %v3602
    %v3604 = vcombine.low %v3596, %v3603
    %3607 = vst [vmem:[#allocation8] sm:$0xff] %v3587
    %3608 = vst [vmem:[#allocation8 + $0x8] sm:$0xff] %v3604
    %v3609 = vld [vmem:[%s2] sm:$0xff]
    %v3611 = vlaneseq
    %v3612 = vshrl.u32 %v3611, 7
    %v3613 = vsub.s32 0, %v3612
    %v3614 = vrot.slane %v3609, %v3613
    %v3615 = vlaneseq
    %v3616 = vshrl.u32 %v3615, 7
    %v3617 = vsub.s32 1, %v3616
    %v3618 = vrot.slane %v3609, %v3617
    %v3619 = vlaneseq
    %v3620 = vshrl.u32 %v3619, 7
    %v3621 = vsub.s32 2, %v3620
    %v3622 = vrot.slane %v3609, %v3621
    %v3623 = vlaneseq
    %v3624 = vshrl.u32 %v3623, 7
    %v3625 = vsub.s32 3, %v3624
    %v3626 = vrot.slane %v3609, %v3625
    %v3627 = vlaneseq
    %v3628 = vshrl.u32 %v3627, 7
    %v3629 = vsub.s32 4, %v3628
    %v3630 = vrot.slane %v3609, %v3629
    %v3631 = vlaneseq
    %v3632 = vshrl.u32 %v3631, 7
    %v3633 = vsub.s32 5, %v3632
    %v3634 = vrot.slane %v3609, %v3633
    %v3635 = vlaneseq
    %v3636 = vshrl.u32 %v3635, 7
    %v3637 = vsub.s32 6, %v3636
    %v3638 = vrot.slane %v3609, %v3637
    %v3639 = vlaneseq
    %v3640 = vshrl.u32 %v3639, 7
    %v3641 = vsub.s32 7, %v3640
    %v3642 = vrot.slane %v3609, %v3641
    %v3651 = vsub.f32 %v3555, %v3614
    %v3652 = vsub.f32 %v3556, %v3618
    %v3653 = vsub.f32 %v3557, %v3622
    %v3654 = vsub.f32 %v3558, %v3626
    %v3655 = vsub.f32 %v3559, %v3630
    %v3656 = vsub.f32 %v3560, %v3634
    %v3657 = vsub.f32 %v3561, %v3638
    %v3658 = vsub.f32 %v3562, %v3642
    %v3659 = vpack.c.bf16 %v3651, %v3651
    %v3660 = vpack.c.bf16 %v3652, %v3652
    %v3661 = vpack.c.bf16 %v3653, %v3653
    %v3662 = vpack.c.bf16 %v3654, %v3654
    %v3663 = vpack.c.bf16 %v3655, %v3655
    %v3664 = vpack.c.bf16 %v3656, %v3656
    %v3665 = vpack.c.bf16 %v3657, %v3657
    %v3666 = vpack.c.bf16 %v3658, %v3658
    %v3667 = vld [vmem:[%s3] sm:$0xff]
    %v3668 = vld [vmem:[%s3 + $0x8] sm:$0xff]
    %v3669 = vld [vmem:[%s3 + $0x10] sm:$0xff]
    %v3670 = vld [vmem:[%s3 + $0x18] sm:$0xff]
    %v3671 = vld [vmem:[%s3 + $0x20] sm:$0xff]
    %v3672 = vld [vmem:[%s3 + $0x28] sm:$0xff]
    %v3673 = vld [vmem:[%s3 + $0x30] sm:$0xff]
    %v3674 = vld [vmem:[%s3 + $0x38] sm:$0xff]
    %v3675 = vld [vmem:[%s3 + $0x40] sm:$0xff]
    %v3676 = vld [vmem:[%s3 + $0x48] sm:$0xff]
    %v3677 = vld [vmem:[%s3 + $0x50] sm:$0xff]
    %v3678 = vld [vmem:[%s3 + $0x58] sm:$0xff]
    %v3679 = vld [vmem:[%s3 + $0x60] sm:$0xff]
    %v3680 = vld [vmem:[%s3 + $0x68] sm:$0xff]
    %v3681 = vld [vmem:[%s3 + $0x70] sm:$0xff]
    %v3682 = vld [vmem:[%s3 + $0x78] sm:$0xff]
    %v3683 = vld [vmem:[%s4] sm:$0x1]
    %v3685 = vlaneseq
    %v3686 = vshrl.u32 %v3685, 7
    %v3687 = vsub.s32 0, %v3686
    %v3688 = vrot.slane %v3683, %v3687
    %v3706 = vunpack.c.l.b16 %v3667
    %v3707 = vunpack.c.h.b16 %v3667
    %v3708 = vunpack.c.l.b16 %v3668
    %v3709 = vunpack.c.h.b16 %v3668
    %v3710 = vunpack.c.l.b16 %v3669
    %v3711 = vunpack.c.h.b16 %v3669
    %v3712 = vunpack.c.l.b16 %v3670
    %v3713 = vunpack.c.h.b16 %v3670
    %v3714 = vunpack.c.l.b16 %v3671
    %v3715 = vunpack.c.h.b16 %v3671
    %v3716 = vunpack.c.l.b16 %v3672
    %v3717 = vunpack.c.h.b16 %v3672
    %v3718 = vunpack.c.l.b16 %v3673
    %v3719 = vunpack.c.h.b16 %v3673
    %v3720 = vunpack.c.l.b16 %v3674
    %v3721 = vunpack.c.h.b16 %v3674
    %v3722 = vunpack.c.l.b16 %v3675
    %v3723 = vunpack.c.h.b16 %v3675
    %v3724 = vunpack.c.l.b16 %v3676
    %v3725 = vunpack.c.h.b16 %v3676
    %v3726 = vunpack.c.l.b16 %v3677
    %v3727 = vunpack.c.h.b16 %v3677
    %v3728 = vunpack.c.l.b16 %v3678
    %v3729 = vunpack.c.h.b16 %v3678
    %v3730 = vunpack.c.l.b16 %v3679
    %v3731 = vunpack.c.h.b16 %v3679
    %v3732 = vunpack.c.l.b16 %v3680
    %v3733 = vunpack.c.h.b16 %v3680
    %v3734 = vunpack.c.l.b16 %v3681
    %v3735 = vunpack.c.h.b16 %v3681
    %v3736 = vunpack.c.l.b16 %v3682
    %v3737 = vunpack.c.h.b16 %v3682
    %v3738 = vpack.c.b16 %v3714, %v3706
    %v3739 = vpack.c.b16 %v3715, %v3707
    %v3740 = vpack.c.b16 %v3716, %v3708
    %v3741 = vpack.c.b16 %v3717, %v3709
    %v3742 = vpack.c.b16 %v3718, %v3710
    %v3743 = vpack.c.b16 %v3719, %v3711
    %v3744 = vpack.c.b16 %v3720, %v3712
    %v3745 = vpack.c.b16 %v3721, %v3713
    %v3746 = vpack.c.b16 %v3730, %v3722
    %v3747 = vpack.c.b16 %v3731, %v3723
    %v3748 = vpack.c.b16 %v3732, %v3724
    %v3749 = vpack.c.b16 %v3733, %v3725
    %v3750 = vpack.c.b16 %v3734, %v3726
    %v3751 = vpack.c.b16 %v3735, %v3727
    %v3752 = vpack.c.b16 %v3736, %v3728
    %v3753 = vpack.c.b16 %v3737, %v3729
    %3770 = vmatprep.subr.bf16.mxu0 0
    %3771 = vmatpush1.bf16.xpose.msra.mxu0 0
    %3772 = vmatprep.subr.bf16.mxu0 0
    %3773 = vmatpush1.bf16.xpose.msra.mxu0 0
    %3774 = vmatprep.subr.bf16.mxu0 0
    %3775 = vmatpush1.bf16.xpose.msra.mxu0 0
    %3776 = vmatprep.subr.bf16.mxu0 0
    %3777 = vmatpush1.bf16.xpose.msra.mxu0 0
    %3778 = vmatprep.subr.bf16.mxu0 0
    %3779 = vmatpush1.bf16.xpose.msra.mxu0 0
    %3780 = vmatprep.subr.bf16.mxu0 0
    %3781 = vmatpush1.bf16.xpose.msra.mxu0 0
    %3782 = vmatprep.subr.bf16.mxu0 %v3747
    %3783 = vmatpush1.bf16.xpose.msra.mxu0 %v3746
    %3784 = vmatprep.subr.bf16.mxu0 %v3739
    %3785 = vmatpush1.bf16.xpose.msra.mxu0 %v3738
    %3786 = vmatprep.subr.bf16.mxu0 0
    %3787 = vmatpush2.bf16.xpose.msra.mxu0 0
    %3788 = vmatprep.subr.bf16.mxu0 0
    %3789 = vmatpush2.bf16.xpose.msra.mxu0 0
    %3790 = vmatprep.subr.bf16.mxu0 0
    %3791 = vmatpush2.bf16.xpose.msra.mxu0 0
    %3792 = vmatprep.subr.bf16.mxu0 0
    %3793 = vmatpush2.bf16.xpose.msra.mxu0 0
    %3794 = vmatprep.subr.bf16.mxu0 0
    %3795 = vmatpush2.bf16.xpose.msra.mxu0 0
    %3796 = vmatprep.subr.bf16.mxu0 0
    %3797 = vmatpush2.bf16.xpose.msra.mxu0 0
    %3798 = vmatprep.subr.bf16.mxu0 0
    %3799 = vmatpush2.bf16.xpose.msra.mxu0 0
    %3800 = vmatprep.subr.bf16.mxu0 0
    %3801 = vmatpush2.bf16.xpose.msra.mxu0 0
    %3802 = vmatprep.mubr.bf16.mxu0 %v3660
    %3803 = vmatmul.mubr.bf16.gmra.mxu0 %v3659
    %v3804 = vpop.f32.mrf.mxu0
    %v3805 = vadd.f32 %v3688, %v3804
    %v3806 = vpop.f32.mrf.mxu0
    %v3807 = vpop.f32.mrf.mxu0
    %v3808 = vpop.f32.mrf.mxu0
    %3809 = vdwg.mxu0
    %3810 = vmatprep.subr.bf16.mxu0 0
    %3811 = vmatpush1.bf16.xpose.msra.mxu0 0
    %3812 = vmatprep.subr.bf16.mxu0 0
    %3813 = vmatpush1.bf16.xpose.msra.mxu0 0
    %3814 = vmatprep.subr.bf16.mxu0 0
    %3815 = vmatpush1.bf16.xpose.msra.mxu0 0
    %3816 = vmatprep.subr.bf16.mxu0 0
    %3817 = vmatpush1.bf16.xpose.msra.mxu0 0
    %3818 = vmatprep.subr.bf16.mxu0 0
    %3819 = vmatpush1.bf16.xpose.msra.mxu0 0
    %3820 = vmatprep.subr.bf16.mxu0 0
    %3821 = vmatpush1.bf16.xpose.msra.mxu0 0
    %3822 = vmatprep.subr.bf16.mxu0 %v3749
    %3823 = vmatpush1.bf16.xpose.msra.mxu0 %v3748
    %3824 = vmatprep.subr.bf16.mxu0 %v3741
    %3825 = vmatpush1.bf16.xpose.msra.mxu0 %v3740
    %3826 = vmatprep.subr.bf16.mxu0 0
    %3827 = vmatpush2.bf16.xpose.msra.mxu0 0
    %3828 = vmatprep.subr.bf16.mxu0 0
    %3829 = vmatpush2.bf16.xpose.msra.mxu0 0
    %3830 = vmatprep.subr.bf16.mxu0 0
    %3831 = vmatpush2.bf16.xpose.msra.mxu0 0
    %3832 = vmatprep.subr.bf16.mxu0 0
    %3833 = vmatpush2.bf16.xpose.msra.mxu0 0
    %3834 = vmatprep.subr.bf16.mxu0 0
    %3835 = vmatpush2.bf16.xpose.msra.mxu0 0
    %3836 = vmatprep.subr.bf16.mxu0 0
    %3837 = vmatpush2.bf16.xpose.msra.mxu0 0
    %3838 = vmatprep.subr.bf16.mxu0 0
    %3839 = vmatpush2.bf16.xpose.msra.mxu0 0
    %3840 = vmatprep.subr.bf16.mxu0 0
    %3841 = vmatpush2.bf16.xpose.msra.mxu0 0
    %3842 = vmatprep.mubr.bf16.mxu0 %v3662
    %3843 = vmatmul.mubr.bf16.gmra.mxu0 %v3661
    %v3844 = vpop.f32.mrf.mxu0
    %v3845 = vadd.f32 %v3805, %v3844
    %v3846 = vpop.f32.mrf.mxu0
    %v3847 = vpop.f32.mrf.mxu0
    %v3848 = vpop.f32.mrf.mxu0
    %3849 = vdwg.mxu0
    %3850 = vmatprep.subr.bf16.mxu0 0
    %3851 = vmatpush1.bf16.xpose.msra.mxu0 0
    %3852 = vmatprep.subr.bf16.mxu0 0
    %3853 = vmatpush1.bf16.xpose.msra.mxu0 0
    %3854 = vmatprep.subr.bf16.mxu0 0
    %3855 = vmatpush1.bf16.xpose.msra.mxu0 0
    %3856 = vmatprep.subr.bf16.mxu0 0
    %3857 = vmatpush1.bf16.xpose.msra.mxu0 0
    %3858 = vmatprep.subr.bf16.mxu0 0
    %3859 = vmatpush1.bf16.xpose.msra.mxu0 0
    %3860 = vmatprep.subr.bf16.mxu0 0
    %3861 = vmatpush1.bf16.xpose.msra.mxu0 0
    %3862 = vmatprep.subr.bf16.mxu0 %v3751
    %3863 = vmatpush1.bf16.xpose.msra.mxu0 %v3750
    %3864 = vmatprep.subr.bf16.mxu0 %v3743
    %3865 = vmatpush1.bf16.xpose.msra.mxu0 %v3742
    %3866 = vmatprep.subr.bf16.mxu0 0
    %3867 = vmatpush2.bf16.xpose.msra.mxu0 0
    %3868 = vmatprep.subr.bf16.mxu0 0
    %3869 = vmatpush2.bf16.xpose.msra.mxu0 0
    %3870 = vmatprep.subr.bf16.mxu0 0
    %3871 = vmatpush2.bf16.xpose.msra.mxu0 0
    %3872 = vmatprep.subr.bf16.mxu0 0
    %3873 = vmatpush2.bf16.xpose.msra.mxu0 0
    %3874 = vmatprep.subr.bf16.mxu0 0
    %3875 = vmatpush2.bf16.xpose.msra.mxu0 0
    %3876 = vmatprep.subr.bf16.mxu0 0
    %3877 = vmatpush2.bf16.xpose.msra.mxu0 0
    %3878 = vmatprep.subr.bf16.mxu0 0
    %3879 = vmatpush2.bf16.xpose.msra.mxu0 0
    %3880 = vmatprep.subr.bf16.mxu0 0
    %3881 = vmatpush2.bf16.xpose.msra.mxu0 0
    %3882 = vmatprep.mubr.bf16.mxu0 %v3664
    %3883 = vmatmul.mubr.bf16.gmra.mxu0 %v3663
    %v3884 = vpop.f32.mrf.mxu0
    %v3885 = vadd.f32 %v3845, %v3884
    %v3886 = vpop.f32.mrf.mxu0
    %v3887 = vpop.f32.mrf.mxu0
    %v3888 = vpop.f32.mrf.mxu0
    %3889 = vdwg.mxu0
    %3890 = vmatprep.subr.bf16.mxu0 0
    %3891 = vmatpush1.bf16.xpose.msra.mxu0 0
    %3892 = vmatprep.subr.bf16.mxu0 0
    %3893 = vmatpush1.bf16.xpose.msra.mxu0 0
    %3894 = vmatprep.subr.bf16.mxu0 0
    %3895 = vmatpush1.bf16.xpose.msra.mxu0 0
    %3896 = vmatprep.subr.bf16.mxu0 0
    %3897 = vmatpush1.bf16.xpose.msra.mxu0 0
    %3898 = vmatprep.subr.bf16.mxu0 0
    %3899 = vmatpush1.bf16.xpose.msra.mxu0 0
    %3900 = vmatprep.subr.bf16.mxu0 0
    %3901 = vmatpush1.bf16.xpose.msra.mxu0 0
    %3902 = vmatprep.subr.bf16.mxu0 %v3753
    %3903 = vmatpush1.bf16.xpose.msra.mxu0 %v3752
    %3904 = vmatprep.subr.bf16.mxu0 %v3745
    %3905 = vmatpush1.bf16.xpose.msra.mxu0 %v3744
    %3906 = vmatprep.subr.bf16.mxu0 0
    %3907 = vmatpush2.bf16.xpose.msra.mxu0 0
    %3908 = vmatprep.subr.bf16.mxu0 0
    %3909 = vmatpush2.bf16.xpose.msra.mxu0 0
    %3910 = vmatprep.subr.bf16.mxu0 0
    %3911 = vmatpush2.bf16.xpose.msra.mxu0 0
    %3912 = vmatprep.subr.bf16.mxu0 0
    %3913 = vmatpush2.bf16.xpose.msra.mxu0 0
    %3914 = vmatprep.subr.bf16.mxu0 0
    %3915 = vmatpush2.bf16.xpose.msra.mxu0 0
    %3916 = vmatprep.subr.bf16.mxu0 0
    %3917 = vmatpush2.bf16.xpose.msra.mxu0 0
    %3918 = vmatprep.subr.bf16.mxu0 0
    %3919 = vmatpush2.bf16.xpose.msra.mxu0 0
    %3920 = vmatprep.subr.bf16.mxu0 0
    %3921 = vmatpush2.bf16.xpose.msra.mxu0 0
    %3922 = vmatprep.mubr.bf16.mxu0 %v3666
    %3923 = vmatmul.mubr.bf16.gmra.mxu0 %v3665
    %v3924 = vpop.f32.mrf.mxu0
    %v3925 = vadd.f32 %v3885, %v3924
    %v3926 = vpop.f32.mrf.mxu0
    %v3927 = vpop.f32.mrf.mxu0
    %v3928 = vpop.f32.mrf.mxu0
    %3929 = vdwg.mxu0
    %v3930 = vpack.c.bf16 %v3925, %v3925
    %v3931 = vld [vmem:[#allocation5] sm:$0xf]
    %v3932 = vld [vmem:[#allocation5 + $0x4] sm:$0xf]
    %v3933 = vld [vmem:[#allocation5 + $0x8] sm:$0xf]
    %v3934 = vld [vmem:[#allocation5 + $0xc] sm:$0xf]
    %v3935 = vld [vmem:[#allocation5 + $0x10] sm:$0xf]
    %v3936 = vld [vmem:[#allocation5 + $0x14] sm:$0xf]
    %v3937 = vld [vmem:[#allocation5 + $0x18] sm:$0xf]
    %v3938 = vld [vmem:[#allocation5 + $0x1c] sm:$0xf]
    %v3939 = vld [vmem:[#allocation5 + $0x20] sm:$0xf]
    %v3940 = vld [vmem:[#allocation5 + $0x24] sm:$0xf]
    %v3941 = vld [vmem:[#allocation5 + $0x28] sm:$0xf]
    %v3942 = vld [vmem:[#allocation5 + $0x2c] sm:$0xf]
    %v3943 = vld [vmem:[#allocation5 + $0x30] sm:$0xf]
    %v3944 = vld [vmem:[#allocation5 + $0x34] sm:$0xf]
    %v3945 = vld [vmem:[#allocation5 + $0x38] sm:$0xf]
    %v3946 = vld [vmem:[#allocation5 + $0x3c] sm:$0xf]
    %v3947 = vld [vmem:[#allocation5 + $0x40] sm:$0xf]
    %v3948 = vld [vmem:[#allocation5 + $0x44] sm:$0xf]
    %v3949 = vld [vmem:[#allocation5 + $0x48] sm:$0xf]
    %v3950 = vld [vmem:[#allocation5 + $0x4c] sm:$0xf]
    %v3951 = vld [vmem:[#allocation5 + $0x50] sm:$0xf]
    %v3952 = vld [vmem:[#allocation5 + $0x54] sm:$0xf]
    %v3953 = vld [vmem:[#allocation5 + $0x58] sm:$0xf]
    %v3954 = vld [vmem:[#allocation5 + $0x5c] sm:$0xf]
    %v3955 = vld [vmem:[#allocation5 + $0x60] sm:$0xf]
    %v3956 = vld [vmem:[#allocation5 + $0x64] sm:$0xf]
    %v3957 = vld [vmem:[#allocation5 + $0x68] sm:$0xf]
    %v3958 = vld [vmem:[#allocation5 + $0x6c] sm:$0xf]
    %v3959 = vld [vmem:[#allocation5 + $0x70] sm:$0xf]
    %v3960 = vld [vmem:[#allocation5 + $0x74] sm:$0xf]
    %v3961 = vld [vmem:[#allocation5 + $0x78] sm:$0xf]
    %v3962 = vld [vmem:[#allocation5 + $0x7c] sm:$0xf]
    %v3963 = vld [vmem:[#allocation5 + $0x80] sm:$0xf]
    %v3964 = vld [vmem:[#allocation5 + $0x84] sm:$0xf]
    %v3965 = vld [vmem:[#allocation5 + $0x88] sm:$0xf]
    %v3966 = vld [vmem:[#allocation5 + $0x8c] sm:$0xf]
    %v3967 = vld [vmem:[#allocation5 + $0x90] sm:$0xf]
    %v3968 = vld [vmem:[#allocation5 + $0x94] sm:$0xf]
    %v3969 = vld [vmem:[#allocation5 + $0x98] sm:$0xf]
    %v3970 = vld [vmem:[#allocation5 + $0x9c] sm:$0xf]
    %v3971 = vld [vmem:[#allocation5 + $0xa0] sm:$0xf]
    %v3972 = vld [vmem:[#allocation5 + $0xa4] sm:$0xf]
    %v3973 = vld [vmem:[#allocation5 + $0xa8] sm:$0xf]
    %v3974 = vld [vmem:[#allocation5 + $0xac] sm:$0xf]
    %v3975 = vld [vmem:[#allocation5 + $0xb0] sm:$0xf]
    %v3976 = vld [vmem:[#allocation5 + $0xb4] sm:$0xf]
    %v3977 = vld [vmem:[#allocation5 + $0xb8] sm:$0xf]
    %v3978 = vld [vmem:[#allocation5 + $0xbc] sm:$0xf]
    %v3979 = vld [vmem:[#allocation5 + $0xc0] sm:$0xf]
    %v3980 = vld [vmem:[#allocation5 + $0xc4] sm:$0xf]
    %v3981 = vld [vmem:[#allocation5 + $0xc8] sm:$0xf]
    %v3982 = vld [vmem:[#allocation5 + $0xcc] sm:$0xf]
    %v3983 = vld [vmem:[#allocation5 + $0xd0] sm:$0xf]
    %v3984 = vld [vmem:[#allocation5 + $0xd4] sm:$0xf]
    %v3985 = vld [vmem:[#allocation5 + $0xd8] sm:$0xf]
    %v3986 = vld [vmem:[#allocation5 + $0xdc] sm:$0xf]
    %v3987 = vld [vmem:[#allocation5 + $0xe0] sm:$0xf]
    %v3988 = vld [vmem:[#allocation5 + $0xe4] sm:$0xf]
    %v3989 = vld [vmem:[#allocation5 + $0xe8] sm:$0xf]
    %v3990 = vld [vmem:[#allocation5 + $0xec] sm:$0xf]
    %v3991 = vld [vmem:[#allocation5 + $0xf0] sm:$0xf]
    %v3992 = vld [vmem:[#allocation5 + $0xf4] sm:$0xf]
    %v3993 = vld [vmem:[#allocation5 + $0xf8] sm:$0xf]
    %v3994 = vld [vmem:[#allocation5 + $0xfc] sm:$0xf]
    %v3995 = vld [vmem:[#allocation5 + $0x100] sm:$0xf]
    %v3996 = vld [vmem:[#allocation5 + $0x104] sm:$0xf]
    %v3997 = vld [vmem:[#allocation5 + $0x108] sm:$0xf]
    %v3998 = vld [vmem:[#allocation5 + $0x10c] sm:$0xf]
    %v3999 = vld [vmem:[#allocation5 + $0x110] sm:$0xf]
    %v4000 = vld [vmem:[#allocation5 + $0x114] sm:$0xf]
    %v4001 = vld [vmem:[#allocation5 + $0x118] sm:$0xf]
    %v4002 = vld [vmem:[#allocation5 + $0x11c] sm:$0xf]
    %v4003 = vld [vmem:[#allocation5 + $0x120] sm:$0xf]
    %v4004 = vld [vmem:[#allocation5 + $0x124] sm:$0xf]
    %v4005 = vld [vmem:[#allocation5 + $0x128] sm:$0xf]
    %v4006 = vld [vmem:[#allocation5 + $0x12c] sm:$0xf]
    %v4007 = vld [vmem:[#allocation5 + $0x130] sm:$0xf]
    %v4008 = vld [vmem:[#allocation5 + $0x134] sm:$0xf]
    %v4009 = vld [vmem:[#allocation5 + $0x138] sm:$0xf]
    %v4010 = vld [vmem:[#allocation5 + $0x13c] sm:$0xf]
    %v4011 = vld [vmem:[#allocation5 + $0x140] sm:$0xf]
    %v4012 = vld [vmem:[#allocation5 + $0x144] sm:$0xf]
    %v4013 = vld [vmem:[#allocation5 + $0x148] sm:$0xf]
    %v4014 = vld [vmem:[#allocation5 + $0x14c] sm:$0xf]
    %v4015 = vld [vmem:[#allocation5 + $0x150] sm:$0xf]
    %v4016 = vld [vmem:[#allocation5 + $0x154] sm:$0xf]
    %v4017 = vld [vmem:[#allocation5 + $0x158] sm:$0xf]
    %v4018 = vld [vmem:[#allocation5 + $0x15c] sm:$0xf]
    %v4019 = vld [vmem:[#allocation5 + $0x160] sm:$0xf]
    %v4020 = vld [vmem:[#allocation5 + $0x164] sm:$0xf]
    %v4021 = vld [vmem:[#allocation5 + $0x168] sm:$0xf]
    %v4022 = vld [vmem:[#allocation5 + $0x16c] sm:$0xf]
    %v4023 = vld [vmem:[#allocation5 + $0x170] sm:$0xf]
    %v4024 = vld [vmem:[#allocation5 + $0x174] sm:$0xf]
    %v4025 = vld [vmem:[#allocation5 + $0x178] sm:$0xf]
    %v4026 = vld [vmem:[#allocation5 + $0x17c] sm:$0xf]
    %v4027 = vld [vmem:[#allocation5 + $0x180] sm:$0xf]
    %v4028 = vld [vmem:[#allocation5 + $0x184] sm:$0xf]
    %v4029 = vld [vmem:[#allocation5 + $0x188] sm:$0xf]
    %v4030 = vld [vmem:[#allocation5 + $0x18c] sm:$0xf]
    %v4031 = vld [vmem:[#allocation5 + $0x190] sm:$0xf]
    %v4032 = vld [vmem:[#allocation5 + $0x194] sm:$0xf]
    %v4033 = vld [vmem:[#allocation5 + $0x198] sm:$0xf]
    %v4034 = vld [vmem:[#allocation5 + $0x19c] sm:$0xf]
    %v4035 = vld [vmem:[#allocation5 + $0x1a0] sm:$0xf]
    %v4036 = vld [vmem:[#allocation5 + $0x1a4] sm:$0xf]
    %v4037 = vld [vmem:[#allocation5 + $0x1a8] sm:$0xf]
    %v4038 = vld [vmem:[#allocation5 + $0x1ac] sm:$0xf]
    %v4039 = vld [vmem:[#allocation5 + $0x1b0] sm:$0xf]
    %v4040 = vld [vmem:[#allocation5 + $0x1b4] sm:$0xf]
    %v4041 = vld [vmem:[#allocation5 + $0x1b8] sm:$0xf]
    %v4042 = vld [vmem:[#allocation5 + $0x1bc] sm:$0xf]
    %v4043 = vld [vmem:[#allocation5 + $0x1c0] sm:$0xf]
    %v4044 = vld [vmem:[#allocation5 + $0x1c4] sm:$0xf]
    %v4045 = vld [vmem:[#allocation5 + $0x1c8] sm:$0xf]
    %v4046 = vld [vmem:[#allocation5 + $0x1cc] sm:$0xf]
    %v4047 = vld [vmem:[#allocation5 + $0x1d0] sm:$0xf]
    %v4048 = vld [vmem:[#allocation5 + $0x1d4] sm:$0xf]
    %v4049 = vld [vmem:[#allocation5 + $0x1d8] sm:$0xf]
    %v4050 = vld [vmem:[#allocation5 + $0x1dc] sm:$0xf]
    %v4051 = vld [vmem:[#allocation5 + $0x1e0] sm:$0xf]
    %v4052 = vld [vmem:[#allocation5 + $0x1e4] sm:$0xf]
    %v4053 = vld [vmem:[#allocation5 + $0x1e8] sm:$0xf]
    %v4054 = vld [vmem:[#allocation5 + $0x1ec] sm:$0xf]
    %v4055 = vld [vmem:[#allocation5 + $0x1f0] sm:$0xf]
    %v4056 = vld [vmem:[#allocation5 + $0x1f4] sm:$0xf]
    %v4057 = vld [vmem:[#allocation5 + $0x1f8] sm:$0xf]
    %v4058 = vld [vmem:[#allocation5 + $0x1fc] sm:$0xf]
    %v4059 = vld [vmem:[%s6] sm:$0xff]
    %v4061 = vlaneseq
    %v4062 = vshrl.u32 %v4061, 7
    %v4063 = vsub.s32 0, %v4062
    %v4064 = vrot.slane %v4059, %v4063
    %v4065 = vlaneseq
    %v4066 = vshrl.u32 %v4065, 7
    %v4067 = vsub.s32 1, %v4066
    %v4068 = vrot.slane %v4059, %v4067
    %v4069 = vlaneseq
    %v4070 = vshrl.u32 %v4069, 7
    %v4071 = vsub.s32 2, %v4070
    %v4072 = vrot.slane %v4059, %v4071
    %v4073 = vlaneseq
    %v4074 = vshrl.u32 %v4073, 7
    %v4075 = vsub.s32 3, %v4074
    %v4076 = vrot.slane %v4059, %v4075
    %v4077 = vlaneseq
    %v4078 = vshrl.u32 %v4077, 7
    %v4079 = vsub.s32 4, %v4078
    %v4080 = vrot.slane %v4059, %v4079
    %v4081 = vlaneseq
    %v4082 = vshrl.u32 %v4081, 7
    %v4083 = vsub.s32 5, %v4082
    %v4084 = vrot.slane %v4059, %v4083
    %v4085 = vlaneseq
    %v4086 = vshrl.u32 %v4085, 7
    %v4087 = vsub.s32 6, %v4086
    %v4088 = vrot.slane %v4059, %v4087
    %v4089 = vlaneseq
    %v4090 = vshrl.u32 %v4089, 7
    %v4091 = vsub.s32 7, %v4090
    %v4092 = vrot.slane %v4059, %v4091
    %v4229 = vunpack.c.l.b16 %v3931
    %v4230 = vunpack.c.l.b16 %v3932
    %v4231 = vunpack.c.l.b16 %v3933
    %v4232 = vunpack.c.l.b16 %v3934
    %v4233 = vunpack.c.l.b16 %v3935
    %v4234 = vunpack.c.l.b16 %v3936
    %v4235 = vunpack.c.l.b16 %v3937
    %v4236 = vunpack.c.l.b16 %v3938
    %v4237 = vunpack.c.l.b16 %v3939
    %v4238 = vunpack.c.l.b16 %v3940
    %v4239 = vunpack.c.l.b16 %v3941
    %v4240 = vunpack.c.l.b16 %v3942
    %v4241 = vunpack.c.l.b16 %v3943
    %v4242 = vunpack.c.l.b16 %v3944
    %v4243 = vunpack.c.l.b16 %v3945
    %v4244 = vunpack.c.l.b16 %v3946
    %v4245 = vunpack.c.l.b16 %v3947
    %v4246 = vunpack.c.l.b16 %v3948
    %v4247 = vunpack.c.l.b16 %v3949
    %v4248 = vunpack.c.l.b16 %v3950
    %v4249 = vunpack.c.l.b16 %v3951
    %v4250 = vunpack.c.l.b16 %v3952
    %v4251 = vunpack.c.l.b16 %v3953
    %v4252 = vunpack.c.l.b16 %v3954
    %v4253 = vunpack.c.l.b16 %v3955
    %v4254 = vunpack.c.l.b16 %v3956
    %v4255 = vunpack.c.l.b16 %v3957
    %v4256 = vunpack.c.l.b16 %v3958
    %v4257 = vunpack.c.l.b16 %v3959
    %v4258 = vunpack.c.l.b16 %v3960
    %v4259 = vunpack.c.l.b16 %v3961
    %v4260 = vunpack.c.l.b16 %v3962
    %v4261 = vunpack.c.l.b16 %v3963
    %v4262 = vunpack.c.l.b16 %v3964
    %v4263 = vunpack.c.l.b16 %v3965
    %v4264 = vunpack.c.l.b16 %v3966
    %v4265 = vunpack.c.l.b16 %v3967
    %v4266 = vunpack.c.l.b16 %v3968
    %v4267 = vunpack.c.l.b16 %v3969
    %v4268 = vunpack.c.l.b16 %v3970
    %v4269 = vunpack.c.l.b16 %v3971
    %v4270 = vunpack.c.l.b16 %v3972
    %v4271 = vunpack.c.l.b16 %v3973
    %v4272 = vunpack.c.l.b16 %v3974
    %v4273 = vunpack.c.l.b16 %v3975
    %v4274 = vunpack.c.l.b16 %v3976
    %v4275 = vunpack.c.l.b16 %v3977
    %v4276 = vunpack.c.l.b16 %v3978
    %v4277 = vunpack.c.l.b16 %v3979
    %v4278 = vunpack.c.l.b16 %v3980
    %v4279 = vunpack.c.l.b16 %v3981
    %v4280 = vunpack.c.l.b16 %v3982
    %v4281 = vunpack.c.l.b16 %v3983
    %v4282 = vunpack.c.l.b16 %v3984
    %v4283 = vunpack.c.l.b16 %v3985
    %v4284 = vunpack.c.l.b16 %v3986
    %v4285 = vunpack.c.l.b16 %v3987
    %v4286 = vunpack.c.l.b16 %v3988
    %v4287 = vunpack.c.l.b16 %v3989
    %v4288 = vunpack.c.l.b16 %v3990
    %v4289 = vunpack.c.l.b16 %v3991
    %v4290 = vunpack.c.l.b16 %v3992
    %v4291 = vunpack.c.l.b16 %v3993
    %v4292 = vunpack.c.l.b16 %v3994
    %v4293 = vunpack.c.l.b16 %v3995
    %v4294 = vunpack.c.l.b16 %v3996
    %v4295 = vunpack.c.l.b16 %v3997
    %v4296 = vunpack.c.l.b16 %v3998
    %v4297 = vunpack.c.l.b16 %v3999
    %v4298 = vunpack.c.l.b16 %v4000
    %v4299 = vunpack.c.l.b16 %v4001
    %v4300 = vunpack.c.l.b16 %v4002
    %v4301 = vunpack.c.l.b16 %v4003
    %v4302 = vunpack.c.l.b16 %v4004
    %v4303 = vunpack.c.l.b16 %v4005
    %v4304 = vunpack.c.l.b16 %v4006
    %v4305 = vunpack.c.l.b16 %v4007
    %v4306 = vunpack.c.l.b16 %v4008
    %v4307 = vunpack.c.l.b16 %v4009
    %v4308 = vunpack.c.l.b16 %v4010
    %v4309 = vunpack.c.l.b16 %v4011
    %v4310 = vunpack.c.l.b16 %v4012
    %v4311 = vunpack.c.l.b16 %v4013
    %v4312 = vunpack.c.l.b16 %v4014
    %v4313 = vunpack.c.l.b16 %v4015
    %v4314 = vunpack.c.l.b16 %v4016
    %v4315 = vunpack.c.l.b16 %v4017
    %v4316 = vunpack.c.l.b16 %v4018
    %v4317 = vunpack.c.l.b16 %v4019
    %v4318 = vunpack.c.l.b16 %v4020
    %v4319 = vunpack.c.l.b16 %v4021
    %v4320 = vunpack.c.l.b16 %v4022
    %v4321 = vunpack.c.l.b16 %v4023
    %v4322 = vunpack.c.l.b16 %v4024
    %v4323 = vunpack.c.l.b16 %v4025
    %v4324 = vunpack.c.l.b16 %v4026
    %v4325 = vunpack.c.l.b16 %v4027
    %v4326 = vunpack.c.l.b16 %v4028
    %v4327 = vunpack.c.l.b16 %v4029
    %v4328 = vunpack.c.l.b16 %v4030
    %v4329 = vunpack.c.l.b16 %v4031
    %v4330 = vunpack.c.l.b16 %v4032
    %v4331 = vunpack.c.l.b16 %v4033
    %v4332 = vunpack.c.l.b16 %v4034
    %v4333 = vunpack.c.l.b16 %v4035
    %v4334 = vunpack.c.l.b16 %v4036
    %v4335 = vunpack.c.l.b16 %v4037
    %v4336 = vunpack.c.l.b16 %v4038
    %v4337 = vunpack.c.l.b16 %v4039
    %v4338 = vunpack.c.l.b16 %v4040
    %v4339 = vunpack.c.l.b16 %v4041
    %v4340 = vunpack.c.l.b16 %v4042
    %v4341 = vunpack.c.l.b16 %v4043
    %v4342 = vunpack.c.l.b16 %v4044
    %v4343 = vunpack.c.l.b16 %v4045
    %v4344 = vunpack.c.l.b16 %v4046
    %v4345 = vunpack.c.l.b16 %v4047
    %v4346 = vunpack.c.l.b16 %v4048
    %v4347 = vunpack.c.l.b16 %v4049
    %v4348 = vunpack.c.l.b16 %v4050
    %v4349 = vunpack.c.l.b16 %v4051
    %v4350 = vunpack.c.l.b16 %v4052
    %v4351 = vunpack.c.l.b16 %v4053
    %v4352 = vunpack.c.l.b16 %v4054
    %v4353 = vunpack.c.l.b16 %v4055
    %v4354 = vunpack.c.l.b16 %v4056
    %v4355 = vunpack.c.l.b16 %v4057
    %v4356 = vunpack.c.l.b16 %v4058
    %v4357 = vpack.c.b16 %v4230, %v4229
    %v4358 = vpack.c.b16 %v4232, %v4231
    %v4359 = vpack.c.b16 %v4234, %v4233
    %v4360 = vpack.c.b16 %v4236, %v4235
    %v4361 = vpack.c.b16 %v4238, %v4237
    %v4362 = vpack.c.b16 %v4240, %v4239
    %v4363 = vpack.c.b16 %v4242, %v4241
    %v4364 = vpack.c.b16 %v4244, %v4243
    %v4365 = vpack.c.b16 %v4246, %v4245
    %v4366 = vpack.c.b16 %v4248, %v4247
    %v4367 = vpack.c.b16 %v4250, %v4249
    %v4368 = vpack.c.b16 %v4252, %v4251
    %v4369 = vpack.c.b16 %v4254, %v4253
    %v4370 = vpack.c.b16 %v4256, %v4255
    %v4371 = vpack.c.b16 %v4258, %v4257
    %v4372 = vpack.c.b16 %v4260, %v4259
    %v4373 = vpack.c.b16 %v4262, %v4261
    %v4374 = vpack.c.b16 %v4264, %v4263
    %v4375 = vpack.c.b16 %v4266, %v4265
    %v4376 = vpack.c.b16 %v4268, %v4267
    %v4377 = vpack.c.b16 %v4270, %v4269
    %v4378 = vpack.c.b16 %v4272, %v4271
    %v4379 = vpack.c.b16 %v4274, %v4273
    %v4380 = vpack.c.b16 %v4276, %v4275
    %v4381 = vpack.c.b16 %v4278, %v4277
    %v4382 = vpack.c.b16 %v4280, %v4279
    %v4383 = vpack.c.b16 %v4282, %v4281
    %v4384 = vpack.c.b16 %v4284, %v4283
    %v4385 = vpack.c.b16 %v4286, %v4285
    %v4386 = vpack.c.b16 %v4288, %v4287
    %v4387 = vpack.c.b16 %v4290, %v4289
    %v4388 = vpack.c.b16 %v4292, %v4291
    %v4389 = vpack.c.b16 %v4294, %v4293
    %v4390 = vpack.c.b16 %v4296, %v4295
    %v4391 = vpack.c.b16 %v4298, %v4297
    %v4392 = vpack.c.b16 %v4300, %v4299
    %v4393 = vpack.c.b16 %v4302, %v4301
    %v4394 = vpack.c.b16 %v4304, %v4303
    %v4395 = vpack.c.b16 %v4306, %v4305
    %v4396 = vpack.c.b16 %v4308, %v4307
    %v4397 = vpack.c.b16 %v4310, %v4309
    %v4398 = vpack.c.b16 %v4312, %v4311
    %v4399 = vpack.c.b16 %v4314, %v4313
    %v4400 = vpack.c.b16 %v4316, %v4315
    %v4401 = vpack.c.b16 %v4318, %v4317
    %v4402 = vpack.c.b16 %v4320, %v4319
    %v4403 = vpack.c.b16 %v4322, %v4321
    %v4404 = vpack.c.b16 %v4324, %v4323
    %v4405 = vpack.c.b16 %v4326, %v4325
    %v4406 = vpack.c.b16 %v4328, %v4327
    %v4407 = vpack.c.b16 %v4330, %v4329
    %v4408 = vpack.c.b16 %v4332, %v4331
    %v4409 = vpack.c.b16 %v4334, %v4333
    %v4410 = vpack.c.b16 %v4336, %v4335
    %v4411 = vpack.c.b16 %v4338, %v4337
    %v4412 = vpack.c.b16 %v4340, %v4339
    %v4413 = vpack.c.b16 %v4342, %v4341
    %v4414 = vpack.c.b16 %v4344, %v4343
    %v4415 = vpack.c.b16 %v4346, %v4345
    %v4416 = vpack.c.b16 %v4348, %v4347
    %v4417 = vpack.c.b16 %v4350, %v4349
    %v4418 = vpack.c.b16 %v4352, %v4351
    %v4419 = vpack.c.b16 %v4354, %v4353
    %v4420 = vpack.c.b16 %v4356, %v4355
    %vm4421 = vcmask 261120
    %v4423 = vsel %vm4421, %v3930, 0
    %v4426 = vsel %vm4421, %v4357, 0
    %v4429 = vsel %vm4421, %v4358, 0
    %v4432 = vsel %vm4421, %v4359, 0
    %v4435 = vsel %vm4421, %v4360, 0
    %v4438 = vsel %vm4421, %v4361, 0
    %v4441 = vsel %vm4421, %v4362, 0
    %v4444 = vsel %vm4421, %v4363, 0
    %v4447 = vsel %vm4421, %v4364, 0
    %v4450 = vsel %vm4421, %v4365, 0
    %v4453 = vsel %vm4421, %v4366, 0
    %v4456 = vsel %vm4421, %v4367, 0
    %v4459 = vsel %vm4421, %v4368, 0
    %v4462 = vsel %vm4421, %v4369, 0
    %v4465 = vsel %vm4421, %v4370, 0
    %v4468 = vsel %vm4421, %v4371, 0
    %v4471 = vsel %vm4421, %v4372, 0
    %v4474 = vsel %vm4421, %v4373, 0
    %v4477 = vsel %vm4421, %v4374, 0
    %v4480 = vsel %vm4421, %v4375, 0
    %v4483 = vsel %vm4421, %v4376, 0
    %v4486 = vsel %vm4421, %v4377, 0
    %v4489 = vsel %vm4421, %v4378, 0
    %v4492 = vsel %vm4421, %v4379, 0
    %v4495 = vsel %vm4421, %v4380, 0
    %v4498 = vsel %vm4421, %v4381, 0
    %v4501 = vsel %vm4421, %v4382, 0
    %v4504 = vsel %vm4421, %v4383, 0
    %v4507 = vsel %vm4421, %v4384, 0
    %v4510 = vsel %vm4421, %v4385, 0
    %v4513 = vsel %vm4421, %v4386, 0
    %v4516 = vsel %vm4421, %v4387, 0
    %v4519 = vsel %vm4421, %v4388, 0
    %v4522 = vsel %vm4421, %v4389, 0
    %v4525 = vsel %vm4421, %v4390, 0
    %v4528 = vsel %vm4421, %v4391, 0
    %v4531 = vsel %vm4421, %v4392, 0
    %v4534 = vsel %vm4421, %v4393, 0
    %v4537 = vsel %vm4421, %v4394, 0
    %v4540 = vsel %vm4421, %v4395, 0
    %v4543 = vsel %vm4421, %v4396, 0
    %v4546 = vsel %vm4421, %v4397, 0
    %v4549 = vsel %vm4421, %v4398, 0
    %v4552 = vsel %vm4421, %v4399, 0
    %v4555 = vsel %vm4421, %v4400, 0
    %v4558 = vsel %vm4421, %v4401, 0
    %v4561 = vsel %vm4421, %v4402, 0
    %v4564 = vsel %vm4421, %v4403, 0
    %v4567 = vsel %vm4421, %v4404, 0
    %v4570 = vsel %vm4421, %v4405, 0
    %v4573 = vsel %vm4421, %v4406, 0
    %v4576 = vsel %vm4421, %v4407, 0
    %v4579 = vsel %vm4421, %v4408, 0
    %v4582 = vsel %vm4421, %v4409, 0
    %v4585 = vsel %vm4421, %v4410, 0
    %v4588 = vsel %vm4421, %v4411, 0
    %v4591 = vsel %vm4421, %v4412, 0
    %v4594 = vsel %vm4421, %v4413, 0
    %v4597 = vsel %vm4421, %v4414, 0
    %v4600 = vsel %vm4421, %v4415, 0
    %v4603 = vsel %vm4421, %v4416, 0
    %v4606 = vsel %vm4421, %v4417, 0
    %v4609 = vsel %vm4421, %v4418, 0
    %v4612 = vsel %vm4421, %v4419, 0
    %v4615 = vsel %vm4421, %v4420, 0
    %4617 = vmatprep.subr.bf16.mxu0 0
    %4618 = vmatpush1.bf16.xpose.msra.mxu0 %v4447
    %4619 = vmatprep.subr.bf16.mxu0 0
    %4620 = vmatpush1.bf16.xpose.msra.mxu0 %v4444
    %4621 = vmatprep.subr.bf16.mxu0 0
    %4622 = vmatpush1.bf16.xpose.msra.mxu0 %v4441
    %4623 = vmatprep.subr.bf16.mxu0 0
    %4624 = vmatpush1.bf16.xpose.msra.mxu0 %v4438
    %4625 = vmatprep.subr.bf16.mxu0 0
    %4626 = vmatpush1.bf16.xpose.msra.mxu0 %v4435
    %4627 = vmatprep.subr.bf16.mxu0 0
    %4628 = vmatpush1.bf16.xpose.msra.mxu0 %v4432
    %4629 = vmatprep.subr.bf16.mxu0 0
    %4630 = vmatpush1.bf16.xpose.msra.mxu0 %v4429
    %4631 = vmatprep.subr.bf16.mxu0 0
    %4632 = vmatpush1.bf16.xpose.msra.mxu0 %v4426
    %4633 = vmatprep.subr.bf16.mxu0 0
    %4634 = vmatpush2.bf16.xpose.msra.mxu0 %v4471
    %4635 = vmatprep.subr.bf16.mxu0 0
    %4636 = vmatpush2.bf16.xpose.msra.mxu0 %v4468
    %4637 = vmatprep.subr.bf16.mxu0 0
    %4638 = vmatpush2.bf16.xpose.msra.mxu0 %v4465
    %4639 = vmatprep.subr.bf16.mxu0 0
    %4640 = vmatpush2.bf16.xpose.msra.mxu0 %v4462
    %4641 = vmatprep.subr.bf16.mxu0 0
    %4642 = vmatpush2.bf16.xpose.msra.mxu0 %v4459
    %4643 = vmatprep.subr.bf16.mxu0 0
    %4644 = vmatpush2.bf16.xpose.msra.mxu0 %v4456
    %4645 = vmatprep.subr.bf16.mxu0 0
    %4646 = vmatpush2.bf16.xpose.msra.mxu0 %v4453
    %4647 = vmatprep.subr.bf16.mxu0 0
    %4648 = vmatpush2.bf16.xpose.msra.mxu0 %v4450
    %4649 = vmatprep.mubr.bf16.mxu0 0
    %4650 = vmatmul.mubr.bf16.gmra.mxu0 %v4423
    %v4651 = vpop.f32.mrf.mxu0
    %v4652 = vadd.f32 %v4064, %v4651
    %v4653 = vpop.f32.mrf.mxu0
    %v4654 = vadd.f32 %v4068, %v4653
    %v4655 = vpop.f32.mrf.mxu0
    %v4656 = vpop.f32.mrf.mxu0
    %4657 = vdwg.mxu0
    %4658 = vmatprep.subr.bf16.mxu0 0
    %4659 = vmatpush1.bf16.xpose.msra.mxu0 %v4495
    %4660 = vmatprep.subr.bf16.mxu0 0
    %4661 = vmatpush1.bf16.xpose.msra.mxu0 %v4492
    %4662 = vmatprep.subr.bf16.mxu0 0
    %4663 = vmatpush1.bf16.xpose.msra.mxu0 %v4489
    %4664 = vmatprep.subr.bf16.mxu0 0
    %4665 = vmatpush1.bf16.xpose.msra.mxu0 %v4486
    %4666 = vmatprep.subr.bf16.mxu0 0
    %4667 = vmatpush1.bf16.xpose.msra.mxu0 %v4483
    %4668 = vmatprep.subr.bf16.mxu0 0
    %4669 = vmatpush1.bf16.xpose.msra.mxu0 %v4480
    %4670 = vmatprep.subr.bf16.mxu0 0
    %4671 = vmatpush1.bf16.xpose.msra.mxu0 %v4477
    %4672 = vmatprep.subr.bf16.mxu0 0
    %4673 = vmatpush1.bf16.xpose.msra.mxu0 %v4474
    %4674 = vmatprep.subr.bf16.mxu0 0
    %4675 = vmatpush2.bf16.xpose.msra.mxu0 %v4519
    %4676 = vmatprep.subr.bf16.mxu0 0
    %4677 = vmatpush2.bf16.xpose.msra.mxu0 %v4516
    %4678 = vmatprep.subr.bf16.mxu0 0
    %4679 = vmatpush2.bf16.xpose.msra.mxu0 %v4513
    %4680 = vmatprep.subr.bf16.mxu0 0
    %4681 = vmatpush2.bf16.xpose.msra.mxu0 %v4510
    %4682 = vmatprep.subr.bf16.mxu0 0
    %4683 = vmatpush2.bf16.xpose.msra.mxu0 %v4507
    %4684 = vmatprep.subr.bf16.mxu0 0
    %4685 = vmatpush2.bf16.xpose.msra.mxu0 %v4504
    %4686 = vmatprep.subr.bf16.mxu0 0
    %4687 = vmatpush2.bf16.xpose.msra.mxu0 %v4501
    %4688 = vmatprep.subr.bf16.mxu0 0
    %4689 = vmatpush2.bf16.xpose.msra.mxu0 %v4498
    %4690 = vmatprep.mubr.bf16.mxu0 0
    %4691 = vmatmul.mubr.bf16.gmra.mxu0 %v4423
    %v4692 = vpop.f32.mrf.mxu0
    %v4693 = vadd.f32 %v4072, %v4692
    %v4694 = vpop.f32.mrf.mxu0
    %v4695 = vadd.f32 %v4076, %v4694
    %v4696 = vpop.f32.mrf.mxu0
    %v4697 = vpop.f32.mrf.mxu0
    %4698 = vdwg.mxu0
    %4699 = vmatprep.subr.bf16.mxu0 0
    %4700 = vmatpush1.bf16.xpose.msra.mxu0 %v4543
    %4701 = vmatprep.subr.bf16.mxu0 0
    %4702 = vmatpush1.bf16.xpose.msra.mxu0 %v4540
    %4703 = vmatprep.subr.bf16.mxu0 0
    %4704 = vmatpush1.bf16.xpose.msra.mxu0 %v4537
    %4705 = vmatprep.subr.bf16.mxu0 0
    %4706 = vmatpush1.bf16.xpose.msra.mxu0 %v4534
    %4707 = vmatprep.subr.bf16.mxu0 0
    %4708 = vmatpush1.bf16.xpose.msra.mxu0 %v4531
    %4709 = vmatprep.subr.bf16.mxu0 0
    %4710 = vmatpush1.bf16.xpose.msra.mxu0 %v4528
    %4711 = vmatprep.subr.bf16.mxu0 0
    %4712 = vmatpush1.bf16.xpose.msra.mxu0 %v4525
    %4713 = vmatprep.subr.bf16.mxu0 0
    %4714 = vmatpush1.bf16.xpose.msra.mxu0 %v4522
    %4715 = vmatprep.subr.bf16.mxu0 0
    %4716 = vmatpush2.bf16.xpose.msra.mxu0 %v4567
    %4717 = vmatprep.subr.bf16.mxu0 0
    %4718 = vmatpush2.bf16.xpose.msra.mxu0 %v4564
    %4719 = vmatprep.subr.bf16.mxu0 0
    %4720 = vmatpush2.bf16.xpose.msra.mxu0 %v4561
    %4721 = vmatprep.subr.bf16.mxu0 0
    %4722 = vmatpush2.bf16.xpose.msra.mxu0 %v4558
    %4723 = vmatprep.subr.bf16.mxu0 0
    %4724 = vmatpush2.bf16.xpose.msra.mxu0 %v4555
    %4725 = vmatprep.subr.bf16.mxu0 0
    %4726 = vmatpush2.bf16.xpose.msra.mxu0 %v4552
    %4727 = vmatprep.subr.bf16.mxu0 0
    %4728 = vmatpush2.bf16.xpose.msra.mxu0 %v4549
    %4729 = vmatprep.subr.bf16.mxu0 0
    %4730 = vmatpush2.bf16.xpose.msra.mxu0 %v4546
    %4731 = vmatprep.mubr.bf16.mxu0 0
    %4732 = vmatmul.mubr.bf16.gmra.mxu0 %v4423
    %v4733 = vpop.f32.mrf.mxu0
    %v4734 = vadd.f32 %v4080, %v4733
    %v4735 = vpop.f32.mrf.mxu0
    %v4736 = vadd.f32 %v4084, %v4735
    %v4737 = vpop.f32.mrf.mxu0
    %v4738 = vpop.f32.mrf.mxu0
    %4739 = vdwg.mxu0
    %4740 = vmatprep.subr.bf16.mxu0 0
    %4741 = vmatpush1.bf16.xpose.msra.mxu0 %v4591
    %4742 = vmatprep.subr.bf16.mxu0 0
    %4743 = vmatpush1.bf16.xpose.msra.mxu0 %v4588
    %4744 = vmatprep.subr.bf16.mxu0 0
    %4745 = vmatpush1.bf16.xpose.msra.mxu0 %v4585
    %4746 = vmatprep.subr.bf16.mxu0 0
    %4747 = vmatpush1.bf16.xpose.msra.mxu0 %v4582
    %4748 = vmatprep.subr.bf16.mxu0 0
    %4749 = vmatpush1.bf16.xpose.msra.mxu0 %v4579
    %4750 = vmatprep.subr.bf16.mxu0 0
    %4751 = vmatpush1.bf16.xpose.msra.mxu0 %v4576
    %4752 = vmatprep.subr.bf16.mxu0 0
    %4753 = vmatpush1.bf16.xpose.msra.mxu0 %v4573
    %4754 = vmatprep.subr.bf16.mxu0 0
    %4755 = vmatpush1.bf16.xpose.msra.mxu0 %v4570
    %4756 = vmatprep.subr.bf16.mxu0 0
    %4757 = vmatpush2.bf16.xpose.msra.mxu0 %v4615
    %4758 = vmatprep.subr.bf16.mxu0 0
    %4759 = vmatpush2.bf16.xpose.msra.mxu0 %v4612
    %4760 = vmatprep.subr.bf16.mxu0 0
    %4761 = vmatpush2.bf16.xpose.msra.mxu0 %v4609
    %4762 = vmatprep.subr.bf16.mxu0 0
    %4763 = vmatpush2.bf16.xpose.msra.mxu0 %v4606
    %4764 = vmatprep.subr.bf16.mxu0 0
    %4765 = vmatpush2.bf16.xpose.msra.mxu0 %v4603
    %4766 = vmatprep.subr.bf16.mxu0 0
    %4767 = vmatpush2.bf16.xpose.msra.mxu0 %v4600
    %4768 = vmatprep.subr.bf16.mxu0 0
    %4769 = vmatpush2.bf16.xpose.msra.mxu0 %v4597
    %4770 = vmatprep.subr.bf16.mxu0 0
    %4771 = vmatpush2.bf16.xpose.msra.mxu0 %v4594
    %4772 = vmatprep.mubr.bf16.mxu0 0
    %4773 = vmatmul.mubr.bf16.gmra.mxu0 %v4423
    %v4774 = vpop.f32.mrf.mxu0
    %v4775 = vadd.f32 %v4088, %v4774
    %v4776 = vpop.f32.mrf.mxu0
    %v4777 = vadd.f32 %v4092, %v4776
    %v4778 = vpop.f32.mrf.mxu0
    %v4779 = vpop.f32.mrf.mxu0
    %4780 = vdwg.mxu0
    %v4781 = vadd.f32 %v4652, %v3614
    %v4782 = vadd.f32 %v4654, %v3618
    %v4783 = vadd.f32 %v4693, %v3622
    %v4784 = vadd.f32 %v4695, %v3626
    %v4785 = vadd.f32 %v4734, %v3630
    %v4786 = vadd.f32 %v4736, %v3634
    %v4787 = vadd.f32 %v4775, %v3638
    %v4788 = vadd.f32 %v4777, %v3642
    %v4797 = vcombine.low %v4781, %v4782
    %v4798 = vcombine.low %v4783, %v4784
    %v4800 = vunpack.c.l.s4 1983009808
    %v4801 = vunpack.c.0.s8 %v4800
    %v4802 = vlaneseq
    %v4803 = vshrl.u32 %v4802, 7
    %v4804 = vsub.s32 %v4801, %v4803
    %v4805 = vrot.slane %v4797, %v4804
    %v4807 = vunpack.c.l.s4 1983009808
    %v4808 = vunpack.c.0.s8 %v4807
    %v4809 = vlaneseq
    %v4810 = vshrl.u32 %v4809, 7
    %v4811 = vsub.s32 %v4808, %v4810
    %v4812 = vrot.slane %v4798, %v4811
    %v4813 = vcombine.low %v4805, %v4812
    %v4814 = vcombine.low %v4785, %v4786
    %v4815 = vcombine.low %v4787, %v4788
    %v4817 = vunpack.c.l.s4 1983009808
    %v4818 = vunpack.c.0.s8 %v4817
    %v4819 = vlaneseq
    %v4820 = vshrl.u32 %v4819, 7
    %v4821 = vsub.s32 %v4818, %v4820
    %v4822 = vrot.slane %v4814, %v4821
    %v4824 = vunpack.c.l.s4 1983009808
    %v4825 = vunpack.c.0.s8 %v4824
    %v4826 = vlaneseq
    %v4827 = vshrl.u32 %v4826, 7
    %v4828 = vsub.s32 %v4825, %v4827
    %v4829 = vrot.slane %v4815, %v4828
    %v4830 = vcombine.low %v4822, %v4829
    %4833 = vst [vmem:[#allocation10] sm:$0xff] %v4813
    %4834 = vst [vmem:[#allocation10 + $0x8] sm:$0xff] %v4830
    %v4835 = vpack.c.bf16 %v3555, %v3555
    %v4836 = vpack.c.bf16 %v3556, %v3556
    %v4837 = vpack.c.bf16 %v3557, %v3557
    %v4838 = vpack.c.bf16 %v3558, %v3558
    %v4839 = vpack.c.bf16 %v3559, %v3559
    %v4840 = vpack.c.bf16 %v3560, %v3560
    %v4841 = vpack.c.bf16 %v3561, %v3561
    %v4842 = vpack.c.bf16 %v3562, %v3562
    %v4843 = vld [vmem:[%s7] sm:$0xff]
    %v4844 = vld [vmem:[%s7 + $0x8] sm:$0xff]
    %v4845 = vld [vmem:[%s7 + $0x10] sm:$0xff]
    %v4846 = vld [vmem:[%s7 + $0x18] sm:$0xff]
    %v4847 = vld [vmem:[%s8] sm:$0x1]
    %v4849 = vlaneseq
    %v4850 = vshrl.u32 %v4849, 7
    %v4851 = vsub.s32 0, %v4850
    %v4852 = vrot.slane %v4847, %v4851
    %v4858 = vunpack.c.l.b16 %v4843
    %v4859 = vunpack.c.h.b16 %v4843
    %v4860 = vunpack.c.l.b16 %v4844
    %v4861 = vunpack.c.h.b16 %v4844
    %v4862 = vunpack.c.l.b16 %v4845
    %v4863 = vunpack.c.h.b16 %v4845
    %v4864 = vunpack.c.l.b16 %v4846
    %v4865 = vunpack.c.h.b16 %v4846
    %v4866 = vpack.c.b16 %v4858, %v4858
    %v4867 = vpack.c.b16 %v4859, %v4859
    %v4868 = vpack.c.b16 %v4860, %v4860
    %v4869 = vpack.c.b16 %v4861, %v4861
    %v4870 = vpack.c.b16 %v4862, %v4862
    %v4871 = vpack.c.b16 %v4863, %v4863
    %v4872 = vpack.c.b16 %v4864, %v4864
    %v4873 = vpack.c.b16 %v4865, %v4865
    %4882 = vmatprep.subr.bf16.mxu0 0
    %4883 = vmatpush1.bf16.xpose.msra.mxu0 0
    %4884 = vmatprep.subr.bf16.mxu0 0
    %4885 = vmatpush1.bf16.xpose.msra.mxu0 0
    %4886 = vmatprep.subr.bf16.mxu0 0
    %4887 = vmatpush1.bf16.xpose.msra.mxu0 0
    %4888 = vmatprep.subr.bf16.mxu0 0
    %4889 = vmatpush1.bf16.xpose.msra.mxu0 0
    %4890 = vmatprep.subr.bf16.mxu0 0
    %4891 = vmatpush1.bf16.xpose.msra.mxu0 0
    %4892 = vmatprep.subr.bf16.mxu0 0
    %4893 = vmatpush1.bf16.xpose.msra.mxu0 0
    %4894 = vmatprep.subr.bf16.mxu0 0
    %4895 = vmatpush1.bf16.xpose.msra.mxu0 0
    %4896 = vmatprep.subr.bf16.mxu0 %v4867
    %4897 = vmatpush1.bf16.xpose.msra.mxu0 %v4866
    %4898 = vmatprep.subr.bf16.mxu0 0
    %4899 = vmatpush2.bf16.xpose.msra.mxu0 0
    %4900 = vmatprep.subr.bf16.mxu0 0
    %4901 = vmatpush2.bf16.xpose.msra.mxu0 0
    %4902 = vmatprep.subr.bf16.mxu0 0
    %4903 = vmatpush2.bf16.xpose.msra.mxu0 0
    %4904 = vmatprep.subr.bf16.mxu0 0
    %4905 = vmatpush2.bf16.xpose.msra.mxu0 0
    %4906 = vmatprep.subr.bf16.mxu0 0
    %4907 = vmatpush2.bf16.xpose.msra.mxu0 0
    %4908 = vmatprep.subr.bf16.mxu0 0
    %4909 = vmatpush2.bf16.xpose.msra.mxu0 0
    %4910 = vmatprep.subr.bf16.mxu0 0
    %4911 = vmatpush2.bf16.xpose.msra.mxu0 0
    %4912 = vmatprep.subr.bf16.mxu0 0
    %4913 = vmatpush2.bf16.xpose.msra.mxu0 0
    %4914 = vmatprep.mubr.bf16.mxu0 %v4836
    %4915 = vmatmul.mubr.bf16.gmra.mxu0 %v4835
    %v4916 = vpop.f32.mrf.mxu0
    %v4917 = vadd.f32 %v4852, %v4916
    %v4918 = vpop.f32.mrf.mxu0
    %v4919 = vpop.f32.mrf.mxu0
    %v4920 = vpop.f32.mrf.mxu0
    %4921 = vdwg.mxu0
    %4922 = vmatprep.subr.bf16.mxu0 0
    %4923 = vmatpush1.bf16.xpose.msra.mxu0 0
    %4924 = vmatprep.subr.bf16.mxu0 0
    %4925 = vmatpush1.bf16.xpose.msra.mxu0 0
    %4926 = vmatprep.subr.bf16.mxu0 0
    %4927 = vmatpush1.bf16.xpose.msra.mxu0 0
    %4928 = vmatprep.subr.bf16.mxu0 0
    %4929 = vmatpush1.bf16.xpose.msra.mxu0 0
    %4930 = vmatprep.subr.bf16.mxu0 0
    %4931 = vmatpush1.bf16.xpose.msra.mxu0 0
    %4932 = vmatprep.subr.bf16.mxu0 0
    %4933 = vmatpush1.bf16.xpose.msra.mxu0 0
    %4934 = vmatprep.subr.bf16.mxu0 0
    %4935 = vmatpush1.bf16.xpose.msra.mxu0 0
    %4936 = vmatprep.subr.bf16.mxu0 %v4869
    %4937 = vmatpush1.bf16.xpose.msra.mxu0 %v4868
    %4938 = vmatprep.subr.bf16.mxu0 0
    %4939 = vmatpush2.bf16.xpose.msra.mxu0 0
    %4940 = vmatprep.subr.bf16.mxu0 0
    %4941 = vmatpush2.bf16.xpose.msra.mxu0 0
    %4942 = vmatprep.subr.bf16.mxu0 0
    %4943 = vmatpush2.bf16.xpose.msra.mxu0 0
    %4944 = vmatprep.subr.bf16.mxu0 0
    %4945 = vmatpush2.bf16.xpose.msra.mxu0 0
    %4946 = vmatprep.subr.bf16.mxu0 0
    %4947 = vmatpush2.bf16.xpose.msra.mxu0 0
    %4948 = vmatprep.subr.bf16.mxu0 0
    %4949 = vmatpush2.bf16.xpose.msra.mxu0 0
    %4950 = vmatprep.subr.bf16.mxu0 0
    %4951 = vmatpush2.bf16.xpose.msra.mxu0 0
    %4952 = vmatprep.subr.bf16.mxu0 0
    %4953 = vmatpush2.bf16.xpose.msra.mxu0 0
    %4954 = vmatprep.mubr.bf16.mxu0 %v4838
    %4955 = vmatmul.mubr.bf16.gmra.mxu0 %v4837
    %v4956 = vpop.f32.mrf.mxu0
    %v4957 = vadd.f32 %v4917, %v4956
    %v4958 = vpop.f32.mrf.mxu0
    %v4959 = vpop.f32.mrf.mxu0
    %v4960 = vpop.f32.mrf.mxu0
    %4961 = vdwg.mxu0
    %4962 = vmatprep.subr.bf16.mxu0 0
    %4963 = vmatpush1.bf16.xpose.msra.mxu0 0
    %4964 = vmatprep.subr.bf16.mxu0 0
    %4965 = vmatpush1.bf16.xpose.msra.mxu0 0
    %4966 = vmatprep.subr.bf16.mxu0 0
    %4967 = vmatpush1.bf16.xpose.msra.mxu0 0
    %4968 = vmatprep.subr.bf16.mxu0 0
    %4969 = vmatpush1.bf16.xpose.msra.mxu0 0
    %4970 = vmatprep.subr.bf16.mxu0 0
    %4971 = vmatpush1.bf16.xpose.msra.mxu0 0
    %4972 = vmatprep.subr.bf16.mxu0 0
    %4973 = vmatpush1.bf16.xpose.msra.mxu0 0
    %4974 = vmatprep.subr.bf16.mxu0 0
    %4975 = vmatpush1.bf16.xpose.msra.mxu0 0
    %4976 = vmatprep.subr.bf16.mxu0 %v4871
    %4977 = vmatpush1.bf16.xpose.msra.mxu0 %v4870
    %4978 = vmatprep.subr.bf16.mxu0 0
    %4979 = vmatpush2.bf16.xpose.msra.mxu0 0
    %4980 = vmatprep.subr.bf16.mxu0 0
    %4981 = vmatpush2.bf16.xpose.msra.mxu0 0
    %4982 = vmatprep.subr.bf16.mxu0 0
    %4983 = vmatpush2.bf16.xpose.msra.mxu0 0
    %4984 = vmatprep.subr.bf16.mxu0 0
    %4985 = vmatpush2.bf16.xpose.msra.mxu0 0
    %4986 = vmatprep.subr.bf16.mxu0 0
    %4987 = vmatpush2.bf16.xpose.msra.mxu0 0
    %4988 = vmatprep.subr.bf16.mxu0 0
    %4989 = vmatpush2.bf16.xpose.msra.mxu0 0
    %4990 = vmatprep.subr.bf16.mxu0 0
    %4991 = vmatpush2.bf16.xpose.msra.mxu0 0
    %4992 = vmatprep.subr.bf16.mxu0 0
    %4993 = vmatpush2.bf16.xpose.msra.mxu0 0
    %4994 = vmatprep.mubr.bf16.mxu0 %v4840
    %4995 = vmatmul.mubr.bf16.gmra.mxu0 %v4839
    %v4996 = vpop.f32.mrf.mxu0
    %v4997 = vadd.f32 %v4957, %v4996
    %v4998 = vpop.f32.mrf.mxu0
    %v4999 = vpop.f32.mrf.mxu0
    %v5000 = vpop.f32.mrf.mxu0
    %5001 = vdwg.mxu0
    %5002 = vmatprep.subr.bf16.mxu0 0
    %5003 = vmatpush1.bf16.xpose.msra.mxu0 0
    %5004 = vmatprep.subr.bf16.mxu0 0
    %5005 = vmatpush1.bf16.xpose.msra.mxu0 0
    %5006 = vmatprep.subr.bf16.mxu0 0
    %5007 = vmatpush1.bf16.xpose.msra.mxu0 0
    %5008 = vmatprep.subr.bf16.mxu0 0
    %5009 = vmatpush1.bf16.xpose.msra.mxu0 0
    %5010 = vmatprep.subr.bf16.mxu0 0
    %5011 = vmatpush1.bf16.xpose.msra.mxu0 0
    %5012 = vmatprep.subr.bf16.mxu0 0
    %5013 = vmatpush1.bf16.xpose.msra.mxu0 0
    %5014 = vmatprep.subr.bf16.mxu0 0
    %5015 = vmatpush1.bf16.xpose.msra.mxu0 0
    %5016 = vmatprep.subr.bf16.mxu0 %v4873
    %5017 = vmatpush1.bf16.xpose.msra.mxu0 %v4872
    %5018 = vmatprep.subr.bf16.mxu0 0
    %5019 = vmatpush2.bf16.xpose.msra.mxu0 0
    %5020 = vmatprep.subr.bf16.mxu0 0
    %5021 = vmatpush2.bf16.xpose.msra.mxu0 0
    %5022 = vmatprep.subr.bf16.mxu0 0
    %5023 = vmatpush2.bf16.xpose.msra.mxu0 0
    %5024 = vmatprep.subr.bf16.mxu0 0
    %5025 = vmatpush2.bf16.xpose.msra.mxu0 0
    %5026 = vmatprep.subr.bf16.mxu0 0
    %5027 = vmatpush2.bf16.xpose.msra.mxu0 0
    %5028 = vmatprep.subr.bf16.mxu0 0
    %5029 = vmatpush2.bf16.xpose.msra.mxu0 0
    %5030 = vmatprep.subr.bf16.mxu0 0
    %5031 = vmatpush2.bf16.xpose.msra.mxu0 0
    %5032 = vmatprep.subr.bf16.mxu0 0
    %5033 = vmatpush2.bf16.xpose.msra.mxu0 0
    %5034 = vmatprep.mubr.bf16.mxu0 %v4842
    %5035 = vmatmul.mubr.bf16.gmra.mxu0 %v4841
    %v5036 = vpop.f32.mrf.mxu0
    %v5037 = vadd.f32 %v4997, %v5036
    %v5038 = vpop.f32.mrf.mxu0
    %v5039 = vpop.f32.mrf.mxu0
    %v5040 = vpop.f32.mrf.mxu0
    %5041 = vdwg.mxu0
    %vm5042 = vcmask 58368
    %5043 = vst.msk [vmem:[#allocation7] sm:$0x3] %vm5042, %v5037
    // Predicated region
    $region46: #{_net_forward_core.1} parent=1 // pred_check
      _
    $region47: #{_net_forward_core.1} parent=1 // pred_check_branch
      %5045 = sbr.rel (0) target = $region49
    $region48: #{_net_forward_core.1} parent=1 // pred_region
      %s5047 = ssub.s32 32, 32
      %5048 = vsyncadd [#allocation4], %s5047
      %s5050 = sshll.u32 [#allocation7], 4
      %s5051 = int_to_ptr.vmem [resolvable:$true] %s5050
      %5053 = dma.vmem_to_hbm [thread:$0]  %s5051, 32, %s9, [#allocation4]
    $region49: #{_net_forward_core.1} parent=1 // pred_fallthru
      _
    // Predicated region
    $region50: #{_net_forward_core.1} parent=1 // pred_check
      _
    $region51: #{_net_forward_core.1} parent=1 // pred_check_branch
      %5055 = sbr.rel (0) target = $region53
    $region52: #{_net_forward_core.1} parent=1 // pred_region
      %s5057 = ssub.s32 256, 256
      %5058 = vsyncadd [#allocation9], %s5057
      %s5060 = sshll.u32 [#allocation8], 4
      %s5061 = int_to_ptr.vmem [resolvable:$true] %s5060
      %5063 = dma.vmem_to_hbm [thread:$0]  %s5061, 256, %s10, [#allocation9]
    $region53: #{_net_forward_core.1} parent=1 // pred_fallthru
      _
    // Predicated region
    $region54: #{_net_forward_core.1} parent=1 // pred_check
      _
    $region55: #{_net_forward_core.1} parent=1 // pred_check_branch
      %5065 = sbr.rel (0) target = $region57
    $region56: #{_net_forward_core.1} parent=1 // pred_region
      %s5067 = ssub.s32 256, 256
      %5068 = vsyncadd [#allocation9], %s5067
      %s5070 = sshll.u32 [#allocation10], 4
      %s5071 = int_to_ptr.vmem [resolvable:$true] %s5070
      %5073 = dma.vmem_to_hbm [thread:$0]  %s5071, 256, %s11, [#allocation9]
    $region57: #{_net_forward_core.1} parent=1 // pred_fallthru
      _
    // Predicated region
    $region58: #{_net_forward_core.1} parent=1 // pred_check
      _
    $region59: #{_net_forward_core.1} parent=1 // pred_check_branch
      %5075 = sbr.rel (0) target = $region61
    $region60: #{_net_forward_core.1} parent=1 // pred_region
      %5076 = dma.done [#allocation4], 32
    $region61: #{_net_forward_core.1} parent=1 // pred_fallthru
      _
    // Predicated region
    $region62: #{_net_forward_core.1} parent=1 // pred_check
      _
    $region63: #{_net_forward_core.1} parent=1 // pred_check_branch
      %5078 = sbr.rel (0) target = $region65
    $region64: #{_net_forward_core.1} parent=1 // pred_region
      %5079 = dma.done [#allocation9], 256
    $region65: #{_net_forward_core.1} parent=1 // pred_fallthru
      _
    // Predicated region
    $region66: #{_net_forward_core.1} parent=1 // pred_check
      _
    $region67: #{_net_forward_core.1} parent=1 // pred_check_branch
      %5081 = sbr.rel (0) target = $region69
    $region68: #{_net_forward_core.1} parent=1 // pred_region
      %5082 = dma.done [#allocation9], 256
    $region69: #{_net_forward_core.1} parent=1 // pred_fallthru
      _
    %5083 = vsyncpa [#allocation3], 1
    %5084 = vsyncpa [#allocation6], 1
    %5085 = vsyncpa [#allocation4], 1
    %5086 = vsyncpa [#allocation9], 1

</llo_original>
